<compile_context>
chip_gen: v5e
topology: v5e:2x2
jax: 0.10.0
libtpu: 0.0.40
codegen_flags: <defaults>
</compile_context>

<pallas_src>
import functools

import jax
import jax.numpy as jnp
from jax.experimental import pallas as pl
from jax.experimental.pallas import tpu as pltpu

K = 3          # conv kernel size
PAD = 1        # "same" padding
EPS = 1e-12    # torch F.normalize default eps
LANE = 128
SUBLANE = 8


def _round_up(x, m):
    return (x + m - 1) // m * m


def _embed_kernel(x_ref, w_ref, b_ref, o_ref, xpad_ref, slab_ref, pooled_ref,
                  *, NB, H, W, Cin, Cinp, RC):
    """One grid step = NB images.

    x_ref:      (NB, H, W, Cin)        bf16 unpadded NHWC image block
    w_ref:      (K*K*Cinp, Coutp)      bf16 fused conv-weight slab (zero-padded rows/cols)
    b_ref:      (1, Coutp)             f32 bias (zero in padded cols)
    o_ref:      (1, NB, Coutp)         f32 L2-normalized embeddings
    xpad_ref:   (NB, H+2, W+2, Cinp)   bf16 scratch: zero-halo padded images
    slab_ref:   (H*W, K*K*Cinp)        bf16 scratch: per-image patch slab
    pooled_ref: (NB, Coutp)            f32 scratch: per-image pooled sums
    """
    HW = H * W
    coutp = o_ref.shape[-1]
    n_chunks = HW // RC

    # Conv zero-halo + channel padding built in VMEM only (no HBM round trip for the
    # padded image).  Re-zeroed every step: cheap VMEM stores, and it stays correct
    # when the "parallel" batch axis is split across TensorCores.
    xpad_ref[...] = jnp.zeros_like(xpad_ref)
    xpad_ref[:, PAD:PAD + H, PAD:PAD + W, :Cin] = x_ref[...]

    w_slab = w_ref[...]      # hoisted once, resident across both loops
    bias = b_ref[...]        # hoisted once (broadcast not re-materialized per image)

    def per_image(n, carry):
        # Shift-and-write pass: 9 tap windows -> one (HW, K*K*Cinp) patch slab.
        for kh in range(K):
            for kw in range(K):
                t = kh * K + kw
                win = xpad_ref[n, kh:kh + H, kw:kw + W, :]            # (H, W, Cinp)
                slab_ref[:, t * Cinp:(t + 1) * Cinp] = win.reshape(HW, Cinp)

        # Chunked fused-tap matmul: each chunk is one MXU dot over the full K*K*Cinp
        # contraction (f32 accumulation inside the MXU), then bias + ReLU and a
        # running pooled sum -> no (H*W, Coutp) f32 accumulator, no VPU add chain.
        def per_chunk(c, acc):
            r0 = pl.multiple_of(c * RC, RC)
            y = jnp.dot(slab_ref[pl.ds(r0, RC), :], w_slab,
                        preferred_element_type=jnp.float32)
            y = jnp.maximum(y + bias, 0.0)
            return acc + jnp.sum(y, axis=0, keepdims=True)

        pooled = jax.lax.fori_loop(0, n_chunks, per_chunk,
                                   jnp.zeros((1, coutp), jnp.float32),
                                   unroll=n_chunks <= 4)
        pooled_ref[pl.ds(n, 1), :] = pooled
        return carry

    jax.lax.fori_loop(0, NB, per_image, 0)

    # L2-normalize all NB rows at once and emit one dense (NB, Coutp) store.
    # sum-pool == mean-pool * (H*W); the scale cancels in the L2 norm, so the torch
    # clamp max(||mean||, eps) becomes rsqrt(max(||sum||^2, (H*W*eps)^2)) on the EUP.
    p = pooled_ref[...]
    ssq = jnp.sum(p * p, axis=1, keepdims=True)
    eps_sq = jnp.float32((HW * EPS) ** 2)
    inv = jax.lax.rsqrt(jnp.maximum(ssq, eps_sq))
    o_ref[...] = (p * inv)[None].astype(o_ref.dtype)


@jax.jit
def embedding_net_l2(x_nchw, w_conv, b_conv):
    B, Cin, H, W = x_nchw.shape
    Cout = w_conv.shape[0]
    Hp, Wp = H + 2 * PAD, W + 2 * PAD
    HW = H * W
    Cinp = _round_up(Cin, SUBLANE)     # per-pixel channel pad (sublane granularity)
    Coutp = _round_up(Cout, LANE)      # lane-dense MXU N dim; >=256 automatically when Cout > 128
    KKC = K * K * Cinp                 # fused contraction dim

    # Batch blocking: NB images per grid step, but keep >= 2 grid steps for small B so
    # both v7x TensorCores are fed via the "parallel" batch axis.
    if B >= 16:
        NB = 8
    else:
        NB = max(1, B // 2)
    G = pl.cdiv(B, NB)
    B_pad = G * NB

    # Row-chunk for the spatial reduction: largest divisor of H*W up to 128 rows
    # (bounds live f32 state to <= RC*Coutp*4 bytes per chunk).
    RC = HW
    for cand in (128, 64, 32, 16, 8):
        if HW % cand == 0:
            RC = cand
            break

    # Host-side layout glue: cast to bf16 FIRST (halves transpose traffic), NCHW->NHWC.
    # No host-side spatial/channel padding: the zero halo lives only in VMEM.
    x_nhwc = jnp.transpose(x_nchw.astype(jnp.bfloat16), (0, 2, 3, 1))
    if B_pad != B:
        x_nhwc = jnp.pad(x_nhwc, ((0, B_pad - B), (0, 0), (0, 0), (0, 0)))

    # (Cout, Cin, KH, KW) -> fused (K*K*Cinp, Coutp) weight slab.  Padded rows/cols are
    # exactly zero, so they drop out of the conv and of the L2 norm (correctness invariant).
    w = jnp.transpose(w_conv.astype(jnp.float32), (2, 3, 1, 0))          # (K, K, Cin, Cout)
    w = jnp.pad(w, ((0, 0), (0, 0), (0, Cinp - Cin), (0, Coutp - Cout)))
    w_slab = w.reshape(KKC, Coutp).astype(jnp.bfloat16)
    b2d = jnp.pad(b_conv.reshape(1, Cout).astype(jnp.float32),
                  ((0, 0), (0, Coutp - Cout)))

    kernel = functools.partial(_embed_kernel, NB=NB, H=H, W=W, Cin=Cin,
                               Cinp=Cinp, RC=RC)
    out = pl.pallas_call(
        kernel,
        out_shape=jax.ShapeDtypeStruct((G, NB, Coutp), jnp.float32),
        grid=(G,),
        in_specs=[
            pl.BlockSpec((NB, H, W, Cin), lambda b: (b, 0, 0, 0)),   # per-step image block
            # Weight slab / bias use a constant block index (never re-fetched across the
            # grid); they are <32 KiB total, so their pipeline buffers are a negligible
            # slice of the explicit 32 MiB scoped-VMEM budget.
            pl.BlockSpec((KKC, Coutp), lambda b: (0, 0)),
            pl.BlockSpec((1, Coutp), lambda b: (0, 0)),
        ],
        out_specs=pl.BlockSpec((1, NB, Coutp), lambda b: (b, 0, 0)),
        scratch_shapes=[
            pltpu.VMEM((NB, Hp, Wp, Cinp), jnp.bfloat16),   # zero-halo padded images
            pltpu.VMEM((HW, KKC), jnp.bfloat16),            # per-image patch slab
            pltpu.VMEM((NB, Coutp), jnp.float32),           # pooled sums
        ],
        compiler_params=pltpu.CompilerParams(
            dimension_semantics=("parallel",),              # shard batch blocks across TCs
            vmem_limit_bytes=32 * 1024 * 1024),             # explicit budget (v7x: 64 MiB phys)
    )(x_nhwc, w_slab, b2d)
    return out.reshape(B_pad, Coutp)[:B, :Cout]


def _reference(x_nchw, w_conv, b_conv):
    """Pure-JAX reference mirroring the PyTorch forward."""
    y = jax.lax.conv_general_dilated(
        x_nchw.astype(jnp.float32), w_conv.astype(jnp.float32),
        window_strides=(1, 1), padding=((PAD, PAD), (PAD, PAD)),
        dimension_numbers=("NCHW", "OIHW", "NCHW"))
    y = jax.nn.relu(y + b_conv.reshape(1, -1, 1, 1))
    pooled = jnp.mean(y, axis=(2, 3))                      # AdaptiveAvgPool2d(1) + flatten(start_dim=1)
    nrm = jnp.sqrt(jnp.sum(pooled * pooled, axis=1, keepdims=True))
    return pooled / jnp.maximum(nrm, EPS)


if __name__ == "__main__":
    key = jax.random.PRNGKey(0)
    k_x, k_w, k_b = jax.random.split(key, 3)

    B, Cin, H, W, Cout = 2, 4, 16, 16, 32
    x = jax.random.normal(k_x, (B, Cin, H, W), dtype=jnp.float32)
    w_conv = 0.1 * jax.random.normal(k_w, (Cout, Cin, K, K), dtype=jnp.float32)
    b_conv = 0.1 * jax.random.normal(k_b, (Cout,), dtype=jnp.float32)

    out = embedding_net_l2(x, w_conv, b_conv)
    out = jax.block_until_ready(out)

    ref = _reference(x, w_conv, b_conv)
    assert out.shape == (B, Cout), out.shape
    assert bool(jnp.all(jnp.isfinite(out)))
    # bf16 MXU inputs (intentional) -> ~1e-2-level relative error vs the f32 reference.
    assert bool(jnp.allclose(out, ref, atol=5e-2, rtol=5e-2)), "mismatch vs reference"

    print("KERNEL_OK")
</pallas_src>

<mosaic_0001>
module attributes {stable_mosaic.version = 11 : i64} {
  func.func @_embed_kernel(%arg0: i32, %arg1: memref<1x16x16x4xbf16, #tpu.memory_space<vmem>>, %arg2: memref<72x128xbf16, #tpu.memory_space<vmem>>, %arg3: memref<1x128xf32, #tpu.memory_space<vmem>>, %arg4: memref<1x1x128xf32, #tpu.memory_space<vmem>>, %arg5: memref<1x18x18x8xbf16, #tpu.memory_space<vmem>>, %arg6: memref<256x72xbf16, #tpu.memory_space<vmem>>, %arg7: memref<1x128xf32, #tpu.memory_space<vmem>>) attributes {dimension_semantics = [#tpu.dimension_semantics<parallel>], iteration_bounds = array<i64: 2>, scalar_prefetch = 0 : i64, scratch_operands = 3 : i64, tpu.core_type = #tpu.core_type<tc>, window_params = [{transform_indices = @transform_0, window_bounds = array<i64: 1, 16, 16, 4>}, {pipeline_mode = #tpu.pipeline_mode<synchronous>, transform_indices = @transform_1, window_bounds = array<i64: 72, 128>}, {pipeline_mode = #tpu.pipeline_mode<synchronous>, transform_indices = @transform_2, window_bounds = array<i64: 1, 128>}, {transform_indices = @transform_3, window_bounds = array<i64: 1, 1, 128>}]} {
    %cst = arith.constant 0.000000e+00 : bf16
    %0 = vector.broadcast %cst : bf16 to vector<1x18x18x8xbf16>
    %c0 = arith.constant 0 : index
    %c0_0 = arith.constant 0 : index
    %c0_1 = arith.constant 0 : index
    %c0_2 = arith.constant 0 : index
    %1 = vector.load %arg5[%c0, %c0_0, %c0_1, %c0_2] : memref<1x18x18x8xbf16, #tpu.memory_space<vmem>>, vector<1x18x18x8xbf16>
    tpu.vector_store %arg5[%c0, %c0_0, %c0_1, %c0_2], %0 {strides = array<i32>} : memref<1x18x18x8xbf16, #tpu.memory_space<vmem>>, vector<1x18x18x8xbf16>,
    %c0_3 = arith.constant 0 : index
    %c0_4 = arith.constant 0 : index
    %c0_5 = arith.constant 0 : index
    %c0_6 = arith.constant 0 : index
    %2 = vector.load %arg1[%c0_3, %c0_4, %c0_5, %c0_6] : memref<1x16x16x4xbf16, #tpu.memory_space<vmem>>, vector<1x16x16x4xbf16>
    %c0_7 = arith.constant 0 : index
    %c1 = arith.constant 1 : index
    %c1_8 = arith.constant 1 : index
    %c0_9 = arith.constant 0 : index
    %3 = vector.load %arg5[%c0_7, %c1, %c1_8, %c0_9] : memref<1x18x18x8xbf16, #tpu.memory_space<vmem>>, vector<1x16x16x4xbf16>
    tpu.vector_store %arg5[%c0_7, %c1, %c1_8, %c0_9], %2 {strides = array<i32>} : memref<1x18x18x8xbf16, #tpu.memory_space<vmem>>, vector<1x16x16x4xbf16>,
    %c0_10 = arith.constant 0 : index
    %c0_11 = arith.constant 0 : index
    %4 = vector.load %arg2[%c0_10, %c0_11] : memref<72x128xbf16, #tpu.memory_space<vmem>>, vector<72x128xbf16>
    %c0_12 = arith.constant 0 : index
    %c0_13 = arith.constant 0 : index
    %5 = vector.load %arg3[%c0_12, %c0_13] : memref<1x128xf32, #tpu.memory_space<vmem>>, vector<1x128xf32>
    %c0_i32 = arith.constant 0 : i32
    %6 = arith.index_cast %c0_i32 : i32 to index
    %c0_14 = arith.constant 0 : index
    %c0_15 = arith.constant 0 : index
    %c0_16 = arith.constant 0 : index
    %7 = vector.load %arg5[%6, %c0_14, %c0_15, %c0_16] : memref<1x18x18x8xbf16, #tpu.memory_space<vmem>>, vector<1x16x16x8xbf16>
    %8 = vector.shape_cast %7 : vector<1x16x16x8xbf16> to vector<16x16x8xbf16>
    %9 = vector.shape_cast %8 : vector<16x16x8xbf16> to vector<256x8xbf16>
    %c0_17 = arith.constant 0 : index
    %c0_18 = arith.constant 0 : index
    %10 = vector.load %arg6[%c0_17, %c0_18] : memref<256x72xbf16, #tpu.memory_space<vmem>>, vector<256x8xbf16>
    tpu.vector_store %arg6[%c0_17, %c0_18], %9 {strides = array<i32>} : memref<256x72xbf16, #tpu.memory_space<vmem>>, vector<256x8xbf16>,
    %11 = arith.index_cast %c0_i32 : i32 to index
    %c0_19 = arith.constant 0 : index
    %c1_20 = arith.constant 1 : index
    %c0_21 = arith.constant 0 : index
    %12 = vector.load %arg5[%11, %c0_19, %c1_20, %c0_21] : memref<1x18x18x8xbf16, #tpu.memory_space<vmem>>, vector<1x16x16x8xbf16>
    %13 = vector.shape_cast %12 : vector<1x16x16x8xbf16> to vector<16x16x8xbf16>
    %14 = vector.shape_cast %13 : vector<16x16x8xbf16> to vector<256x8xbf16>
    %c0_22 = arith.constant 0 : index
    %c8 = arith.constant 8 : index
    %15 = vector.load %arg6[%c0_22, %c8] : memref<256x72xbf16, #tpu.memory_space<vmem>>, vector<256x8xbf16>
    tpu.vector_store %arg6[%c0_22, %c8], %14 {strides = array<i32>} : memref<256x72xbf16, #tpu.memory_space<vmem>>, vector<256x8xbf16>,
    %16 = arith.index_cast %c0_i32 : i32 to index
    %c0_23 = arith.constant 0 : index
    %c2 = arith.constant 2 : index
    %c0_24 = arith.constant 0 : index
    %17 = vector.load %arg5[%16, %c0_23, %c2, %c0_24] : memref<1x18x18x8xbf16, #tpu.memory_space<vmem>>, vector<1x16x16x8xbf16>
    %18 = vector.shape_cast %17 : vector<1x16x16x8xbf16> to vector<16x16x8xbf16>
    %19 = vector.shape_cast %18 : vector<16x16x8xbf16> to vector<256x8xbf16>
    %c0_25 = arith.constant 0 : index
    %c16 = arith.constant 16 : index
    %20 = vector.load %arg6[%c0_25, %c16] : memref<256x72xbf16, #tpu.memory_space<vmem>>, vector<256x8xbf16>
    tpu.vector_store %arg6[%c0_25, %c16], %19 {strides = array<i32>} : memref<256x72xbf16, #tpu.memory_space<vmem>>, vector<256x8xbf16>,
    %21 = arith.index_cast %c0_i32 : i32 to index
    %c1_26 = arith.constant 1 : index
    %c0_27 = arith.constant 0 : index
    %c0_28 = arith.constant 0 : index
    %22 = vector.load %arg5[%21, %c1_26, %c0_27, %c0_28] : memref<1x18x18x8xbf16, #tpu.memory_space<vmem>>, vector<1x16x16x8xbf16>
    %23 = vector.shape_cast %22 : vector<1x16x16x8xbf16> to vector<16x16x8xbf16>
    %24 = vector.shape_cast %23 : vector<16x16x8xbf16> to vector<256x8xbf16>
    %c0_29 = arith.constant 0 : index
    %c24 = arith.constant 24 : index
    %25 = vector.load %arg6[%c0_29, %c24] : memref<256x72xbf16, #tpu.memory_space<vmem>>, vector<256x8xbf16>
    tpu.vector_store %arg6[%c0_29, %c24], %24 {strides = array<i32>} : memref<256x72xbf16, #tpu.memory_space<vmem>>, vector<256x8xbf16>,
    %26 = arith.index_cast %c0_i32 : i32 to index
    %c1_30 = arith.constant 1 : index
    %c1_31 = arith.constant 1 : index
    %c0_32 = arith.constant 0 : index
    %27 = vector.load %arg5[%26, %c1_30, %c1_31, %c0_32] : memref<1x18x18x8xbf16, #tpu.memory_space<vmem>>, vector<1x16x16x8xbf16>
    %28 = vector.shape_cast %27 : vector<1x16x16x8xbf16> to vector<16x16x8xbf16>
    %29 = vector.shape_cast %28 : vector<16x16x8xbf16> to vector<256x8xbf16>
    %c0_33 = arith.constant 0 : index
    %c32 = arith.constant 32 : index
    %30 = vector.load %arg6[%c0_33, %c32] : memref<256x72xbf16, #tpu.memory_space<vmem>>, vector<256x8xbf16>
    tpu.vector_store %arg6[%c0_33, %c32], %29 {strides = array<i32>} : memref<256x72xbf16, #tpu.memory_space<vmem>>, vector<256x8xbf16>,
    %31 = arith.index_cast %c0_i32 : i32 to index
    %c1_34 = arith.constant 1 : index
    %c2_35 = arith.constant 2 : index
    %c0_36 = arith.constant 0 : index
    %32 = vector.load %arg5[%31, %c1_34, %c2_35, %c0_36] : memref<1x18x18x8xbf16, #tpu.memory_space<vmem>>, vector<1x16x16x8xbf16>
    %33 = vector.shape_cast %32 : vector<1x16x16x8xbf16> to vector<16x16x8xbf16>
    %34 = vector.shape_cast %33 : vector<16x16x8xbf16> to vector<256x8xbf16>
    %c0_37 = arith.constant 0 : index
    %c40 = arith.constant 40 : index
    %35 = vector.load %arg6[%c0_37, %c40] : memref<256x72xbf16, #tpu.memory_space<vmem>>, vector<256x8xbf16>
    tpu.vector_store %arg6[%c0_37, %c40], %34 {strides = array<i32>} : memref<256x72xbf16, #tpu.memory_space<vmem>>, vector<256x8xbf16>,
    %36 = arith.index_cast %c0_i32 : i32 to index
    %c2_38 = arith.constant 2 : index
    %c0_39 = arith.constant 0 : index
    %c0_40 = arith.constant 0 : index
    %37 = vector.load %arg5[%36, %c2_38, %c0_39, %c0_40] : memref<1x18x18x8xbf16, #tpu.memory_space<vmem>>, vector<1x16x16x8xbf16>
    %38 = vector.shape_cast %37 : vector<1x16x16x8xbf16> to vector<16x16x8xbf16>
    %39 = vector.shape_cast %38 : vector<16x16x8xbf16> to vector<256x8xbf16>
    %c0_41 = arith.constant 0 : index
    %c48 = arith.constant 48 : index
    %40 = vector.load %arg6[%c0_41, %c48] : memref<256x72xbf16, #tpu.memory_space<vmem>>, vector<256x8xbf16>
    tpu.vector_store %arg6[%c0_41, %c48], %39 {strides = array<i32>} : memref<256x72xbf16, #tpu.memory_space<vmem>>, vector<256x8xbf16>,
    %41 = arith.index_cast %c0_i32 : i32 to index
    %c2_42 = arith.constant 2 : index
    %c1_43 = arith.constant 1 : index
    %c0_44 = arith.constant 0 : index
    %42 = vector.load %arg5[%41, %c2_42, %c1_43, %c0_44] : memref<1x18x18x8xbf16, #tpu.memory_space<vmem>>, vector<1x16x16x8xbf16>
    %43 = vector.shape_cast %42 : vector<1x16x16x8xbf16> to vector<16x16x8xbf16>
    %44 = vector.shape_cast %43 : vector<16x16x8xbf16> to vector<256x8xbf16>
    %c0_45 = arith.constant 0 : index
    %c56 = arith.constant 56 : index
    %45 = vector.load %arg6[%c0_45, %c56] : memref<256x72xbf16, #tpu.memory_space<vmem>>, vector<256x8xbf16>
    tpu.vector_store %arg6[%c0_45, %c56], %44 {strides = array<i32>} : memref<256x72xbf16, #tpu.memory_space<vmem>>, vector<256x8xbf16>,
    %46 = arith.index_cast %c0_i32 : i32 to index
    %c2_46 = arith.constant 2 : index
    %c2_47 = arith.constant 2 : index
    %c0_48 = arith.constant 0 : index
    %47 = vector.load %arg5[%46, %c2_46, %c2_47, %c0_48] : memref<1x18x18x8xbf16, #tpu.memory_space<vmem>>, vector<1x16x16x8xbf16>
    %48 = vector.shape_cast %47 : vector<1x16x16x8xbf16> to vector<16x16x8xbf16>
    %49 = vector.shape_cast %48 : vector<16x16x8xbf16> to vector<256x8xbf16>
    %c0_49 = arith.constant 0 : index
    %c64 = arith.constant 64 : index
    %50 = vector.load %arg6[%c0_49, %c64] : memref<256x72xbf16, #tpu.memory_space<vmem>>, vector<256x8xbf16>
    tpu.vector_store %arg6[%c0_49, %c64], %49 {strides = array<i32>} : memref<256x72xbf16, #tpu.memory_space<vmem>>, vector<256x8xbf16>,
    %cst_50 = arith.constant 0.000000e+00 : f32
    %51 = vector.broadcast %cst_50 : f32 to vector<1x128xf32>
    %c0_i32_51 = arith.constant 0 : i32
    %c128_i32 = arith.constant 128 : i32
    %52 = arith.muli %c0_i32_51, %c128_i32 : i32
    %53 = tpu.assume_multiple %52, 128 : i32
    %54 = arith.index_cast %53 : i32 to index
    %c0_52 = arith.constant 0 : index
    %55 = vector.load %arg6[%54, %c0_52] : memref<256x72xbf16, #tpu.memory_space<vmem>>, vector<128x72xbf16>
    %cst_53 = arith.constant dense<0.000000e+00> : vector<128x128xf32>
    %56 = tpu.matmul %55, %4, %cst_53 {dimension_numbers = #tpu.dot_dimension_numbers<[1], [0], [0], [1], [0, 0, 1, 1], [], []>} : vector<128x72xbf16>, vector<72x128xbf16>, vector<128x128xf32> -> vector<128x128xf32>
    %57 = vector.broadcast %5 : vector<1x128xf32> to vector<128x128xf32>
    %58 = arith.addf %56, %57 : vector<128x128xf32>
    %cst_54 = arith.constant 0.000000e+00 : f32
    %59 = vector.broadcast %cst_54 : f32 to vector<128x128xf32>
    %60 = arith.maximumf %58, %59 : vector<128x128xf32>
    %cst_55 = arith.constant dense<0.000000e+00> : vector<128xf32>
    %61 = vector.multi_reduction <add>, %60, %cst_55 [0] : vector<128x128xf32> to vector<128xf32>
    %62 = vector.shape_cast %61 : vector<128xf32> to vector<1x128xf32>
    %63 = arith.addf %51, %62 : vector<1x128xf32>
    %c1_i32 = arith.constant 1 : i32
    %c128_i32_56 = arith.constant 128 : i32
    %64 = arith.muli %c1_i32, %c128_i32_56 : i32
    %65 = tpu.assume_multiple %64, 128 : i32
    %66 = arith.index_cast %65 : i32 to index
    %c0_57 = arith.constant 0 : index
    %67 = vector.load %arg6[%66, %c0_57] : memref<256x72xbf16, #tpu.memory_space<vmem>>, vector<128x72xbf16>
    %cst_58 = arith.constant dense<0.000000e+00> : vector<128x128xf32>
    %68 = tpu.matmul %67, %4, %cst_58 {dimension_numbers = #tpu.dot_dimension_numbers<[1], [0], [0], [1], [0, 0, 1, 1], [], []>} : vector<128x72xbf16>, vector<72x128xbf16>, vector<128x128xf32> -> vector<128x128xf32>
    %69 = vector.broadcast %5 : vector<1x128xf32> to vector<128x128xf32>
    %70 = arith.addf %68, %69 : vector<128x128xf32>
    %cst_59 = arith.constant 0.000000e+00 : f32
    %71 = vector.broadcast %cst_59 : f32 to vector<128x128xf32>
    %72 = arith.maximumf %70, %71 : vector<128x128xf32>
    %cst_60 = arith.constant dense<0.000000e+00> : vector<128xf32>
    %73 = vector.multi_reduction <add>, %72, %cst_60 [0] : vector<128x128xf32> to vector<128xf32>
    %74 = vector.shape_cast %73 : vector<128xf32> to vector<1x128xf32>
    %75 = arith.addf %63, %74 : vector<1x128xf32>
    %c2_i32 = arith.constant 2 : i32
    %76 = arith.index_cast %c0_i32 : i32 to index
    %c0_61 = arith.constant 0 : index
    %77 = vector.load %arg7[%76, %c0_61] : memref<1x128xf32, #tpu.memory_space<vmem>>, vector<1x128xf32>
    tpu.vector_store %arg7[%76, %c0_61], %75 {strides = array<i32>} : memref<1x128xf32, #tpu.memory_space<vmem>>, vector<1x128xf32>,
    %c1_i32_62 = arith.constant 1 : i32
    %c0_63 = arith.constant 0 : index
    %c0_64 = arith.constant 0 : index
    %78 = vector.load %arg7[%c0_63, %c0_64] : memref<1x128xf32, #tpu.memory_space<vmem>>, vector<1x128xf32>
    %79 = arith.mulf %78, %78 : vector<1x128xf32>
    %cst_65 = arith.constant dense<0.000000e+00> : vector<1xf32>
    %80 = vector.multi_reduction <add>, %79, %cst_65 [1] : vector<1x128xf32> to vector<1xf32>
    %81 = vector.shape_cast %80 : vector<1xf32> to vector<1x1xf32>
    %cst_66 = arith.constant 6.553600e-20 : f32
    %82 = vector.broadcast %cst_66 : f32 to vector<1x1xf32>
    %83 = arith.maximumf %81, %82 : vector<1x1xf32>
    %84 = math.rsqrt %83 : vector<1x1xf32>
    %85 = vector.broadcast %84 : vector<1x1xf32> to vector<1x128xf32>
    %86 = arith.mulf %78, %85 : vector<1x128xf32>
    %87 = vector.shape_cast %86 : vector<1x128xf32> to vector<1x1x128xf32>
    %c0_67 = arith.constant 0 : index
    %c0_68 = arith.constant 0 : index
    %c0_69 = arith.constant 0 : index
    %88 = vector.load %arg4[%c0_67, %c0_68, %c0_69] : memref<1x1x128xf32, #tpu.memory_space<vmem>>, vector<1x1x128xf32>
    tpu.vector_store %arg4[%c0_67, %c0_68, %c0_69], %87 {strides = array<i32>} : memref<1x1x128xf32, #tpu.memory_space<vmem>>, vector<1x1x128xf32>,
    return
  }
  func.func @transform_0(%arg0: i32) -> (i32, i32, i32, i32) {
    %c0_i32 = arith.constant 0 : i32
    %c0_i32_0 = arith.constant 0 : i32
    %c0_i32_1 = arith.constant 0 : i32
    %c0_i32_2 = arith.constant 0 : i32
    return %arg0, %c0_i32, %c0_i32_0, %c0_i32_1 : i32, i32, i32, i32
  }
  func.func @transform_1(%arg0: i32) -> (i32, i32) {
    %c0_i32 = arith.constant 0 : i32
    %c0_i32_0 = arith.constant 0 : i32
    %c0_i32_1 = arith.constant 0 : i32
    return %c0_i32, %c0_i32_0 : i32, i32
  }
  func.func @transform_2(%arg0: i32) -> (i32, i32) {
    %c0_i32 = arith.constant 0 : i32
    %c0_i32_0 = arith.constant 0 : i32
    %c0_i32_1 = arith.constant 0 : i32
    return %c0_i32, %c0_i32_0 : i32, i32
  }
  func.func @transform_3(%arg0: i32) -> (i32, i32, i32) {
    %c0_i32 = arith.constant 0 : i32
    %c0_i32_0 = arith.constant 0 : i32
    %c0_i32_1 = arith.constant 0 : i32
    return %arg0, %c0_i32, %c0_i32_0 : i32, i32, i32
  }
}

</mosaic_0001>

<llo_original>
// kernel: embedding_net_l2.1
$region0: #{embedding_net_l2.1}
  #allocation0 [shape = 'u32[]', space=smem, size = 0x4, offset = 0x4, fixed_abs, tag = 'smem constant byte address 0x4 - core index']
  #allocation1 [shape = 'u32[72,128]{1,0:T(1,128)}', space=vmem, size = 0x9000, scoped, tag = 'internal scratch']
  #allocation2 [shape = 'bf16[1,18,18,8]{3,2,1,0:T(8,128)(2,1)}', space=vmem, size = 0x1b000, scoped, tag = 'scratch operand']
  #allocation3 [shape = 'bf16[256,72]{1,0:T(8,128)(2,1)}', space=vmem, size = 0x10000, scoped, tag = 'scratch operand']
  #allocation4 [shape = 'f32[1,128]{1,0:T(1,128)}', space=vmem, size = 0x200, scoped, tag = 'scratch operand']
  %s0 = inlined_call_operand.vmem [shape: bf16[2,16,16,4], index: 0, kind: input, shape index: {}]
  %s1 = inlined_call_operand.vmem [shape: bf16[72,128], index: 1, kind: input, shape index: {}]
  %s2 = inlined_call_operand.vmem [shape: f32[1,128], index: 2, kind: input, shape index: {}]
  %s3 = inlined_call_operand.hbm [shape: f32[2,1,128], index: 3, kind: output, shape index: {}]
  %s4 = sld [smem:[#allocation0]]
  $region45: #{embedding_net_l2.1} parent=0
    _
  %s6 = ssub.s32 1, %s4
  %s7 = scalar_select 0, %s6, %s4
  $region1: #{embedding_net_l2.1} parent=0
    #allocation5 [shape = 'u8[1024]{0}', space=vmem, size = 0x400, scoped, tag = 'output window, operand 0']
    #allocation6 [shape = 's32[2]{0}', space=sflag, size = 0x8, scoped, tag = 'scoped memory for embedding_net_l2.1']
    %8 = vsyncpa [#allocation6], 0
    %s9 = scalar_lea.sflag [#allocation6], 1
    %10 = vsyncpa %s9, 0
    loop: start=0, step=1, limit=4
    $region2: #{embedding_net_l2.1} parent=1 // loop_pre_header
      _
    $region3: #{embedding_net_l2.1} parent=1 // loop_header
      %s12 = sphi 0, %s16
      %p13 = scmp.ge.s32.totalorder %s12, 4
      %s22 = sphi 0, %s24
      %s25 = sphi 0, %s22
      %s26 = sphi 0, %s25
      %s42 = sphi 0, %s26
      %s46 = sphi 0, %s46
      %s48 = sphi 0, %s46
      %s49 = sphi 0, %s48
      %s63 = sphi 0, %s49
      %s67 = sphi 0, %s67
      %s69 = sphi 0, %s67
      %s70 = sphi 0, %s69
      %s84 = sphi 0, %s70
      %s90 = sphi 0, %s92
      %s93 = sphi 0, %s90
      %s94 = sphi 0, %s93
      %s110 = sphi 0, %s94
    $region4: #{embedding_net_l2.1} parent=1 // loop_header_branch
      %15 = sbr.rel (%p13) target = $region8
    $region5: #{embedding_net_l2.1} parent=1 // loop_body
      %s17 = ssub.s32 %s12, 1
      %s18 = ssub.s32 %s12, 2
      %s19 = sadd.s32 %s12, 1
      %s20 = ssub.s32 %s12, %s19
      %p21 = scmp.eq.s32.totalorder %s20, 0
      %s23 = sadd.s32 %s22, 1
      %s24 = scalar_select %p21, %s22, %s23
      %p27 = pneg %p21
      %p28 = scmp.eq.s32.totalorder %s12, 1
      %p29 = por %p27, %p28
      %p30 = scmp.ne.s32.totalorder %s22, %s25
      %p31 = scmp.eq.s32.totalorder %s12, 0
      %p32 = por %p30, %p31
      %p33 = scmp.ne.s32.totalorder %s22, %s25
      %p34 = scmp.eq.s32.totalorder %s17, 1
      %p35 = por %p33, %p34
      %p36 = scmp.ne.s32.totalorder %s25, %s26
      %p37 = scmp.eq.s32.totalorder %s17, 0
      %p38 = por %p36, %p37
      %p39 = scmp.ne.s32.totalorder %s25, %s26
      %p40 = scmp.eq.s32.totalorder %s18, 1
      %p41 = por %p39, %p40
      %p43 = scmp.ne.s32.totalorder %s26, %s42
      %p44 = scmp.eq.s32.totalorder %s18, 0
      %p45 = por %p43, %p44
      %s47 = sadd.s32 %s46, 1
      %p50 = scmp.eq.s32.totalorder %s12, 1
      %p51 = scmp.ne.s32.totalorder %s46, %s48
      %p52 = scmp.eq.s32.totalorder %s12, 0
      %p53 = por %p51, %p52
      %p54 = scmp.ne.s32.totalorder %s46, %s48
      %p55 = scmp.eq.s32.totalorder %s17, 1
      %p56 = por %p54, %p55
      %p57 = scmp.ne.s32.totalorder %s48, %s49
      %p58 = scmp.eq.s32.totalorder %s17, 0
      %p59 = por %p57, %p58
      %p60 = scmp.ne.s32.totalorder %s48, %s49
      %p61 = scmp.eq.s32.totalorder %s18, 1
      %p62 = por %p60, %p61
      %p64 = scmp.ne.s32.totalorder %s49, %s63
      %p65 = scmp.eq.s32.totalorder %s18, 0
      %p66 = por %p64, %p65
      %s68 = sadd.s32 %s67, 1
      %p71 = scmp.eq.s32.totalorder %s12, 1
      %p72 = scmp.ne.s32.totalorder %s67, %s69
      %p73 = scmp.eq.s32.totalorder %s12, 0
      %p74 = por %p72, %p73
      %p75 = scmp.ne.s32.totalorder %s67, %s69
      %p76 = scmp.eq.s32.totalorder %s17, 1
      %p77 = por %p75, %p76
      %p78 = scmp.ne.s32.totalorder %s69, %s70
      %p79 = scmp.eq.s32.totalorder %s17, 0
      %p80 = por %p78, %p79
      %p81 = scmp.ne.s32.totalorder %s69, %s70
      %p82 = scmp.eq.s32.totalorder %s18, 1
      %p83 = por %p81, %p82
      %p85 = scmp.ne.s32.totalorder %s70, %s84
      %p86 = scmp.eq.s32.totalorder %s18, 0
      %p87 = por %p85, %p86
      %s88 = ssub.s32 %s12, %s19
      %p89 = scmp.eq.s32.totalorder %s88, 0
      %s91 = sadd.s32 %s90, 1
      %s92 = scalar_select %p89, %s90, %s91
      %p95 = pneg %p89
      %p96 = scmp.eq.s32.totalorder %s12, 1
      %p97 = por %p95, %p96
      %p98 = scmp.ne.s32.totalorder %s90, %s93
      %p99 = scmp.eq.s32.totalorder %s12, 0
      %p100 = por %p98, %p99
      %p101 = scmp.ne.s32.totalorder %s90, %s93
      %p102 = scmp.eq.s32.totalorder %s17, 1
      %p103 = por %p101, %p102
      %p104 = scmp.ne.s32.totalorder %s93, %s94
      %p105 = scmp.eq.s32.totalorder %s17, 0
      %p106 = por %p104, %p105
      %p107 = scmp.ne.s32.totalorder %s93, %s94
      %p108 = scmp.eq.s32.totalorder %s18, 1
      %p109 = por %p107, %p108
      %p111 = scmp.ne.s32.totalorder %s94, %s110
      %p112 = scmp.eq.s32.totalorder %s18, 0
      %p113 = por %p111, %p112
      %p114 = scmp.le.s32.totalorder 1, %s12
      %p115 = scmp.lt.s32.totalorder %s12, 3
      %p116 = pnand %p114, %p115
      %p117 = pneg %p116
      // Predicated region
      $region9: #{embedding_net_l2.1} parent=5 // pred_check
        _
      $region10: #{embedding_net_l2.1} parent=5 // pred_check_branch
        %119 = sbr.rel (%p116) target = $region12
      $region11: #{embedding_net_l2.1} parent=5 // pred_region
        %s120 = ssub.s32 %s12, 1
        // Predicated region
        $region13: #{embedding_net_l2.1} parent=11 // pred_check
          %p121 = pneg %p59
        $region14: #{embedding_net_l2.1} parent=11 // pred_check_branch
          %123 = sbr.rel (%p121) target = $region16
        $region15: #{embedding_net_l2.1} parent=11 // pred_region
          _
        $region16: #{embedding_net_l2.1} parent=11 // pred_fallthru
          _
        // Predicated region
        $region17: #{embedding_net_l2.1} parent=11 // pred_check
          %p124 = pneg %p80
        $region18: #{embedding_net_l2.1} parent=11 // pred_check_branch
          %126 = sbr.rel (%p124) target = $region20
        $region19: #{embedding_net_l2.1} parent=11 // pred_region
          _
        $region20: #{embedding_net_l2.1} parent=11 // pred_fallthru
          _
      $region12: #{embedding_net_l2.1} parent=5 // pred_fallthru
        _
      %p127 = scmp.lt.s32.totalorder %s12, 2
      // Predicated region
      $region21: #{embedding_net_l2.1} parent=5 // pred_check
        %p128 = pneg %p127
      $region22: #{embedding_net_l2.1} parent=5 // pred_check_branch
        %130 = sbr.rel (%p128) target = $region24
      $region23: #{embedding_net_l2.1} parent=5 // pred_region
        // Predicated region
        $region25: #{embedding_net_l2.1} parent=23 // pred_check
          %p131 = pneg %p32
        $region26: #{embedding_net_l2.1} parent=23 // pred_check_branch
          %133 = sbr.rel (%p131) target = $region28
        $region27: #{embedding_net_l2.1} parent=23 // pred_region
          %p134 = scmp.lt.s32.totalorder %s12, 1
          %s135 = scalar_select %p134, %s12, 1
          %s136 = smul.addr %s135, 32
          %s137 = smul.addr %s136, 4
          %s138 = scalar_lea.vmem %s0, %s137
        $region28: #{embedding_net_l2.1} parent=23 // pred_fallthru
          _
      $region24: #{embedding_net_l2.1} parent=5 // pred_fallthru
        _
      %p139 = scmp.le.s32.totalorder 1, %s12
      %p140 = scmp.lt.s32.totalorder %s12, 3
      %p141 = pnand %p139, %p140
      %p142 = pneg %p141
      // Predicated region
      $region29: #{embedding_net_l2.1} parent=5 // pred_check
        _
      $region30: #{embedding_net_l2.1} parent=5 // pred_check_branch
        %144 = sbr.rel (%p141) target = $region32
      $region31: #{embedding_net_l2.1} parent=5 // pred_region
        %s145 = ssub.s32 %s12, 1
        %p146 = scmp.lt.s32.totalorder %s17, 1
        %s147 = scalar_select %p146, %s17, 1
        %s148 = smul.addr %s147, 32
        %s149 = smul.addr %s148, 4
        %s150 = scalar_lea.vmem %s0, %s149
        %p151 = pneg %p38
        %p152 = pneg %p35
        %p153 = pneg %p59
        %p154 = pneg %p56
        %p155 = pneg %p80
        %p156 = pneg %p77
        %p157 = pneg %p106
        %p158 = pneg %p103
        %s159 = sand.u32 %s93, 1
        %s160 = scalar_lea.sflag [#allocation6], %s159
        %s161 = sand.u32 %s93, 1
        %s162 = scalar_lea.vmem [#allocation5], %s161
        %p163 = scmp.lt.s32.totalorder %s17, 1
        %s164 = scalar_select %p163, %s17, 1
        %s165 = smul.addr %s164, 32
        %s166 = smul.addr %s165, 4
        %s167 = scalar_lea.vmem %s0, %s166
        %vm169 = vcmask 60416
        %170 = vst.msk [vmem:[#allocation2] sm:$0xf] %vm169, 0
        %171 = vst.msk [vmem:[#allocation2 + $0x4] sm:$0xf] %vm169, 0
        %vm172 = vcmask 57344
        %173 = vst.msk [vmem:[#allocation2 + $0x8] sm:$0x1] %vm172, 0
        %174 = vst.msk [vmem:[#allocation2 + $0xc] sm:$0xf] %vm169, 0
        %175 = vst.msk [vmem:[#allocation2 + $0x10] sm:$0xf] %vm169, 0
        %176 = vst.msk [vmem:[#allocation2 + $0x14] sm:$0x1] %vm172, 0
        %177 = vst.msk [vmem:[#allocation2 + $0x18] sm:$0xf] %vm169, 0
        %178 = vst.msk [vmem:[#allocation2 + $0x1c] sm:$0xf] %vm169, 0
        %179 = vst.msk [vmem:[#allocation2 + $0x20] sm:$0x1] %vm172, 0
        %180 = vst.msk [vmem:[#allocation2 + $0x24] sm:$0xf] %vm169, 0
        %181 = vst.msk [vmem:[#allocation2 + $0x28] sm:$0xf] %vm169, 0
        %182 = vst.msk [vmem:[#allocation2 + $0x2c] sm:$0x1] %vm172, 0
        %183 = vst.msk [vmem:[#allocation2 + $0x30] sm:$0xf] %vm169, 0
        %184 = vst.msk [vmem:[#allocation2 + $0x34] sm:$0xf] %vm169, 0
        %185 = vst.msk [vmem:[#allocation2 + $0x38] sm:$0x1] %vm172, 0
        %186 = vst.msk [vmem:[#allocation2 + $0x3c] sm:$0xf] %vm169, 0
        %187 = vst.msk [vmem:[#allocation2 + $0x40] sm:$0xf] %vm169, 0
        %188 = vst.msk [vmem:[#allocation2 + $0x44] sm:$0x1] %vm172, 0
        %189 = vst.msk [vmem:[#allocation2 + $0x48] sm:$0xf] %vm169, 0
        %190 = vst.msk [vmem:[#allocation2 + $0x4c] sm:$0xf] %vm169, 0
        %191 = vst.msk [vmem:[#allocation2 + $0x50] sm:$0x1] %vm172, 0
        %192 = vst.msk [vmem:[#allocation2 + $0x54] sm:$0xf] %vm169, 0
        %193 = vst.msk [vmem:[#allocation2 + $0x58] sm:$0xf] %vm169, 0
        %194 = vst.msk [vmem:[#allocation2 + $0x5c] sm:$0x1] %vm172, 0
        %195 = vst.msk [vmem:[#allocation2 + $0x60] sm:$0xf] %vm169, 0
        %196 = vst.msk [vmem:[#allocation2 + $0x64] sm:$0xf] %vm169, 0
        %197 = vst.msk [vmem:[#allocation2 + $0x68] sm:$0x1] %vm172, 0
        %198 = vst.msk [vmem:[#allocation2 + $0x6c] sm:$0xf] %vm169, 0
        %199 = vst.msk [vmem:[#allocation2 + $0x70] sm:$0xf] %vm169, 0
        %200 = vst.msk [vmem:[#allocation2 + $0x74] sm:$0x1] %vm172, 0
        %201 = vst.msk [vmem:[#allocation2 + $0x78] sm:$0xf] %vm169, 0
        %202 = vst.msk [vmem:[#allocation2 + $0x7c] sm:$0xf] %vm169, 0
        %203 = vst.msk [vmem:[#allocation2 + $0x80] sm:$0x1] %vm172, 0
        %204 = vst.msk [vmem:[#allocation2 + $0x84] sm:$0xf] %vm169, 0
        %205 = vst.msk [vmem:[#allocation2 + $0x88] sm:$0xf] %vm169, 0
        %206 = vst.msk [vmem:[#allocation2 + $0x8c] sm:$0x1] %vm172, 0
        %207 = vst.msk [vmem:[#allocation2 + $0x90] sm:$0xf] %vm169, 0
        %208 = vst.msk [vmem:[#allocation2 + $0x94] sm:$0xf] %vm169, 0
        %209 = vst.msk [vmem:[#allocation2 + $0x98] sm:$0x1] %vm172, 0
        %210 = vst.msk [vmem:[#allocation2 + $0x9c] sm:$0xf] %vm169, 0
        %211 = vst.msk [vmem:[#allocation2 + $0xa0] sm:$0xf] %vm169, 0
        %212 = vst.msk [vmem:[#allocation2 + $0xa4] sm:$0x1] %vm172, 0
        %213 = vst.msk [vmem:[#allocation2 + $0xa8] sm:$0xf] %vm169, 0
        %214 = vst.msk [vmem:[#allocation2 + $0xac] sm:$0xf] %vm169, 0
        %215 = vst.msk [vmem:[#allocation2 + $0xb0] sm:$0x1] %vm172, 0
        %216 = vst.msk [vmem:[#allocation2 + $0xb4] sm:$0xf] %vm169, 0
        %217 = vst.msk [vmem:[#allocation2 + $0xb8] sm:$0xf] %vm169, 0
        %218 = vst.msk [vmem:[#allocation2 + $0xbc] sm:$0x1] %vm172, 0
        %219 = vst.msk [vmem:[#allocation2 + $0xc0] sm:$0xf] %vm169, 0
        %220 = vst.msk [vmem:[#allocation2 + $0xc4] sm:$0xf] %vm169, 0
        %221 = vst.msk [vmem:[#allocation2 + $0xc8] sm:$0x1] %vm172, 0
        %222 = vst.msk [vmem:[#allocation2 + $0xcc] sm:$0xf] %vm169, 0
        %223 = vst.msk [vmem:[#allocation2 + $0xd0] sm:$0xf] %vm169, 0
        %224 = vst.msk [vmem:[#allocation2 + $0xd4] sm:$0x1] %vm172, 0
        %v225 = vld [vmem:[%s167] sm:$0xf]
        %v226 = vld [vmem:[%s167 + $0x4] sm:$0xf]
        %v227 = vld [vmem:[%s167 + $0x8] sm:$0xf]
        %v228 = vld [vmem:[%s167 + $0xc] sm:$0xf]
        %v229 = vld [vmem:[%s167 + $0x10] sm:$0xf]
        %v230 = vld [vmem:[%s167 + $0x14] sm:$0xf]
        %v231 = vld [vmem:[%s167 + $0x18] sm:$0xf]
        %v232 = vld [vmem:[%s167 + $0x1c] sm:$0xf]
        %v233 = vld [vmem:[%s167 + $0x20] sm:$0xf]
        %v234 = vld [vmem:[%s167 + $0x24] sm:$0xf]
        %v235 = vld [vmem:[%s167 + $0x28] sm:$0xf]
        %v236 = vld [vmem:[%s167 + $0x2c] sm:$0xf]
        %v237 = vld [vmem:[%s167 + $0x30] sm:$0xf]
        %v238 = vld [vmem:[%s167 + $0x34] sm:$0xf]
        %v239 = vld [vmem:[%s167 + $0x38] sm:$0xf]
        %v240 = vld [vmem:[%s167 + $0x3c] sm:$0xf]
        %v241 = vld [vmem:[%s167 + $0x40] sm:$0xf]
        %v242 = vld [vmem:[%s167 + $0x44] sm:$0xf]
        %v243 = vld [vmem:[%s167 + $0x48] sm:$0xf]
        %v244 = vld [vmem:[%s167 + $0x4c] sm:$0xf]
        %v245 = vld [vmem:[%s167 + $0x50] sm:$0xf]
        %v246 = vld [vmem:[%s167 + $0x54] sm:$0xf]
        %v247 = vld [vmem:[%s167 + $0x58] sm:$0xf]
        %v248 = vld [vmem:[%s167 + $0x5c] sm:$0xf]
        %v249 = vld [vmem:[%s167 + $0x60] sm:$0xf]
        %v250 = vld [vmem:[%s167 + $0x64] sm:$0xf]
        %v251 = vld [vmem:[%s167 + $0x68] sm:$0xf]
        %v252 = vld [vmem:[%s167 + $0x6c] sm:$0xf]
        %v253 = vld [vmem:[%s167 + $0x70] sm:$0xf]
        %v254 = vld [vmem:[%s167 + $0x74] sm:$0xf]
        %v255 = vld [vmem:[%s167 + $0x78] sm:$0xf]
        %v256 = vld [vmem:[%s167 + $0x7c] sm:$0xf]
        %vm257 = vsmask.f32 256
        %vm258 = vsmask.f32 4368
        %vm259 = vmor %vm257, %vm258
        %v261 = vshrl.u32 %v225, 16
        %v263 = vrot.slane %v261, 7
        %v264 = vshll.u32 %v225, 16
        %v266 = vor.u32 %v263, %v264
        %v267 = vrot.slane %v263, 4
        %v269 = vshrl.u32 %v226, 16
        %v271 = vrot.slane %v269, 7
        %v272 = vshll.u32 %v226, 16
        %v274 = vor.u32 %v271, %v272
        %v275 = vsel %vm259, %v267, %v274
        %v276 = vrot.slane %v271, 4
        %v278 = vshrl.u32 %v227, 16
        %v280 = vrot.slane %v278, 7
        %v281 = vshll.u32 %v227, 16
        %v283 = vor.u32 %v280, %v281
        %v284 = vrot.slane %v280, 4
        %v286 = vshrl.u32 %v228, 16
        %v288 = vrot.slane %v286, 7
        %v289 = vshll.u32 %v228, 16
        %v291 = vor.u32 %v288, %v289
        %v292 = vsel %vm259, %v284, %v291
        %v293 = vrot.slane %v288, 4
        %v295 = vshrl.u32 %v229, 16
        %v297 = vrot.slane %v295, 7
        %v298 = vshll.u32 %v229, 16
        %v300 = vor.u32 %v297, %v298
        %v301 = vrot.slane %v297, 4
        %v303 = vshrl.u32 %v230, 16
        %v305 = vrot.slane %v303, 7
        %v306 = vshll.u32 %v230, 16
        %v308 = vor.u32 %v305, %v306
        %v309 = vsel %vm259, %v301, %v308
        %v310 = vrot.slane %v305, 4
        %v312 = vshrl.u32 %v231, 16
        %v314 = vrot.slane %v312, 7
        %v315 = vshll.u32 %v231, 16
        %v317 = vor.u32 %v314, %v315
        %v318 = vrot.slane %v314, 4
        %v320 = vshrl.u32 %v232, 16
        %v322 = vrot.slane %v320, 7
        %v323 = vshll.u32 %v232, 16
        %v325 = vor.u32 %v322, %v323
        %v326 = vsel %vm259, %v318, %v325
        %v327 = vrot.slane %v322, 4
        %v329 = vshrl.u32 %v233, 16
        %v331 = vrot.slane %v329, 7
        %v332 = vshll.u32 %v233, 16
        %v334 = vor.u32 %v331, %v332
        %v335 = vrot.slane %v331, 4
        %v337 = vshrl.u32 %v234, 16
        %v339 = vrot.slane %v337, 7
        %v340 = vshll.u32 %v234, 16
        %v342 = vor.u32 %v339, %v340
        %v343 = vsel %vm259, %v335, %v342
        %v344 = vrot.slane %v339, 4
        %v346 = vshrl.u32 %v235, 16
        %v348 = vrot.slane %v346, 7
        %v349 = vshll.u32 %v235, 16
        %v351 = vor.u32 %v348, %v349
        %v352 = vrot.slane %v348, 4
        %v354 = vshrl.u32 %v236, 16
        %v356 = vrot.slane %v354, 7
        %v357 = vshll.u32 %v236, 16
        %v359 = vor.u32 %v356, %v357
        %v360 = vsel %vm259, %v352, %v359
        %v361 = vrot.slane %v356, 4
        %v363 = vshrl.u32 %v237, 16
        %v365 = vrot.slane %v363, 7
        %v366 = vshll.u32 %v237, 16
        %v368 = vor.u32 %v365, %v366
        %v369 = vrot.slane %v365, 4
        %v371 = vshrl.u32 %v238, 16
        %v373 = vrot.slane %v371, 7
        %v374 = vshll.u32 %v238, 16
        %v376 = vor.u32 %v373, %v374
        %v377 = vsel %vm259, %v369, %v376
        %v378 = vrot.slane %v373, 4
        %v380 = vshrl.u32 %v239, 16
        %v382 = vrot.slane %v380, 7
        %v383 = vshll.u32 %v239, 16
        %v385 = vor.u32 %v382, %v383
        %v386 = vrot.slane %v382, 4
        %v388 = vshrl.u32 %v240, 16
        %v390 = vrot.slane %v388, 7
        %v391 = vshll.u32 %v240, 16
        %v393 = vor.u32 %v390, %v391
        %v394 = vsel %vm259, %v386, %v393
        %v395 = vrot.slane %v390, 4
        %v397 = vshrl.u32 %v241, 16
        %v399 = vrot.slane %v397, 7
        %v400 = vshll.u32 %v241, 16
        %v402 = vor.u32 %v399, %v400
        %v403 = vrot.slane %v399, 4
        %v405 = vshrl.u32 %v242, 16
        %v407 = vrot.slane %v405, 7
        %v408 = vshll.u32 %v242, 16
        %v410 = vor.u32 %v407, %v408
        %v411 = vsel %vm259, %v403, %v410
        %v412 = vrot.slane %v407, 4
        %v414 = vshrl.u32 %v243, 16
        %v416 = vrot.slane %v414, 7
        %v417 = vshll.u32 %v243, 16
        %v419 = vor.u32 %v416, %v417
        %v420 = vrot.slane %v416, 4
        %v422 = vshrl.u32 %v244, 16
        %v424 = vrot.slane %v422, 7
        %v425 = vshll.u32 %v244, 16
        %v427 = vor.u32 %v424, %v425
        %v428 = vsel %vm259, %v420, %v427
        %v429 = vrot.slane %v424, 4
        %v431 = vshrl.u32 %v245, 16
        %v433 = vrot.slane %v431, 7
        %v434 = vshll.u32 %v245, 16
        %v436 = vor.u32 %v433, %v434
        %v437 = vrot.slane %v433, 4
        %v439 = vshrl.u32 %v246, 16
        %v441 = vrot.slane %v439, 7
        %v442 = vshll.u32 %v246, 16
        %v444 = vor.u32 %v441, %v442
        %v445 = vsel %vm259, %v437, %v444
        %v446 = vrot.slane %v441, 4
        %v448 = vshrl.u32 %v247, 16
        %v450 = vrot.slane %v448, 7
        %v451 = vshll.u32 %v247, 16
        %v453 = vor.u32 %v450, %v451
        %v454 = vrot.slane %v450, 4
        %v456 = vshrl.u32 %v248, 16
        %v458 = vrot.slane %v456, 7
        %v459 = vshll.u32 %v248, 16
        %v461 = vor.u32 %v458, %v459
        %v462 = vsel %vm259, %v454, %v461
        %v463 = vrot.slane %v458, 4
        %v465 = vshrl.u32 %v249, 16
        %v467 = vrot.slane %v465, 7
        %v468 = vshll.u32 %v249, 16
        %v470 = vor.u32 %v467, %v468
        %v471 = vrot.slane %v467, 4
        %v473 = vshrl.u32 %v250, 16
        %v475 = vrot.slane %v473, 7
        %v476 = vshll.u32 %v250, 16
        %v478 = vor.u32 %v475, %v476
        %v479 = vsel %vm259, %v471, %v478
        %v480 = vrot.slane %v475, 4
        %v482 = vshrl.u32 %v251, 16
        %v484 = vrot.slane %v482, 7
        %v485 = vshll.u32 %v251, 16
        %v487 = vor.u32 %v484, %v485
        %v488 = vrot.slane %v484, 4
        %v490 = vshrl.u32 %v252, 16
        %v492 = vrot.slane %v490, 7
        %v493 = vshll.u32 %v252, 16
        %v495 = vor.u32 %v492, %v493
        %v496 = vsel %vm259, %v488, %v495
        %v497 = vrot.slane %v492, 4
        %v499 = vshrl.u32 %v253, 16
        %v501 = vrot.slane %v499, 7
        %v502 = vshll.u32 %v253, 16
        %v504 = vor.u32 %v501, %v502
        %v505 = vrot.slane %v501, 4
        %v507 = vshrl.u32 %v254, 16
        %v509 = vrot.slane %v507, 7
        %v510 = vshll.u32 %v254, 16
        %v512 = vor.u32 %v509, %v510
        %v513 = vsel %vm259, %v505, %v512
        %v514 = vrot.slane %v509, 4
        %v516 = vshrl.u32 %v255, 16
        %v518 = vrot.slane %v516, 7
        %v519 = vshll.u32 %v255, 16
        %v521 = vor.u32 %v518, %v519
        %v522 = vrot.slane %v518, 4
        %v524 = vshrl.u32 %v256, 16
        %v526 = vrot.slane %v524, 7
        %v527 = vshll.u32 %v256, 16
        %v529 = vor.u32 %v526, %v527
        %v530 = vsel %vm259, %v522, %v529
        %v531 = vrot.slane %v526, 4
        %s580 = scalar_lea.vmem [#allocation2], 12
        %vm581 = vcmask 27648
        %vm582 = vsmask.f32 7938
        %vm583 = vmand %vm581, %vm582
        %v584 = vld [vmem:[%s580] sm:$0xf]
        %v585 = vsel %vm583, %v266, %v584
        %586 = vst [vmem:[%s580] sm:$0xf] %v585
        %vm587 = vcmask 27648
        %588 = vst.msk [vmem:[%s580 + $0x4] sm:$0xf] %vm587, %v275
        %vm589 = vcmask 24576
        %vm590 = vmand %vm589, %vm257
        %v591 = vld [vmem:[%s580 + $0x8] sm:$0x1]
        %v592 = vsel %vm590, %v276, %v591
        %593 = vst [vmem:[%s580 + $0x8] sm:$0x1] %v592
        %v594 = vld [vmem:[%s580 + $0xc] sm:$0xf]
        %v595 = vsel %vm583, %v283, %v594
        %596 = vst [vmem:[%s580 + $0xc] sm:$0xf] %v595
        %597 = vst.msk [vmem:[%s580 + $0x10] sm:$0xf] %vm587, %v292
        %v598 = vld [vmem:[%s580 + $0x14] sm:$0x1]
        %v599 = vsel %vm590, %v293, %v598
        %600 = vst [vmem:[%s580 + $0x14] sm:$0x1] %v599
        %v601 = vld [vmem:[%s580 + $0x18] sm:$0xf]
        %v602 = vsel %vm583, %v300, %v601
        %603 = vst [vmem:[%s580 + $0x18] sm:$0xf] %v602
        %604 = vst.msk [vmem:[%s580 + $0x1c] sm:$0xf] %vm587, %v309
        %v605 = vld [vmem:[%s580 + $0x20] sm:$0x1]
        %v606 = vsel %vm590, %v310, %v605
        %607 = vst [vmem:[%s580 + $0x20] sm:$0x1] %v606
        %v608 = vld [vmem:[%s580 + $0x24] sm:$0xf]
        %v609 = vsel %vm583, %v317, %v608
        %610 = vst [vmem:[%s580 + $0x24] sm:$0xf] %v609
        %611 = vst.msk [vmem:[%s580 + $0x28] sm:$0xf] %vm587, %v326
        %v612 = vld [vmem:[%s580 + $0x2c] sm:$0x1]
        %v613 = vsel %vm590, %v327, %v612
        %614 = vst [vmem:[%s580 + $0x2c] sm:$0x1] %v613
        %v615 = vld [vmem:[%s580 + $0x30] sm:$0xf]
        %v616 = vsel %vm583, %v334, %v615
        %617 = vst [vmem:[%s580 + $0x30] sm:$0xf] %v616
        %618 = vst.msk [vmem:[%s580 + $0x34] sm:$0xf] %vm587, %v343
        %v619 = vld [vmem:[%s580 + $0x38] sm:$0x1]
        %v620 = vsel %vm590, %v344, %v619
        %621 = vst [vmem:[%s580 + $0x38] sm:$0x1] %v620
        %v622 = vld [vmem:[%s580 + $0x3c] sm:$0xf]
        %v623 = vsel %vm583, %v351, %v622
        %624 = vst [vmem:[%s580 + $0x3c] sm:$0xf] %v623
        %625 = vst.msk [vmem:[%s580 + $0x40] sm:$0xf] %vm587, %v360
        %v626 = vld [vmem:[%s580 + $0x44] sm:$0x1]
        %v627 = vsel %vm590, %v361, %v626
        %628 = vst [vmem:[%s580 + $0x44] sm:$0x1] %v627
        %v629 = vld [vmem:[%s580 + $0x48] sm:$0xf]
        %v630 = vsel %vm583, %v368, %v629
        %631 = vst [vmem:[%s580 + $0x48] sm:$0xf] %v630
        %632 = vst.msk [vmem:[%s580 + $0x4c] sm:$0xf] %vm587, %v377
        %v633 = vld [vmem:[%s580 + $0x50] sm:$0x1]
        %v634 = vsel %vm590, %v378, %v633
        %635 = vst [vmem:[%s580 + $0x50] sm:$0x1] %v634
        %v636 = vld [vmem:[%s580 + $0x54] sm:$0xf]
        %v637 = vsel %vm583, %v385, %v636
        %638 = vst [vmem:[%s580 + $0x54] sm:$0xf] %v637
        %639 = vst.msk [vmem:[%s580 + $0x58] sm:$0xf] %vm587, %v394
        %v640 = vld [vmem:[%s580 + $0x5c] sm:$0x1]
        %v641 = vsel %vm590, %v395, %v640
        %642 = vst [vmem:[%s580 + $0x5c] sm:$0x1] %v641
        %v643 = vld [vmem:[%s580 + $0x60] sm:$0xf]
        %v644 = vsel %vm583, %v402, %v643
        %645 = vst [vmem:[%s580 + $0x60] sm:$0xf] %v644
        %646 = vst.msk [vmem:[%s580 + $0x64] sm:$0xf] %vm587, %v411
        %v647 = vld [vmem:[%s580 + $0x68] sm:$0x1]
        %v648 = vsel %vm590, %v412, %v647
        %649 = vst [vmem:[%s580 + $0x68] sm:$0x1] %v648
        %v650 = vld [vmem:[%s580 + $0x6c] sm:$0xf]
        %v651 = vsel %vm583, %v419, %v650
        %652 = vst [vmem:[%s580 + $0x6c] sm:$0xf] %v651
        %653 = vst.msk [vmem:[%s580 + $0x70] sm:$0xf] %vm587, %v428
        %v654 = vld [vmem:[%s580 + $0x74] sm:$0x1]
        %v655 = vsel %vm590, %v429, %v654
        %656 = vst [vmem:[%s580 + $0x74] sm:$0x1] %v655
        %v657 = vld [vmem:[%s580 + $0x78] sm:$0xf]
        %v658 = vsel %vm583, %v436, %v657
        %659 = vst [vmem:[%s580 + $0x78] sm:$0xf] %v658
        %660 = vst.msk [vmem:[%s580 + $0x7c] sm:$0xf] %vm587, %v445
        %v661 = vld [vmem:[%s580 + $0x80] sm:$0x1]
        %v662 = vsel %vm590, %v446, %v661
        %663 = vst [vmem:[%s580 + $0x80] sm:$0x1] %v662
        %v664 = vld [vmem:[%s580 + $0x84] sm:$0xf]
        %v665 = vsel %vm583, %v453, %v664
        %666 = vst [vmem:[%s580 + $0x84] sm:$0xf] %v665
        %667 = vst.msk [vmem:[%s580 + $0x88] sm:$0xf] %vm587, %v462
        %v668 = vld [vmem:[%s580 + $0x8c] sm:$0x1]
        %v669 = vsel %vm590, %v463, %v668
        %670 = vst [vmem:[%s580 + $0x8c] sm:$0x1] %v669
        %v671 = vld [vmem:[%s580 + $0x90] sm:$0xf]
        %v672 = vsel %vm583, %v470, %v671
        %673 = vst [vmem:[%s580 + $0x90] sm:$0xf] %v672
        %674 = vst.msk [vmem:[%s580 + $0x94] sm:$0xf] %vm587, %v479
        %v675 = vld [vmem:[%s580 + $0x98] sm:$0x1]
        %v676 = vsel %vm590, %v480, %v675
        %677 = vst [vmem:[%s580 + $0x98] sm:$0x1] %v676
        %v678 = vld [vmem:[%s580 + $0x9c] sm:$0xf]
        %v679 = vsel %vm583, %v487, %v678
        %680 = vst [vmem:[%s580 + $0x9c] sm:$0xf] %v679
        %681 = vst.msk [vmem:[%s580 + $0xa0] sm:$0xf] %vm587, %v496
        %v682 = vld [vmem:[%s580 + $0xa4] sm:$0x1]
        %v683 = vsel %vm590, %v497, %v682
        %684 = vst [vmem:[%s580 + $0xa4] sm:$0x1] %v683
        %v685 = vld [vmem:[%s580 + $0xa8] sm:$0xf]
        %v686 = vsel %vm583, %v504, %v685
        %687 = vst [vmem:[%s580 + $0xa8] sm:$0xf] %v686
        %688 = vst.msk [vmem:[%s580 + $0xac] sm:$0xf] %vm587, %v513
        %v689 = vld [vmem:[%s580 + $0xb0] sm:$0x1]
        %v690 = vsel %vm590, %v514, %v689
        %691 = vst [vmem:[%s580 + $0xb0] sm:$0x1] %v690
        %v692 = vld [vmem:[%s580 + $0xb4] sm:$0xf]
        %v693 = vsel %vm583, %v521, %v692
        %694 = vst [vmem:[%s580 + $0xb4] sm:$0xf] %v693
        %695 = vst.msk [vmem:[%s580 + $0xb8] sm:$0xf] %vm587, %v530
        %v696 = vld [vmem:[%s580 + $0xbc] sm:$0x1]
        %v697 = vsel %vm590, %v531, %v696
        %698 = vst [vmem:[%s580 + $0xbc] sm:$0x1] %v697
        %v699 = vld [vmem:[%s1] sm:$0xf]
        %v700 = vld [vmem:[%s1 + $0x4] sm:$0xf]
        %v701 = vld [vmem:[%s1 + $0x8] sm:$0xf]
        %v702 = vld [vmem:[%s1 + $0xc] sm:$0xf]
        %v703 = vld [vmem:[%s1 + $0x10] sm:$0xf]
        %v704 = vld [vmem:[%s1 + $0x14] sm:$0xf]
        %v705 = vld [vmem:[%s1 + $0x18] sm:$0xf]
        %v706 = vld [vmem:[%s1 + $0x1c] sm:$0xf]
        %v707 = vld [vmem:[%s1 + $0x20] sm:$0xf]
        %v708 = vld [vmem:[%s2] sm:$0x1]
        %v709 = vld [vmem:[#allocation2] sm:$0xf]
        %v710 = vld [vmem:[#allocation2 + $0x4] sm:$0xf]
        %v711 = vld [vmem:[#allocation2 + $0xc] sm:$0xf]
        %v712 = vld [vmem:[#allocation2 + $0x10] sm:$0xf]
        %v713 = vld [vmem:[#allocation2 + $0x18] sm:$0xf]
        %v714 = vld [vmem:[#allocation2 + $0x1c] sm:$0xf]
        %v715 = vld [vmem:[#allocation2 + $0x24] sm:$0xf]
        %v716 = vld [vmem:[#allocation2 + $0x28] sm:$0xf]
        %v717 = vld [vmem:[#allocation2 + $0x30] sm:$0xf]
        %v718 = vld [vmem:[#allocation2 + $0x34] sm:$0xf]
        %v719 = vld [vmem:[#allocation2 + $0x3c] sm:$0xf]
        %v720 = vld [vmem:[#allocation2 + $0x40] sm:$0xf]
        %v721 = vld [vmem:[#allocation2 + $0x48] sm:$0xf]
        %v722 = vld [vmem:[#allocation2 + $0x4c] sm:$0xf]
        %v723 = vld [vmem:[#allocation2 + $0x54] sm:$0xf]
        %v724 = vld [vmem:[#allocation2 + $0x58] sm:$0xf]
        %v725 = vld [vmem:[#allocation2 + $0x60] sm:$0xf]
        %v726 = vld [vmem:[#allocation2 + $0x64] sm:$0xf]
        %v727 = vld [vmem:[#allocation2 + $0x6c] sm:$0xf]
        %v728 = vld [vmem:[#allocation2 + $0x70] sm:$0xf]
        %v729 = vld [vmem:[#allocation2 + $0x78] sm:$0xf]
        %v730 = vld [vmem:[#allocation2 + $0x7c] sm:$0xf]
        %v731 = vld [vmem:[#allocation2 + $0x84] sm:$0xf]
        %v732 = vld [vmem:[#allocation2 + $0x88] sm:$0xf]
        %v733 = vld [vmem:[#allocation2 + $0x90] sm:$0xf]
        %v734 = vld [vmem:[#allocation2 + $0x94] sm:$0xf]
        %v735 = vld [vmem:[#allocation2 + $0x9c] sm:$0xf]
        %v736 = vld [vmem:[#allocation2 + $0xa0] sm:$0xf]
        %v737 = vld [vmem:[#allocation2 + $0xa8] sm:$0xf]
        %v738 = vld [vmem:[#allocation2 + $0xac] sm:$0xf]
        %v739 = vld [vmem:[#allocation2 + $0xb4] sm:$0xf]
        %v740 = vld [vmem:[#allocation2 + $0xb8] sm:$0xf]
        %741 = vst.msk [vmem:[#allocation3] sm:$0xf] %vm169, %v709
        %742 = vst.msk [vmem:[#allocation3 + $0x4] sm:$0xf] %vm169, %v710
        %743 = vst.msk [vmem:[#allocation3 + $0x8] sm:$0xf] %vm169, %v711
        %744 = vst.msk [vmem:[#allocation3 + $0xc] sm:$0xf] %vm169, %v712
        %745 = vst.msk [vmem:[#allocation3 + $0x10] sm:$0xf] %vm169, %v713
        %746 = vst.msk [vmem:[#allocation3 + $0x14] sm:$0xf] %vm169, %v714
        %747 = vst.msk [vmem:[#allocation3 + $0x18] sm:$0xf] %vm169, %v715
        %748 = vst.msk [vmem:[#allocation3 + $0x1c] sm:$0xf] %vm169, %v716
        %749 = vst.msk [vmem:[#allocation3 + $0x20] sm:$0xf] %vm169, %v717
        %750 = vst.msk [vmem:[#allocation3 + $0x24] sm:$0xf] %vm169, %v718
        %751 = vst.msk [vmem:[#allocation3 + $0x28] sm:$0xf] %vm169, %v719
        %752 = vst.msk [vmem:[#allocation3 + $0x2c] sm:$0xf] %vm169, %v720
        %753 = vst.msk [vmem:[#allocation3 + $0x30] sm:$0xf] %vm169, %v721
        %754 = vst.msk [vmem:[#allocation3 + $0x34] sm:$0xf] %vm169, %v722
        %755 = vst.msk [vmem:[#allocation3 + $0x38] sm:$0xf] %vm169, %v723
        %756 = vst.msk [vmem:[#allocation3 + $0x3c] sm:$0xf] %vm169, %v724
        %757 = vst.msk [vmem:[#allocation3 + $0x40] sm:$0xf] %vm169, %v725
        %758 = vst.msk [vmem:[#allocation3 + $0x44] sm:$0xf] %vm169, %v726
        %759 = vst.msk [vmem:[#allocation3 + $0x48] sm:$0xf] %vm169, %v727
        %760 = vst.msk [vmem:[#allocation3 + $0x4c] sm:$0xf] %vm169, %v728
        %761 = vst.msk [vmem:[#allocation3 + $0x50] sm:$0xf] %vm169, %v729
        %762 = vst.msk [vmem:[#allocation3 + $0x54] sm:$0xf] %vm169, %v730
        %763 = vst.msk [vmem:[#allocation3 + $0x58] sm:$0xf] %vm169, %v731
        %764 = vst.msk [vmem:[#allocation3 + $0x5c] sm:$0xf] %vm169, %v732
        %765 = vst.msk [vmem:[#allocation3 + $0x60] sm:$0xf] %vm169, %v733
        %766 = vst.msk [vmem:[#allocation3 + $0x64] sm:$0xf] %vm169, %v734
        %767 = vst.msk [vmem:[#allocation3 + $0x68] sm:$0xf] %vm169, %v735
        %768 = vst.msk [vmem:[#allocation3 + $0x6c] sm:$0xf] %vm169, %v736
        %769 = vst.msk [vmem:[#allocation3 + $0x70] sm:$0xf] %vm169, %v737
        %770 = vst.msk [vmem:[#allocation3 + $0x74] sm:$0xf] %vm169, %v738
        %771 = vst.msk [vmem:[#allocation3 + $0x78] sm:$0xf] %vm169, %v739
        %772 = vst.msk [vmem:[#allocation3 + $0x7c] sm:$0xf] %vm169, %v740
        %v773 = vld [vmem:[#allocation2] sm:$0xf]
        %v774 = vld [vmem:[#allocation2 + $0x4] sm:$0xf]
        %v775 = vld [vmem:[#allocation2 + $0x8] sm:$0x1]
        %v776 = vld [vmem:[#allocation2 + $0xc] sm:$0xf]
        %v777 = vld [vmem:[#allocation2 + $0x10] sm:$0xf]
        %v778 = vld [vmem:[#allocation2 + $0x14] sm:$0x1]
        %v779 = vld [vmem:[#allocation2 + $0x18] sm:$0xf]
        %v780 = vld [vmem:[#allocation2 + $0x1c] sm:$0xf]
        %v781 = vld [vmem:[#allocation2 + $0x20] sm:$0x1]
        %v782 = vld [vmem:[#allocation2 + $0x24] sm:$0xf]
        %v783 = vld [vmem:[#allocation2 + $0x28] sm:$0xf]
        %v784 = vld [vmem:[#allocation2 + $0x2c] sm:$0x1]
        %v785 = vld [vmem:[#allocation2 + $0x30] sm:$0xf]
        %v786 = vld [vmem:[#allocation2 + $0x34] sm:$0xf]
        %v787 = vld [vmem:[#allocation2 + $0x38] sm:$0x1]
        %v788 = vld [vmem:[#allocation2 + $0x3c] sm:$0xf]
        %v789 = vld [vmem:[#allocation2 + $0x40] sm:$0xf]
        %v790 = vld [vmem:[#allocation2 + $0x44] sm:$0x1]
        %v791 = vld [vmem:[#allocation2 + $0x48] sm:$0xf]
        %v792 = vld [vmem:[#allocation2 + $0x4c] sm:$0xf]
        %v793 = vld [vmem:[#allocation2 + $0x50] sm:$0x1]
        %v794 = vld [vmem:[#allocation2 + $0x54] sm:$0xf]
        %v795 = vld [vmem:[#allocation2 + $0x58] sm:$0xf]
        %v796 = vld [vmem:[#allocation2 + $0x5c] sm:$0x1]
        %v797 = vld [vmem:[#allocation2 + $0x60] sm:$0xf]
        %v798 = vld [vmem:[#allocation2 + $0x64] sm:$0xf]
        %v799 = vld [vmem:[#allocation2 + $0x68] sm:$0x1]
        %v800 = vld [vmem:[#allocation2 + $0x6c] sm:$0xf]
        %v801 = vld [vmem:[#allocation2 + $0x70] sm:$0xf]
        %v802 = vld [vmem:[#allocation2 + $0x74] sm:$0x1]
        %v803 = vld [vmem:[#allocation2 + $0x78] sm:$0xf]
        %v804 = vld [vmem:[#allocation2 + $0x7c] sm:$0xf]
        %v805 = vld [vmem:[#allocation2 + $0x80] sm:$0x1]
        %v806 = vld [vmem:[#allocation2 + $0x84] sm:$0xf]
        %v807 = vld [vmem:[#allocation2 + $0x88] sm:$0xf]
        %v808 = vld [vmem:[#allocation2 + $0x8c] sm:$0x1]
        %v809 = vld [vmem:[#allocation2 + $0x90] sm:$0xf]
        %v810 = vld [vmem:[#allocation2 + $0x94] sm:$0xf]
        %v811 = vld [vmem:[#allocation2 + $0x98] sm:$0x1]
        %v812 = vld [vmem:[#allocation2 + $0x9c] sm:$0xf]
        %v813 = vld [vmem:[#allocation2 + $0xa0] sm:$0xf]
        %v814 = vld [vmem:[#allocation2 + $0xa4] sm:$0x1]
        %v815 = vld [vmem:[#allocation2 + $0xa8] sm:$0xf]
        %v816 = vld [vmem:[#allocation2 + $0xac] sm:$0xf]
        %v817 = vld [vmem:[#allocation2 + $0xb0] sm:$0x1]
        %v818 = vld [vmem:[#allocation2 + $0xb4] sm:$0xf]
        %v819 = vld [vmem:[#allocation2 + $0xb8] sm:$0xf]
        %v820 = vld [vmem:[#allocation2 + $0xbc] sm:$0x1]
        %vm821 = vsmask.f32 3328
        %vm822 = vsmask.f32 7440
        %vm823 = vmor %vm821, %vm822
        %v825 = vshrl.u32 %v773, 16
        %v827 = vrot.slane %v825, 4
        %v828 = vshll.u32 %v773, 16
        %v830 = vrot.slane %v828, 5
        %v831 = vor.u32 %v827, %v830
        %v832 = vrot.slane %v831, 4
        %v834 = vshll.u32 %v774, 16
        %v836 = vrot.slane %v834, 5
        %v837 = vsel %vm823, %v832, %v836
        %v838 = vshrl.u32 %v774, 16
        %v840 = vrot.slane %v838, 4
        %v841 = vor.u32 %v840, %v836
        %v842 = vrot.slane %v841, 4
        %v844 = vshll.u32 %v775, 16
        %v846 = vrot.slane %v844, 5
        %v847 = vsel %vm823, %v842, %v846
        %v849 = vshrl.u32 %v776, 16
        %v851 = vrot.slane %v849, 4
        %v852 = vshll.u32 %v776, 16
        %v854 = vrot.slane %v852, 5
        %v855 = vor.u32 %v851, %v854
        %v856 = vrot.slane %v855, 4
        %v858 = vshll.u32 %v777, 16
        %v860 = vrot.slane %v858, 5
        %v861 = vsel %vm823, %v856, %v860
        %v862 = vshrl.u32 %v777, 16
        %v864 = vrot.slane %v862, 4
        %v865 = vor.u32 %v864, %v860
        %v866 = vrot.slane %v865, 4
        %v868 = vshll.u32 %v778, 16
        %v870 = vrot.slane %v868, 5
        %v871 = vsel %vm823, %v866, %v870
        %v873 = vshrl.u32 %v779, 16
        %v875 = vrot.slane %v873, 4
        %v876 = vshll.u32 %v779, 16
        %v878 = vrot.slane %v876, 5
        %v879 = vor.u32 %v875, %v878
        %v880 = vrot.slane %v879, 4
        %v882 = vshll.u32 %v780, 16
        %v884 = vrot.slane %v882, 5
        %v885 = vsel %vm823, %v880, %v884
        %v886 = vshrl.u32 %v780, 16
        %v888 = vrot.slane %v886, 4
        %v889 = vor.u32 %v888, %v884
        %v890 = vrot.slane %v889, 4
        %v892 = vshll.u32 %v781, 16
        %v894 = vrot.slane %v892, 5
        %v895 = vsel %vm823, %v890, %v894
        %v897 = vshrl.u32 %v782, 16
        %v899 = vrot.slane %v897, 4
        %v900 = vshll.u32 %v782, 16
        %v902 = vrot.slane %v900, 5
        %v903 = vor.u32 %v899, %v902
        %v904 = vrot.slane %v903, 4
        %v906 = vshll.u32 %v783, 16
        %v908 = vrot.slane %v906, 5
        %v909 = vsel %vm823, %v904, %v908
        %v910 = vshrl.u32 %v783, 16
        %v912 = vrot.slane %v910, 4
        %v913 = vor.u32 %v912, %v908
        %v914 = vrot.slane %v913, 4
        %v916 = vshll.u32 %v784, 16
        %v918 = vrot.slane %v916, 5
        %v919 = vsel %vm823, %v914, %v918
        %v921 = vshrl.u32 %v785, 16
        %v923 = vrot.slane %v921, 4
        %v924 = vshll.u32 %v785, 16
        %v926 = vrot.slane %v924, 5
        %v927 = vor.u32 %v923, %v926
        %v928 = vrot.slane %v927, 4
        %v930 = vshll.u32 %v786, 16
        %v932 = vrot.slane %v930, 5
        %v933 = vsel %vm823, %v928, %v932
        %v934 = vshrl.u32 %v786, 16
        %v936 = vrot.slane %v934, 4
        %v937 = vor.u32 %v936, %v932
        %v938 = vrot.slane %v937, 4
        %v940 = vshll.u32 %v787, 16
        %v942 = vrot.slane %v940, 5
        %v943 = vsel %vm823, %v938, %v942
        %v945 = vshrl.u32 %v788, 16
        %v947 = vrot.slane %v945, 4
        %v948 = vshll.u32 %v788, 16
        %v950 = vrot.slane %v948, 5
        %v951 = vor.u32 %v947, %v950
        %v952 = vrot.slane %v951, 4
        %v954 = vshll.u32 %v789, 16
        %v956 = vrot.slane %v954, 5
        %v957 = vsel %vm823, %v952, %v956
        %v958 = vshrl.u32 %v789, 16
        %v960 = vrot.slane %v958, 4
        %v961 = vor.u32 %v960, %v956
        %v962 = vrot.slane %v961, 4
        %v964 = vshll.u32 %v790, 16
        %v966 = vrot.slane %v964, 5
        %v967 = vsel %vm823, %v962, %v966
        %v969 = vshrl.u32 %v791, 16
        %v971 = vrot.slane %v969, 4
        %v972 = vshll.u32 %v791, 16
        %v974 = vrot.slane %v972, 5
        %v975 = vor.u32 %v971, %v974
        %v976 = vrot.slane %v975, 4
        %v978 = vshll.u32 %v792, 16
        %v980 = vrot.slane %v978, 5
        %v981 = vsel %vm823, %v976, %v980
        %v982 = vshrl.u32 %v792, 16
        %v984 = vrot.slane %v982, 4
        %v985 = vor.u32 %v984, %v980
        %v986 = vrot.slane %v985, 4
        %v988 = vshll.u32 %v793, 16
        %v990 = vrot.slane %v988, 5
        %v991 = vsel %vm823, %v986, %v990
        %v993 = vshrl.u32 %v794, 16
        %v995 = vrot.slane %v993, 4
        %v996 = vshll.u32 %v794, 16
        %v998 = vrot.slane %v996, 5
        %v999 = vor.u32 %v995, %v998
        %v1000 = vrot.slane %v999, 4
        %v1002 = vshll.u32 %v795, 16
        %v1004 = vrot.slane %v1002, 5
        %v1005 = vsel %vm823, %v1000, %v1004
        %v1006 = vshrl.u32 %v795, 16
        %v1008 = vrot.slane %v1006, 4
        %v1009 = vor.u32 %v1008, %v1004
        %v1010 = vrot.slane %v1009, 4
        %v1012 = vshll.u32 %v796, 16
        %v1014 = vrot.slane %v1012, 5
        %v1015 = vsel %vm823, %v1010, %v1014
        %v1017 = vshrl.u32 %v797, 16
        %v1019 = vrot.slane %v1017, 4
        %v1020 = vshll.u32 %v797, 16
        %v1022 = vrot.slane %v1020, 5
        %v1023 = vor.u32 %v1019, %v1022
        %v1024 = vrot.slane %v1023, 4
        %v1026 = vshll.u32 %v798, 16
        %v1028 = vrot.slane %v1026, 5
        %v1029 = vsel %vm823, %v1024, %v1028
        %v1030 = vshrl.u32 %v798, 16
        %v1032 = vrot.slane %v1030, 4
        %v1033 = vor.u32 %v1032, %v1028
        %v1034 = vrot.slane %v1033, 4
        %v1036 = vshll.u32 %v799, 16
        %v1038 = vrot.slane %v1036, 5
        %v1039 = vsel %vm823, %v1034, %v1038
        %v1041 = vshrl.u32 %v800, 16
        %v1043 = vrot.slane %v1041, 4
        %v1044 = vshll.u32 %v800, 16
        %v1046 = vrot.slane %v1044, 5
        %v1047 = vor.u32 %v1043, %v1046
        %v1048 = vrot.slane %v1047, 4
        %v1050 = vshll.u32 %v801, 16
        %v1052 = vrot.slane %v1050, 5
        %v1053 = vsel %vm823, %v1048, %v1052
        %v1054 = vshrl.u32 %v801, 16
        %v1056 = vrot.slane %v1054, 4
        %v1057 = vor.u32 %v1056, %v1052
        %v1058 = vrot.slane %v1057, 4
        %v1060 = vshll.u32 %v802, 16
        %v1062 = vrot.slane %v1060, 5
        %v1063 = vsel %vm823, %v1058, %v1062
        %v1065 = vshrl.u32 %v803, 16
        %v1067 = vrot.slane %v1065, 4
        %v1068 = vshll.u32 %v803, 16
        %v1070 = vrot.slane %v1068, 5
        %v1071 = vor.u32 %v1067, %v1070
        %v1072 = vrot.slane %v1071, 4
        %v1074 = vshll.u32 %v804, 16
        %v1076 = vrot.slane %v1074, 5
        %v1077 = vsel %vm823, %v1072, %v1076
        %v1078 = vshrl.u32 %v804, 16
        %v1080 = vrot.slane %v1078, 4
        %v1081 = vor.u32 %v1080, %v1076
        %v1082 = vrot.slane %v1081, 4
        %v1084 = vshll.u32 %v805, 16
        %v1086 = vrot.slane %v1084, 5
        %v1087 = vsel %vm823, %v1082, %v1086
        %v1089 = vshrl.u32 %v806, 16
        %v1091 = vrot.slane %v1089, 4
        %v1092 = vshll.u32 %v806, 16
        %v1094 = vrot.slane %v1092, 5
        %v1095 = vor.u32 %v1091, %v1094
        %v1096 = vrot.slane %v1095, 4
        %v1098 = vshll.u32 %v807, 16
        %v1100 = vrot.slane %v1098, 5
        %v1101 = vsel %vm823, %v1096, %v1100
        %v1102 = vshrl.u32 %v807, 16
        %v1104 = vrot.slane %v1102, 4
        %v1105 = vor.u32 %v1104, %v1100
        %v1106 = vrot.slane %v1105, 4
        %v1108 = vshll.u32 %v808, 16
        %v1110 = vrot.slane %v1108, 5
        %v1111 = vsel %vm823, %v1106, %v1110
        %v1113 = vshrl.u32 %v809, 16
        %v1115 = vrot.slane %v1113, 4
        %v1116 = vshll.u32 %v809, 16
        %v1118 = vrot.slane %v1116, 5
        %v1119 = vor.u32 %v1115, %v1118
        %v1120 = vrot.slane %v1119, 4
        %v1122 = vshll.u32 %v810, 16
        %v1124 = vrot.slane %v1122, 5
        %v1125 = vsel %vm823, %v1120, %v1124
        %v1126 = vshrl.u32 %v810, 16
        %v1128 = vrot.slane %v1126, 4
        %v1129 = vor.u32 %v1128, %v1124
        %v1130 = vrot.slane %v1129, 4
        %v1132 = vshll.u32 %v811, 16
        %v1134 = vrot.slane %v1132, 5
        %v1135 = vsel %vm823, %v1130, %v1134
        %v1137 = vshrl.u32 %v812, 16
        %v1139 = vrot.slane %v1137, 4
        %v1140 = vshll.u32 %v812, 16
        %v1142 = vrot.slane %v1140, 5
        %v1143 = vor.u32 %v1139, %v1142
        %v1144 = vrot.slane %v1143, 4
        %v1146 = vshll.u32 %v813, 16
        %v1148 = vrot.slane %v1146, 5
        %v1149 = vsel %vm823, %v1144, %v1148
        %v1150 = vshrl.u32 %v813, 16
        %v1152 = vrot.slane %v1150, 4
        %v1153 = vor.u32 %v1152, %v1148
        %v1154 = vrot.slane %v1153, 4
        %v1156 = vshll.u32 %v814, 16
        %v1158 = vrot.slane %v1156, 5
        %v1159 = vsel %vm823, %v1154, %v1158
        %v1161 = vshrl.u32 %v815, 16
        %v1163 = vrot.slane %v1161, 4
        %v1164 = vshll.u32 %v815, 16
        %v1166 = vrot.slane %v1164, 5
        %v1167 = vor.u32 %v1163, %v1166
        %v1168 = vrot.slane %v1167, 4
        %v1170 = vshll.u32 %v816, 16
        %v1172 = vrot.slane %v1170, 5
        %v1173 = vsel %vm823, %v1168, %v1172
        %v1174 = vshrl.u32 %v816, 16
        %v1176 = vrot.slane %v1174, 4
        %v1177 = vor.u32 %v1176, %v1172
        %v1178 = vrot.slane %v1177, 4
        %v1180 = vshll.u32 %v817, 16
        %v1182 = vrot.slane %v1180, 5
        %v1183 = vsel %vm823, %v1178, %v1182
        %v1185 = vshrl.u32 %v818, 16
        %v1187 = vrot.slane %v1185, 4
        %v1188 = vshll.u32 %v818, 16
        %v1190 = vrot.slane %v1188, 5
        %v1191 = vor.u32 %v1187, %v1190
        %v1192 = vrot.slane %v1191, 4
        %v1194 = vshll.u32 %v819, 16
        %v1196 = vrot.slane %v1194, 5
        %v1197 = vsel %vm823, %v1192, %v1196
        %v1198 = vshrl.u32 %v819, 16
        %v1200 = vrot.slane %v1198, 4
        %v1201 = vor.u32 %v1200, %v1196
        %v1202 = vrot.slane %v1201, 4
        %v1204 = vshll.u32 %v820, 16
        %v1206 = vrot.slane %v1204, 5
        %v1207 = vsel %vm823, %v1202, %v1206
        %1208 = vrot.lane.b32.xlu0 %v837, 8
        %v1209 = vpop.permute.xlu0 %1208
        %1210 = vrot.lane.b32.xlu0 %v847, 8
        %v1211 = vpop.permute.xlu0 %1210
        %1212 = vrot.lane.b32.xlu0 %v861, 8
        %v1213 = vpop.permute.xlu0 %1212
        %1214 = vrot.lane.b32.xlu0 %v871, 8
        %v1215 = vpop.permute.xlu0 %1214
        %1216 = vrot.lane.b32.xlu0 %v885, 8
        %v1217 = vpop.permute.xlu0 %1216
        %1218 = vrot.lane.b32.xlu0 %v895, 8
        %v1219 = vpop.permute.xlu0 %1218
        %1220 = vrot.lane.b32.xlu0 %v909, 8
        %v1221 = vpop.permute.xlu0 %1220
        %1222 = vrot.lane.b32.xlu0 %v919, 8
        %v1223 = vpop.permute.xlu0 %1222
        %1224 = vrot.lane.b32.xlu0 %v933, 8
        %v1225 = vpop.permute.xlu0 %1224
        %1226 = vrot.lane.b32.xlu0 %v943, 8
        %v1227 = vpop.permute.xlu0 %1226
        %1228 = vrot.lane.b32.xlu0 %v957, 8
        %v1229 = vpop.permute.xlu0 %1228
        %1230 = vrot.lane.b32.xlu0 %v967, 8
        %v1231 = vpop.permute.xlu0 %1230
        %1232 = vrot.lane.b32.xlu0 %v981, 8
        %v1233 = vpop.permute.xlu0 %1232
        %1234 = vrot.lane.b32.xlu0 %v991, 8
        %v1235 = vpop.permute.xlu0 %1234
        %1236 = vrot.lane.b32.xlu0 %v1005, 8
        %v1237 = vpop.permute.xlu0 %1236
        %1238 = vrot.lane.b32.xlu0 %v1015, 8
        %v1239 = vpop.permute.xlu0 %1238
        %1240 = vrot.lane.b32.xlu0 %v1029, 8
        %v1241 = vpop.permute.xlu0 %1240
        %1242 = vrot.lane.b32.xlu0 %v1039, 8
        %v1243 = vpop.permute.xlu0 %1242
        %1244 = vrot.lane.b32.xlu0 %v1053, 8
        %v1245 = vpop.permute.xlu0 %1244
        %1246 = vrot.lane.b32.xlu0 %v1063, 8
        %v1247 = vpop.permute.xlu0 %1246
        %1248 = vrot.lane.b32.xlu0 %v1077, 8
        %v1249 = vpop.permute.xlu0 %1248
        %1250 = vrot.lane.b32.xlu0 %v1087, 8
        %v1251 = vpop.permute.xlu0 %1250
        %1252 = vrot.lane.b32.xlu0 %v1101, 8
        %v1253 = vpop.permute.xlu0 %1252
        %1254 = vrot.lane.b32.xlu0 %v1111, 8
        %v1255 = vpop.permute.xlu0 %1254
        %1256 = vrot.lane.b32.xlu0 %v1125, 8
        %v1257 = vpop.permute.xlu0 %1256
        %1258 = vrot.lane.b32.xlu0 %v1135, 8
        %v1259 = vpop.permute.xlu0 %1258
        %1260 = vrot.lane.b32.xlu0 %v1149, 8
        %v1261 = vpop.permute.xlu0 %1260
        %1262 = vrot.lane.b32.xlu0 %v1159, 8
        %v1263 = vpop.permute.xlu0 %1262
        %1264 = vrot.lane.b32.xlu0 %v1173, 8
        %v1265 = vpop.permute.xlu0 %1264
        %1266 = vrot.lane.b32.xlu0 %v1183, 8
        %v1267 = vpop.permute.xlu0 %1266
        %1268 = vrot.lane.b32.xlu0 %v1197, 8
        %v1269 = vpop.permute.xlu0 %1268
        %1270 = vrot.lane.b32.xlu0 %v1207, 8
        %v1271 = vpop.permute.xlu0 %1270
        %vm1304 = vcmask 126016
        %1305 = vst.msk [vmem:[#allocation3] sm:$0xf] %vm1304, %v1209
        %1306 = vst.msk [vmem:[#allocation3 + $0x4] sm:$0xf] %vm1304, %v1211
        %1307 = vst.msk [vmem:[#allocation3 + $0x8] sm:$0xf] %vm1304, %v1213
        %1308 = vst.msk [vmem:[#allocation3 + $0xc] sm:$0xf] %vm1304, %v1215
        %1309 = vst.msk [vmem:[#allocation3 + $0x10] sm:$0xf] %vm1304, %v1217
        %1310 = vst.msk [vmem:[#allocation3 + $0x14] sm:$0xf] %vm1304, %v1219
        %1311 = vst.msk [vmem:[#allocation3 + $0x18] sm:$0xf] %vm1304, %v1221
        %1312 = vst.msk [vmem:[#allocation3 + $0x1c] sm:$0xf] %vm1304, %v1223
        %1313 = vst.msk [vmem:[#allocation3 + $0x20] sm:$0xf] %vm1304, %v1225
        %1314 = vst.msk [vmem:[#allocation3 + $0x24] sm:$0xf] %vm1304, %v1227
        %1315 = vst.msk [vmem:[#allocation3 + $0x28] sm:$0xf] %vm1304, %v1229
        %1316 = vst.msk [vmem:[#allocation3 + $0x2c] sm:$0xf] %vm1304, %v1231
        %1317 = vst.msk [vmem:[#allocation3 + $0x30] sm:$0xf] %vm1304, %v1233
        %1318 = vst.msk [vmem:[#allocation3 + $0x34] sm:$0xf] %vm1304, %v1235
        %1319 = vst.msk [vmem:[#allocation3 + $0x38] sm:$0xf] %vm1304, %v1237
        %1320 = vst.msk [vmem:[#allocation3 + $0x3c] sm:$0xf] %vm1304, %v1239
        %1321 = vst.msk [vmem:[#allocation3 + $0x40] sm:$0xf] %vm1304, %v1241
        %1322 = vst.msk [vmem:[#allocation3 + $0x44] sm:$0xf] %vm1304, %v1243
        %1323 = vst.msk [vmem:[#allocation3 + $0x48] sm:$0xf] %vm1304, %v1245
        %1324 = vst.msk [vmem:[#allocation3 + $0x4c] sm:$0xf] %vm1304, %v1247
        %1325 = vst.msk [vmem:[#allocation3 + $0x50] sm:$0xf] %vm1304, %v1249
        %1326 = vst.msk [vmem:[#allocation3 + $0x54] sm:$0xf] %vm1304, %v1251
        %1327 = vst.msk [vmem:[#allocation3 + $0x58] sm:$0xf] %vm1304, %v1253
        %1328 = vst.msk [vmem:[#allocation3 + $0x5c] sm:$0xf] %vm1304, %v1255
        %1329 = vst.msk [vmem:[#allocation3 + $0x60] sm:$0xf] %vm1304, %v1257
        %1330 = vst.msk [vmem:[#allocation3 + $0x64] sm:$0xf] %vm1304, %v1259
        %1331 = vst.msk [vmem:[#allocation3 + $0x68] sm:$0xf] %vm1304, %v1261
        %1332 = vst.msk [vmem:[#allocation3 + $0x6c] sm:$0xf] %vm1304, %v1263
        %1333 = vst.msk [vmem:[#allocation3 + $0x70] sm:$0xf] %vm1304, %v1265
        %1334 = vst.msk [vmem:[#allocation3 + $0x74] sm:$0xf] %vm1304, %v1267
        %1335 = vst.msk [vmem:[#allocation3 + $0x78] sm:$0xf] %vm1304, %v1269
        %1336 = vst.msk [vmem:[#allocation3 + $0x7c] sm:$0xf] %vm1304, %v1271
        %v1337 = vld [vmem:[#allocation2] sm:$0xe]
        %v1338 = vld [vmem:[#allocation2 + $0x4] sm:$0xf]
        %v1339 = vld [vmem:[#allocation2 + $0x8] sm:$0x1]
        %v1340 = vld [vmem:[#allocation2 + $0xc] sm:$0xe]
        %v1341 = vld [vmem:[#allocation2 + $0x10] sm:$0xf]
        %v1342 = vld [vmem:[#allocation2 + $0x14] sm:$0x1]
        %v1343 = vld [vmem:[#allocation2 + $0x18] sm:$0xe]
        %v1344 = vld [vmem:[#allocation2 + $0x1c] sm:$0xf]
        %v1345 = vld [vmem:[#allocation2 + $0x20] sm:$0x1]
        %v1346 = vld [vmem:[#allocation2 + $0x24] sm:$0xe]
        %v1347 = vld [vmem:[#allocation2 + $0x28] sm:$0xf]
        %v1348 = vld [vmem:[#allocation2 + $0x2c] sm:$0x1]
        %v1349 = vld [vmem:[#allocation2 + $0x30] sm:$0xe]
        %v1350 = vld [vmem:[#allocation2 + $0x34] sm:$0xf]
        %v1351 = vld [vmem:[#allocation2 + $0x38] sm:$0x1]
        %v1352 = vld [vmem:[#allocation2 + $0x3c] sm:$0xe]
        %v1353 = vld [vmem:[#allocation2 + $0x40] sm:$0xf]
        %v1354 = vld [vmem:[#allocation2 + $0x44] sm:$0x1]
        %v1355 = vld [vmem:[#allocation2 + $0x48] sm:$0xe]
        %v1356 = vld [vmem:[#allocation2 + $0x4c] sm:$0xf]
        %v1357 = vld [vmem:[#allocation2 + $0x50] sm:$0x1]
        %v1358 = vld [vmem:[#allocation2 + $0x54] sm:$0xe]
        %v1359 = vld [vmem:[#allocation2 + $0x58] sm:$0xf]
        %v1360 = vld [vmem:[#allocation2 + $0x5c] sm:$0x1]
        %v1361 = vld [vmem:[#allocation2 + $0x60] sm:$0xe]
        %v1362 = vld [vmem:[#allocation2 + $0x64] sm:$0xf]
        %v1363 = vld [vmem:[#allocation2 + $0x68] sm:$0x1]
        %v1364 = vld [vmem:[#allocation2 + $0x6c] sm:$0xe]
        %v1365 = vld [vmem:[#allocation2 + $0x70] sm:$0xf]
        %v1366 = vld [vmem:[#allocation2 + $0x74] sm:$0x1]
        %v1367 = vld [vmem:[#allocation2 + $0x78] sm:$0xe]
        %v1368 = vld [vmem:[#allocation2 + $0x7c] sm:$0xf]
        %v1369 = vld [vmem:[#allocation2 + $0x80] sm:$0x1]
        %v1370 = vld [vmem:[#allocation2 + $0x84] sm:$0xe]
        %v1371 = vld [vmem:[#allocation2 + $0x88] sm:$0xf]
        %v1372 = vld [vmem:[#allocation2 + $0x8c] sm:$0x1]
        %v1373 = vld [vmem:[#allocation2 + $0x90] sm:$0xe]
        %v1374 = vld [vmem:[#allocation2 + $0x94] sm:$0xf]
        %v1375 = vld [vmem:[#allocation2 + $0x98] sm:$0x1]
        %v1376 = vld [vmem:[#allocation2 + $0x9c] sm:$0xe]
        %v1377 = vld [vmem:[#allocation2 + $0xa0] sm:$0xf]
        %v1378 = vld [vmem:[#allocation2 + $0xa4] sm:$0x1]
        %v1379 = vld [vmem:[#allocation2 + $0xa8] sm:$0xe]
        %v1380 = vld [vmem:[#allocation2 + $0xac] sm:$0xf]
        %v1381 = vld [vmem:[#allocation2 + $0xb0] sm:$0x1]
        %v1382 = vld [vmem:[#allocation2 + $0xb4] sm:$0xe]
        %v1383 = vld [vmem:[#allocation2 + $0xb8] sm:$0xf]
        %v1384 = vld [vmem:[#allocation2 + $0xbc] sm:$0x1]
        %vm1433 = vcmask 1042432
        %vm1434 = vcmask 1046532
        %vm1435 = vmor %vm1433, %vm1434
        %v1436 = vrot.slane %v1337, 5
        %v1437 = vrot.slane %v1436, 4
        %v1438 = vrot.slane %v1338, 5
        %v1439 = vsel %vm1435, %v1437, %v1438
        %v1440 = vrot.slane %v1438, 4
        %v1441 = vrot.slane %v1339, 5
        %v1442 = vsel %vm1435, %v1440, %v1441
        %v1443 = vrot.slane %v1340, 5
        %v1444 = vrot.slane %v1443, 4
        %v1445 = vrot.slane %v1341, 5
        %v1446 = vsel %vm1435, %v1444, %v1445
        %v1447 = vrot.slane %v1445, 4
        %v1448 = vrot.slane %v1342, 5
        %v1449 = vsel %vm1435, %v1447, %v1448
        %v1450 = vrot.slane %v1343, 5
        %v1451 = vrot.slane %v1450, 4
        %v1452 = vrot.slane %v1344, 5
        %v1453 = vsel %vm1435, %v1451, %v1452
        %v1454 = vrot.slane %v1452, 4
        %v1455 = vrot.slane %v1345, 5
        %v1456 = vsel %vm1435, %v1454, %v1455
        %v1457 = vrot.slane %v1346, 5
        %v1458 = vrot.slane %v1457, 4
        %v1459 = vrot.slane %v1347, 5
        %v1460 = vsel %vm1435, %v1458, %v1459
        %v1461 = vrot.slane %v1459, 4
        %v1462 = vrot.slane %v1348, 5
        %v1463 = vsel %vm1435, %v1461, %v1462
        %v1464 = vrot.slane %v1349, 5
        %v1465 = vrot.slane %v1464, 4
        %v1466 = vrot.slane %v1350, 5
        %v1467 = vsel %vm1435, %v1465, %v1466
        %v1468 = vrot.slane %v1466, 4
        %v1469 = vrot.slane %v1351, 5
        %v1470 = vsel %vm1435, %v1468, %v1469
        %v1471 = vrot.slane %v1352, 5
        %v1472 = vrot.slane %v1471, 4
        %v1473 = vrot.slane %v1353, 5
        %v1474 = vsel %vm1435, %v1472, %v1473
        %v1475 = vrot.slane %v1473, 4
        %v1476 = vrot.slane %v1354, 5
        %v1477 = vsel %vm1435, %v1475, %v1476
        %v1478 = vrot.slane %v1355, 5
        %v1479 = vrot.slane %v1478, 4
        %v1480 = vrot.slane %v1356, 5
        %v1481 = vsel %vm1435, %v1479, %v1480
        %v1482 = vrot.slane %v1480, 4
        %v1483 = vrot.slane %v1357, 5
        %v1484 = vsel %vm1435, %v1482, %v1483
        %v1485 = vrot.slane %v1358, 5
        %v1486 = vrot.slane %v1485, 4
        %v1487 = vrot.slane %v1359, 5
        %v1488 = vsel %vm1435, %v1486, %v1487
        %v1489 = vrot.slane %v1487, 4
        %v1490 = vrot.slane %v1360, 5
        %v1491 = vsel %vm1435, %v1489, %v1490
        %v1492 = vrot.slane %v1361, 5
        %v1493 = vrot.slane %v1492, 4
        %v1494 = vrot.slane %v1362, 5
        %v1495 = vsel %vm1435, %v1493, %v1494
        %v1496 = vrot.slane %v1494, 4
        %v1497 = vrot.slane %v1363, 5
        %v1498 = vsel %vm1435, %v1496, %v1497
        %v1499 = vrot.slane %v1364, 5
        %v1500 = vrot.slane %v1499, 4
        %v1501 = vrot.slane %v1365, 5
        %v1502 = vsel %vm1435, %v1500, %v1501
        %v1503 = vrot.slane %v1501, 4
        %v1504 = vrot.slane %v1366, 5
        %v1505 = vsel %vm1435, %v1503, %v1504
        %v1506 = vrot.slane %v1367, 5
        %v1507 = vrot.slane %v1506, 4
        %v1508 = vrot.slane %v1368, 5
        %v1509 = vsel %vm1435, %v1507, %v1508
        %v1510 = vrot.slane %v1508, 4
        %v1511 = vrot.slane %v1369, 5
        %v1512 = vsel %vm1435, %v1510, %v1511
        %v1513 = vrot.slane %v1370, 5
        %v1514 = vrot.slane %v1513, 4
        %v1515 = vrot.slane %v1371, 5
        %v1516 = vsel %vm1435, %v1514, %v1515
        %v1517 = vrot.slane %v1515, 4
        %v1518 = vrot.slane %v1372, 5
        %v1519 = vsel %vm1435, %v1517, %v1518
        %v1520 = vrot.slane %v1373, 5
        %v1521 = vrot.slane %v1520, 4
        %v1522 = vrot.slane %v1374, 5
        %v1523 = vsel %vm1435, %v1521, %v1522
        %v1524 = vrot.slane %v1522, 4
        %v1525 = vrot.slane %v1375, 5
        %v1526 = vsel %vm1435, %v1524, %v1525
        %v1527 = vrot.slane %v1376, 5
        %v1528 = vrot.slane %v1527, 4
        %v1529 = vrot.slane %v1377, 5
        %v1530 = vsel %vm1435, %v1528, %v1529
        %v1531 = vrot.slane %v1529, 4
        %v1532 = vrot.slane %v1378, 5
        %v1533 = vsel %vm1435, %v1531, %v1532
        %v1534 = vrot.slane %v1379, 5
        %v1535 = vrot.slane %v1534, 4
        %v1536 = vrot.slane %v1380, 5
        %v1537 = vsel %vm1435, %v1535, %v1536
        %v1538 = vrot.slane %v1536, 4
        %v1539 = vrot.slane %v1381, 5
        %v1540 = vsel %vm1435, %v1538, %v1539
        %v1541 = vrot.slane %v1382, 5
        %v1542 = vrot.slane %v1541, 4
        %v1543 = vrot.slane %v1383, 5
        %v1544 = vsel %vm1435, %v1542, %v1543
        %v1545 = vrot.slane %v1543, 4
        %v1546 = vrot.slane %v1384, 5
        %v1547 = vsel %vm1435, %v1545, %v1546
        %1548 = vrot.lane.b32.xlu0 %v1439, 16
        %v1549 = vpop.permute.xlu0 %1548
        %1550 = vrot.lane.b32.xlu0 %v1442, 16
        %v1551 = vpop.permute.xlu0 %1550
        %1552 = vrot.lane.b32.xlu0 %v1446, 16
        %v1553 = vpop.permute.xlu0 %1552
        %1554 = vrot.lane.b32.xlu0 %v1449, 16
        %v1555 = vpop.permute.xlu0 %1554
        %1556 = vrot.lane.b32.xlu0 %v1453, 16
        %v1557 = vpop.permute.xlu0 %1556
        %1558 = vrot.lane.b32.xlu0 %v1456, 16
        %v1559 = vpop.permute.xlu0 %1558
        %1560 = vrot.lane.b32.xlu0 %v1460, 16
        %v1561 = vpop.permute.xlu0 %1560
        %1562 = vrot.lane.b32.xlu0 %v1463, 16
        %v1563 = vpop.permute.xlu0 %1562
        %1564 = vrot.lane.b32.xlu0 %v1467, 16
        %v1565 = vpop.permute.xlu0 %1564
        %1566 = vrot.lane.b32.xlu0 %v1470, 16
        %v1567 = vpop.permute.xlu0 %1566
        %1568 = vrot.lane.b32.xlu0 %v1474, 16
        %v1569 = vpop.permute.xlu0 %1568
        %1570 = vrot.lane.b32.xlu0 %v1477, 16
        %v1571 = vpop.permute.xlu0 %1570
        %1572 = vrot.lane.b32.xlu0 %v1481, 16
        %v1573 = vpop.permute.xlu0 %1572
        %1574 = vrot.lane.b32.xlu0 %v1484, 16
        %v1575 = vpop.permute.xlu0 %1574
        %1576 = vrot.lane.b32.xlu0 %v1488, 16
        %v1577 = vpop.permute.xlu0 %1576
        %1578 = vrot.lane.b32.xlu0 %v1491, 16
        %v1579 = vpop.permute.xlu0 %1578
        %1580 = vrot.lane.b32.xlu0 %v1495, 16
        %v1581 = vpop.permute.xlu0 %1580
        %1582 = vrot.lane.b32.xlu0 %v1498, 16
        %v1583 = vpop.permute.xlu0 %1582
        %1584 = vrot.lane.b32.xlu0 %v1502, 16
        %v1585 = vpop.permute.xlu0 %1584
        %1586 = vrot.lane.b32.xlu0 %v1505, 16
        %v1587 = vpop.permute.xlu0 %1586
        %1588 = vrot.lane.b32.xlu0 %v1509, 16
        %v1589 = vpop.permute.xlu0 %1588
        %1590 = vrot.lane.b32.xlu0 %v1512, 16
        %v1591 = vpop.permute.xlu0 %1590
        %1592 = vrot.lane.b32.xlu0 %v1516, 16
        %v1593 = vpop.permute.xlu0 %1592
        %1594 = vrot.lane.b32.xlu0 %v1519, 16
        %v1595 = vpop.permute.xlu0 %1594
        %1596 = vrot.lane.b32.xlu0 %v1523, 16
        %v1597 = vpop.permute.xlu0 %1596
        %1598 = vrot.lane.b32.xlu0 %v1526, 16
        %v1599 = vpop.permute.xlu0 %1598
        %1600 = vrot.lane.b32.xlu0 %v1530, 16
        %v1601 = vpop.permute.xlu0 %1600
        %1602 = vrot.lane.b32.xlu0 %v1533, 16
        %v1603 = vpop.permute.xlu0 %1602
        %1604 = vrot.lane.b32.xlu0 %v1537, 16
        %v1605 = vpop.permute.xlu0 %1604
        %1606 = vrot.lane.b32.xlu0 %v1540, 16
        %v1607 = vpop.permute.xlu0 %1606
        %1608 = vrot.lane.b32.xlu0 %v1544, 16
        %v1609 = vpop.permute.xlu0 %1608
        %1610 = vrot.lane.b32.xlu0 %v1547, 16
        %v1611 = vpop.permute.xlu0 %1610
        %vm1644 = vcmask 191616
        %1645 = vst.msk [vmem:[#allocation3] sm:$0xf] %vm1644, %v1549
        %1646 = vst.msk [vmem:[#allocation3 + $0x4] sm:$0xf] %vm1644, %v1551
        %1647 = vst.msk [vmem:[#allocation3 + $0x8] sm:$0xf] %vm1644, %v1553
        %1648 = vst.msk [vmem:[#allocation3 + $0xc] sm:$0xf] %vm1644, %v1555
        %1649 = vst.msk [vmem:[#allocation3 + $0x10] sm:$0xf] %vm1644, %v1557
        %1650 = vst.msk [vmem:[#allocation3 + $0x14] sm:$0xf] %vm1644, %v1559
        %1651 = vst.msk [vmem:[#allocation3 + $0x18] sm:$0xf] %vm1644, %v1561
        %1652 = vst.msk [vmem:[#allocation3 + $0x1c] sm:$0xf] %vm1644, %v1563
        %1653 = vst.msk [vmem:[#allocation3 + $0x20] sm:$0xf] %vm1644, %v1565
        %1654 = vst.msk [vmem:[#allocation3 + $0x24] sm:$0xf] %vm1644, %v1567
        %1655 = vst.msk [vmem:[#allocation3 + $0x28] sm:$0xf] %vm1644, %v1569
        %1656 = vst.msk [vmem:[#allocation3 + $0x2c] sm:$0xf] %vm1644, %v1571
        %1657 = vst.msk [vmem:[#allocation3 + $0x30] sm:$0xf] %vm1644, %v1573
        %1658 = vst.msk [vmem:[#allocation3 + $0x34] sm:$0xf] %vm1644, %v1575
        %1659 = vst.msk [vmem:[#allocation3 + $0x38] sm:$0xf] %vm1644, %v1577
        %1660 = vst.msk [vmem:[#allocation3 + $0x3c] sm:$0xf] %vm1644, %v1579
        %1661 = vst.msk [vmem:[#allocation3 + $0x40] sm:$0xf] %vm1644, %v1581
        %1662 = vst.msk [vmem:[#allocation3 + $0x44] sm:$0xf] %vm1644, %v1583
        %1663 = vst.msk [vmem:[#allocation3 + $0x48] sm:$0xf] %vm1644, %v1585
        %1664 = vst.msk [vmem:[#allocation3 + $0x4c] sm:$0xf] %vm1644, %v1587
        %1665 = vst.msk [vmem:[#allocation3 + $0x50] sm:$0xf] %vm1644, %v1589
        %1666 = vst.msk [vmem:[#allocation3 + $0x54] sm:$0xf] %vm1644, %v1591
        %1667 = vst.msk [vmem:[#allocation3 + $0x58] sm:$0xf] %vm1644, %v1593
        %1668 = vst.msk [vmem:[#allocation3 + $0x5c] sm:$0xf] %vm1644, %v1595
        %1669 = vst.msk [vmem:[#allocation3 + $0x60] sm:$0xf] %vm1644, %v1597
        %1670 = vst.msk [vmem:[#allocation3 + $0x64] sm:$0xf] %vm1644, %v1599
        %1671 = vst.msk [vmem:[#allocation3 + $0x68] sm:$0xf] %vm1644, %v1601
        %1672 = vst.msk [vmem:[#allocation3 + $0x6c] sm:$0xf] %vm1644, %v1603
        %1673 = vst.msk [vmem:[#allocation3 + $0x70] sm:$0xf] %vm1644, %v1605
        %1674 = vst.msk [vmem:[#allocation3 + $0x74] sm:$0xf] %vm1644, %v1607
        %1675 = vst.msk [vmem:[#allocation3 + $0x78] sm:$0xf] %vm1644, %v1609
        %1676 = vst.msk [vmem:[#allocation3 + $0x7c] sm:$0xf] %vm1644, %v1611
        %v1677 = vld [vmem:[%s580] sm:$0xf]
        %v1678 = vld [vmem:[%s580 + $0x4] sm:$0xf]
        %v1679 = vld [vmem:[%s580 + $0xc] sm:$0xf]
        %v1680 = vld [vmem:[%s580 + $0x10] sm:$0xf]
        %v1681 = vld [vmem:[%s580 + $0x18] sm:$0xf]
        %v1682 = vld [vmem:[%s580 + $0x1c] sm:$0xf]
        %v1683 = vld [vmem:[%s580 + $0x24] sm:$0xf]
        %v1684 = vld [vmem:[%s580 + $0x28] sm:$0xf]
        %v1685 = vld [vmem:[%s580 + $0x30] sm:$0xf]
        %v1686 = vld [vmem:[%s580 + $0x34] sm:$0xf]
        %v1687 = vld [vmem:[%s580 + $0x3c] sm:$0xf]
        %v1688 = vld [vmem:[%s580 + $0x40] sm:$0xf]
        %v1689 = vld [vmem:[%s580 + $0x48] sm:$0xf]
        %v1690 = vld [vmem:[%s580 + $0x4c] sm:$0xf]
        %v1691 = vld [vmem:[%s580 + $0x54] sm:$0xf]
        %v1692 = vld [vmem:[%s580 + $0x58] sm:$0xf]
        %v1693 = vld [vmem:[%s580 + $0x60] sm:$0xf]
        %v1694 = vld [vmem:[%s580 + $0x64] sm:$0xf]
        %v1695 = vld [vmem:[%s580 + $0x6c] sm:$0xf]
        %v1696 = vld [vmem:[%s580 + $0x70] sm:$0xf]
        %v1697 = vld [vmem:[%s580 + $0x78] sm:$0xf]
        %v1698 = vld [vmem:[%s580 + $0x7c] sm:$0xf]
        %v1699 = vld [vmem:[%s580 + $0x84] sm:$0xf]
        %v1700 = vld [vmem:[%s580 + $0x88] sm:$0xf]
        %v1701 = vld [vmem:[%s580 + $0x90] sm:$0xf]
        %v1702 = vld [vmem:[%s580 + $0x94] sm:$0xf]
        %v1703 = vld [vmem:[%s580 + $0x9c] sm:$0xf]
        %v1704 = vld [vmem:[%s580 + $0xa0] sm:$0xf]
        %v1705 = vld [vmem:[%s580 + $0xa8] sm:$0xf]
        %v1706 = vld [vmem:[%s580 + $0xac] sm:$0xf]
        %v1707 = vld [vmem:[%s580 + $0xb4] sm:$0xf]
        %v1708 = vld [vmem:[%s580 + $0xb8] sm:$0xf]
        %1741 = vrot.lane.b32.xlu0 %v1677, 24
        %v1742 = vpop.permute.xlu0 %1741
        %1743 = vrot.lane.b32.xlu0 %v1678, 24
        %v1744 = vpop.permute.xlu0 %1743
        %1745 = vrot.lane.b32.xlu0 %v1679, 24
        %v1746 = vpop.permute.xlu0 %1745
        %1747 = vrot.lane.b32.xlu0 %v1680, 24
        %v1748 = vpop.permute.xlu0 %1747
        %1749 = vrot.lane.b32.xlu0 %v1681, 24
        %v1750 = vpop.permute.xlu0 %1749
        %1751 = vrot.lane.b32.xlu0 %v1682, 24
        %v1752 = vpop.permute.xlu0 %1751
        %1753 = vrot.lane.b32.xlu0 %v1683, 24
        %v1754 = vpop.permute.xlu0 %1753
        %1755 = vrot.lane.b32.xlu0 %v1684, 24
        %v1756 = vpop.permute.xlu0 %1755
        %1757 = vrot.lane.b32.xlu0 %v1685, 24
        %v1758 = vpop.permute.xlu0 %1757
        %1759 = vrot.lane.b32.xlu0 %v1686, 24
        %v1760 = vpop.permute.xlu0 %1759
        %1761 = vrot.lane.b32.xlu0 %v1687, 24
        %v1762 = vpop.permute.xlu0 %1761
        %1763 = vrot.lane.b32.xlu0 %v1688, 24
        %v1764 = vpop.permute.xlu0 %1763
        %1765 = vrot.lane.b32.xlu0 %v1689, 24
        %v1766 = vpop.permute.xlu0 %1765
        %1767 = vrot.lane.b32.xlu0 %v1690, 24
        %v1768 = vpop.permute.xlu0 %1767
        %1769 = vrot.lane.b32.xlu0 %v1691, 24
        %v1770 = vpop.permute.xlu0 %1769
        %1771 = vrot.lane.b32.xlu0 %v1692, 24
        %v1772 = vpop.permute.xlu0 %1771
        %1773 = vrot.lane.b32.xlu0 %v1693, 24
        %v1774 = vpop.permute.xlu0 %1773
        %1775 = vrot.lane.b32.xlu0 %v1694, 24
        %v1776 = vpop.permute.xlu0 %1775
        %1777 = vrot.lane.b32.xlu0 %v1695, 24
        %v1778 = vpop.permute.xlu0 %1777
        %1779 = vrot.lane.b32.xlu0 %v1696, 24
        %v1780 = vpop.permute.xlu0 %1779
        %1781 = vrot.lane.b32.xlu0 %v1697, 24
        %v1782 = vpop.permute.xlu0 %1781
        %1783 = vrot.lane.b32.xlu0 %v1698, 24
        %v1784 = vpop.permute.xlu0 %1783
        %1785 = vrot.lane.b32.xlu0 %v1699, 24
        %v1786 = vpop.permute.xlu0 %1785
        %1787 = vrot.lane.b32.xlu0 %v1700, 24
        %v1788 = vpop.permute.xlu0 %1787
        %1789 = vrot.lane.b32.xlu0 %v1701, 24
        %v1790 = vpop.permute.xlu0 %1789
        %1791 = vrot.lane.b32.xlu0 %v1702, 24
        %v1792 = vpop.permute.xlu0 %1791
        %1793 = vrot.lane.b32.xlu0 %v1703, 24
        %v1794 = vpop.permute.xlu0 %1793
        %1795 = vrot.lane.b32.xlu0 %v1704, 24
        %v1796 = vpop.permute.xlu0 %1795
        %1797 = vrot.lane.b32.xlu0 %v1705, 24
        %v1798 = vpop.permute.xlu0 %1797
        %1799 = vrot.lane.b32.xlu0 %v1706, 24
        %v1800 = vpop.permute.xlu0 %1799
        %1801 = vrot.lane.b32.xlu0 %v1707, 24
        %v1802 = vpop.permute.xlu0 %1801
        %1803 = vrot.lane.b32.xlu0 %v1708, 24
        %v1804 = vpop.permute.xlu0 %1803
        %vm1837 = vcmask 257216
        %1838 = vst.msk [vmem:[#allocation3] sm:$0xf] %vm1837, %v1742
        %1839 = vst.msk [vmem:[#allocation3 + $0x4] sm:$0xf] %vm1837, %v1744
        %1840 = vst.msk [vmem:[#allocation3 + $0x8] sm:$0xf] %vm1837, %v1746
        %1841 = vst.msk [vmem:[#allocation3 + $0xc] sm:$0xf] %vm1837, %v1748
        %1842 = vst.msk [vmem:[#allocation3 + $0x10] sm:$0xf] %vm1837, %v1750
        %1843 = vst.msk [vmem:[#allocation3 + $0x14] sm:$0xf] %vm1837, %v1752
        %1844 = vst.msk [vmem:[#allocation3 + $0x18] sm:$0xf] %vm1837, %v1754
        %1845 = vst.msk [vmem:[#allocation3 + $0x1c] sm:$0xf] %vm1837, %v1756
        %1846 = vst.msk [vmem:[#allocation3 + $0x20] sm:$0xf] %vm1837, %v1758
        %1847 = vst.msk [vmem:[#allocation3 + $0x24] sm:$0xf] %vm1837, %v1760
        %1848 = vst.msk [vmem:[#allocation3 + $0x28] sm:$0xf] %vm1837, %v1762
        %1849 = vst.msk [vmem:[#allocation3 + $0x2c] sm:$0xf] %vm1837, %v1764
        %1850 = vst.msk [vmem:[#allocation3 + $0x30] sm:$0xf] %vm1837, %v1766
        %1851 = vst.msk [vmem:[#allocation3 + $0x34] sm:$0xf] %vm1837, %v1768
        %1852 = vst.msk [vmem:[#allocation3 + $0x38] sm:$0xf] %vm1837, %v1770
        %1853 = vst.msk [vmem:[#allocation3 + $0x3c] sm:$0xf] %vm1837, %v1772
        %1854 = vst.msk [vmem:[#allocation3 + $0x40] sm:$0xf] %vm1837, %v1774
        %1855 = vst.msk [vmem:[#allocation3 + $0x44] sm:$0xf] %vm1837, %v1776
        %1856 = vst.msk [vmem:[#allocation3 + $0x48] sm:$0xf] %vm1837, %v1778
        %1857 = vst.msk [vmem:[#allocation3 + $0x4c] sm:$0xf] %vm1837, %v1780
        %1858 = vst.msk [vmem:[#allocation3 + $0x50] sm:$0xf] %vm1837, %v1782
        %1859 = vst.msk [vmem:[#allocation3 + $0x54] sm:$0xf] %vm1837, %v1784
        %1860 = vst.msk [vmem:[#allocation3 + $0x58] sm:$0xf] %vm1837, %v1786
        %1861 = vst.msk [vmem:[#allocation3 + $0x5c] sm:$0xf] %vm1837, %v1788
        %1862 = vst.msk [vmem:[#allocation3 + $0x60] sm:$0xf] %vm1837, %v1790
        %1863 = vst.msk [vmem:[#allocation3 + $0x64] sm:$0xf] %vm1837, %v1792
        %1864 = vst.msk [vmem:[#allocation3 + $0x68] sm:$0xf] %vm1837, %v1794
        %1865 = vst.msk [vmem:[#allocation3 + $0x6c] sm:$0xf] %vm1837, %v1796
        %1866 = vst.msk [vmem:[#allocation3 + $0x70] sm:$0xf] %vm1837, %v1798
        %1867 = vst.msk [vmem:[#allocation3 + $0x74] sm:$0xf] %vm1837, %v1800
        %1868 = vst.msk [vmem:[#allocation3 + $0x78] sm:$0xf] %vm1837, %v1802
        %1869 = vst.msk [vmem:[#allocation3 + $0x7c] sm:$0xf] %vm1837, %v1804
        %v1870 = vld [vmem:[%s580] sm:$0xf]
        %v1871 = vld [vmem:[%s580 + $0x4] sm:$0xf]
        %v1872 = vld [vmem:[%s580 + $0x8] sm:$0x1]
        %v1873 = vld [vmem:[%s580 + $0xc] sm:$0xf]
        %v1874 = vld [vmem:[%s580 + $0x10] sm:$0xf]
        %v1875 = vld [vmem:[%s580 + $0x14] sm:$0x1]
        %v1876 = vld [vmem:[%s580 + $0x18] sm:$0xf]
        %v1877 = vld [vmem:[%s580 + $0x1c] sm:$0xf]
        %v1878 = vld [vmem:[%s580 + $0x20] sm:$0x1]
        %v1879 = vld [vmem:[%s580 + $0x24] sm:$0xf]
        %v1880 = vld [vmem:[%s580 + $0x28] sm:$0xf]
        %v1881 = vld [vmem:[%s580 + $0x2c] sm:$0x1]
        %v1882 = vld [vmem:[%s580 + $0x30] sm:$0xf]
        %v1883 = vld [vmem:[%s580 + $0x34] sm:$0xf]
        %v1884 = vld [vmem:[%s580 + $0x38] sm:$0x1]
        %v1885 = vld [vmem:[%s580 + $0x3c] sm:$0xf]
        %v1886 = vld [vmem:[%s580 + $0x40] sm:$0xf]
        %v1887 = vld [vmem:[%s580 + $0x44] sm:$0x1]
        %v1888 = vld [vmem:[%s580 + $0x48] sm:$0xf]
        %v1889 = vld [vmem:[%s580 + $0x4c] sm:$0xf]
        %v1890 = vld [vmem:[%s580 + $0x50] sm:$0x1]
        %v1891 = vld [vmem:[%s580 + $0x54] sm:$0xf]
        %v1892 = vld [vmem:[%s580 + $0x58] sm:$0xf]
        %v1893 = vld [vmem:[%s580 + $0x5c] sm:$0x1]
        %v1894 = vld [vmem:[%s580 + $0x60] sm:$0xf]
        %v1895 = vld [vmem:[%s580 + $0x64] sm:$0xf]
        %v1896 = vld [vmem:[%s580 + $0x68] sm:$0x1]
        %v1897 = vld [vmem:[%s580 + $0x6c] sm:$0xf]
        %v1898 = vld [vmem:[%s580 + $0x70] sm:$0xf]
        %v1899 = vld [vmem:[%s580 + $0x74] sm:$0x1]
        %v1900 = vld [vmem:[%s580 + $0x78] sm:$0xf]
        %v1901 = vld [vmem:[%s580 + $0x7c] sm:$0xf]
        %v1902 = vld [vmem:[%s580 + $0x80] sm:$0x1]
        %v1903 = vld [vmem:[%s580 + $0x84] sm:$0xf]
        %v1904 = vld [vmem:[%s580 + $0x88] sm:$0xf]
        %v1905 = vld [vmem:[%s580 + $0x8c] sm:$0x1]
        %v1906 = vld [vmem:[%s580 + $0x90] sm:$0xf]
        %v1907 = vld [vmem:[%s580 + $0x94] sm:$0xf]
        %v1908 = vld [vmem:[%s580 + $0x98] sm:$0x1]
        %v1909 = vld [vmem:[%s580 + $0x9c] sm:$0xf]
        %v1910 = vld [vmem:[%s580 + $0xa0] sm:$0xf]
        %v1911 = vld [vmem:[%s580 + $0xa4] sm:$0x1]
        %v1912 = vld [vmem:[%s580 + $0xa8] sm:$0xf]
        %v1913 = vld [vmem:[%s580 + $0xac] sm:$0xf]
        %v1914 = vld [vmem:[%s580 + $0xb0] sm:$0x1]
        %v1915 = vld [vmem:[%s580 + $0xb4] sm:$0xf]
        %v1916 = vld [vmem:[%s580 + $0xb8] sm:$0xf]
        %v1917 = vld [vmem:[%s580 + $0xbc] sm:$0x1]
        %v1919 = vshrl.u32 %v1870, 16
        %v1921 = vrot.slane %v1919, 4
        %v1922 = vshll.u32 %v1870, 16
        %v1924 = vrot.slane %v1922, 5
        %v1925 = vor.u32 %v1921, %v1924
        %v1926 = vrot.slane %v1925, 4
        %v1928 = vshll.u32 %v1871, 16
        %v1930 = vrot.slane %v1928, 5
        %v1931 = vsel %vm823, %v1926, %v1930
        %v1932 = vshrl.u32 %v1871, 16
        %v1934 = vrot.slane %v1932, 4
        %v1935 = vor.u32 %v1934, %v1930
        %v1936 = vrot.slane %v1935, 4
        %v1938 = vshll.u32 %v1872, 16
        %v1940 = vrot.slane %v1938, 5
        %v1941 = vsel %vm823, %v1936, %v1940
        %v1943 = vshrl.u32 %v1873, 16
        %v1945 = vrot.slane %v1943, 4
        %v1946 = vshll.u32 %v1873, 16
        %v1948 = vrot.slane %v1946, 5
        %v1949 = vor.u32 %v1945, %v1948
        %v1950 = vrot.slane %v1949, 4
        %v1952 = vshll.u32 %v1874, 16
        %v1954 = vrot.slane %v1952, 5
        %v1955 = vsel %vm823, %v1950, %v1954
        %v1956 = vshrl.u32 %v1874, 16
        %v1958 = vrot.slane %v1956, 4
        %v1959 = vor.u32 %v1958, %v1954
        %v1960 = vrot.slane %v1959, 4
        %v1962 = vshll.u32 %v1875, 16
        %v1964 = vrot.slane %v1962, 5
        %v1965 = vsel %vm823, %v1960, %v1964
        %v1967 = vshrl.u32 %v1876, 16
        %v1969 = vrot.slane %v1967, 4
        %v1970 = vshll.u32 %v1876, 16
        %v1972 = vrot.slane %v1970, 5
        %v1973 = vor.u32 %v1969, %v1972
        %v1974 = vrot.slane %v1973, 4
        %v1976 = vshll.u32 %v1877, 16
        %v1978 = vrot.slane %v1976, 5
        %v1979 = vsel %vm823, %v1974, %v1978
        %v1980 = vshrl.u32 %v1877, 16
        %v1982 = vrot.slane %v1980, 4
        %v1983 = vor.u32 %v1982, %v1978
        %v1984 = vrot.slane %v1983, 4
        %v1986 = vshll.u32 %v1878, 16
        %v1988 = vrot.slane %v1986, 5
        %v1989 = vsel %vm823, %v1984, %v1988
        %v1991 = vshrl.u32 %v1879, 16
        %v1993 = vrot.slane %v1991, 4
        %v1994 = vshll.u32 %v1879, 16
        %v1996 = vrot.slane %v1994, 5
        %v1997 = vor.u32 %v1993, %v1996
        %v1998 = vrot.slane %v1997, 4
        %v2000 = vshll.u32 %v1880, 16
        %v2002 = vrot.slane %v2000, 5
        %v2003 = vsel %vm823, %v1998, %v2002
        %v2004 = vshrl.u32 %v1880, 16
        %v2006 = vrot.slane %v2004, 4
        %v2007 = vor.u32 %v2006, %v2002
        %v2008 = vrot.slane %v2007, 4
        %v2010 = vshll.u32 %v1881, 16
        %v2012 = vrot.slane %v2010, 5
        %v2013 = vsel %vm823, %v2008, %v2012
        %v2015 = vshrl.u32 %v1882, 16
        %v2017 = vrot.slane %v2015, 4
        %v2018 = vshll.u32 %v1882, 16
        %v2020 = vrot.slane %v2018, 5
        %v2021 = vor.u32 %v2017, %v2020
        %v2022 = vrot.slane %v2021, 4
        %v2024 = vshll.u32 %v1883, 16
        %v2026 = vrot.slane %v2024, 5
        %v2027 = vsel %vm823, %v2022, %v2026
        %v2028 = vshrl.u32 %v1883, 16
        %v2030 = vrot.slane %v2028, 4
        %v2031 = vor.u32 %v2030, %v2026
        %v2032 = vrot.slane %v2031, 4
        %v2034 = vshll.u32 %v1884, 16
        %v2036 = vrot.slane %v2034, 5
        %v2037 = vsel %vm823, %v2032, %v2036
        %v2039 = vshrl.u32 %v1885, 16
        %v2041 = vrot.slane %v2039, 4
        %v2042 = vshll.u32 %v1885, 16
        %v2044 = vrot.slane %v2042, 5
        %v2045 = vor.u32 %v2041, %v2044
        %v2046 = vrot.slane %v2045, 4
        %v2048 = vshll.u32 %v1886, 16
        %v2050 = vrot.slane %v2048, 5
        %v2051 = vsel %vm823, %v2046, %v2050
        %v2052 = vshrl.u32 %v1886, 16
        %v2054 = vrot.slane %v2052, 4
        %v2055 = vor.u32 %v2054, %v2050
        %v2056 = vrot.slane %v2055, 4
        %v2058 = vshll.u32 %v1887, 16
        %v2060 = vrot.slane %v2058, 5
        %v2061 = vsel %vm823, %v2056, %v2060
        %v2063 = vshrl.u32 %v1888, 16
        %v2065 = vrot.slane %v2063, 4
        %v2066 = vshll.u32 %v1888, 16
        %v2068 = vrot.slane %v2066, 5
        %v2069 = vor.u32 %v2065, %v2068
        %v2070 = vrot.slane %v2069, 4
        %v2072 = vshll.u32 %v1889, 16
        %v2074 = vrot.slane %v2072, 5
        %v2075 = vsel %vm823, %v2070, %v2074
        %v2076 = vshrl.u32 %v1889, 16
        %v2078 = vrot.slane %v2076, 4
        %v2079 = vor.u32 %v2078, %v2074
        %v2080 = vrot.slane %v2079, 4
        %v2082 = vshll.u32 %v1890, 16
        %v2084 = vrot.slane %v2082, 5
        %v2085 = vsel %vm823, %v2080, %v2084
        %v2087 = vshrl.u32 %v1891, 16
        %v2089 = vrot.slane %v2087, 4
        %v2090 = vshll.u32 %v1891, 16
        %v2092 = vrot.slane %v2090, 5
        %v2093 = vor.u32 %v2089, %v2092
        %v2094 = vrot.slane %v2093, 4
        %v2096 = vshll.u32 %v1892, 16
        %v2098 = vrot.slane %v2096, 5
        %v2099 = vsel %vm823, %v2094, %v2098
        %v2100 = vshrl.u32 %v1892, 16
        %v2102 = vrot.slane %v2100, 4
        %v2103 = vor.u32 %v2102, %v2098
        %v2104 = vrot.slane %v2103, 4
        %v2106 = vshll.u32 %v1893, 16
        %v2108 = vrot.slane %v2106, 5
        %v2109 = vsel %vm823, %v2104, %v2108
        %v2111 = vshrl.u32 %v1894, 16
        %v2113 = vrot.slane %v2111, 4
        %v2114 = vshll.u32 %v1894, 16
        %v2116 = vrot.slane %v2114, 5
        %v2117 = vor.u32 %v2113, %v2116
        %v2118 = vrot.slane %v2117, 4
        %v2120 = vshll.u32 %v1895, 16
        %v2122 = vrot.slane %v2120, 5
        %v2123 = vsel %vm823, %v2118, %v2122
        %v2124 = vshrl.u32 %v1895, 16
        %v2126 = vrot.slane %v2124, 4
        %v2127 = vor.u32 %v2126, %v2122
        %v2128 = vrot.slane %v2127, 4
        %v2130 = vshll.u32 %v1896, 16
        %v2132 = vrot.slane %v2130, 5
        %v2133 = vsel %vm823, %v2128, %v2132
        %v2135 = vshrl.u32 %v1897, 16
        %v2137 = vrot.slane %v2135, 4
        %v2138 = vshll.u32 %v1897, 16
        %v2140 = vrot.slane %v2138, 5
        %v2141 = vor.u32 %v2137, %v2140
        %v2142 = vrot.slane %v2141, 4
        %v2144 = vshll.u32 %v1898, 16
        %v2146 = vrot.slane %v2144, 5
        %v2147 = vsel %vm823, %v2142, %v2146
        %v2148 = vshrl.u32 %v1898, 16
        %v2150 = vrot.slane %v2148, 4
        %v2151 = vor.u32 %v2150, %v2146
        %v2152 = vrot.slane %v2151, 4
        %v2154 = vshll.u32 %v1899, 16
        %v2156 = vrot.slane %v2154, 5
        %v2157 = vsel %vm823, %v2152, %v2156
        %v2159 = vshrl.u32 %v1900, 16
        %v2161 = vrot.slane %v2159, 4
        %v2162 = vshll.u32 %v1900, 16
        %v2164 = vrot.slane %v2162, 5
        %v2165 = vor.u32 %v2161, %v2164
        %v2166 = vrot.slane %v2165, 4
        %v2168 = vshll.u32 %v1901, 16
        %v2170 = vrot.slane %v2168, 5
        %v2171 = vsel %vm823, %v2166, %v2170
        %v2172 = vshrl.u32 %v1901, 16
        %v2174 = vrot.slane %v2172, 4
        %v2175 = vor.u32 %v2174, %v2170
        %v2176 = vrot.slane %v2175, 4
        %v2178 = vshll.u32 %v1902, 16
        %v2180 = vrot.slane %v2178, 5
        %v2181 = vsel %vm823, %v2176, %v2180
        %v2183 = vshrl.u32 %v1903, 16
        %v2185 = vrot.slane %v2183, 4
        %v2186 = vshll.u32 %v1903, 16
        %v2188 = vrot.slane %v2186, 5
        %v2189 = vor.u32 %v2185, %v2188
        %v2190 = vrot.slane %v2189, 4
        %v2192 = vshll.u32 %v1904, 16
        %v2194 = vrot.slane %v2192, 5
        %v2195 = vsel %vm823, %v2190, %v2194
        %v2196 = vshrl.u32 %v1904, 16
        %v2198 = vrot.slane %v2196, 4
        %v2199 = vor.u32 %v2198, %v2194
        %v2200 = vrot.slane %v2199, 4
        %v2202 = vshll.u32 %v1905, 16
        %v2204 = vrot.slane %v2202, 5
        %v2205 = vsel %vm823, %v2200, %v2204
        %v2207 = vshrl.u32 %v1906, 16
        %v2209 = vrot.slane %v2207, 4
        %v2210 = vshll.u32 %v1906, 16
        %v2212 = vrot.slane %v2210, 5
        %v2213 = vor.u32 %v2209, %v2212
        %v2214 = vrot.slane %v2213, 4
        %v2216 = vshll.u32 %v1907, 16
        %v2218 = vrot.slane %v2216, 5
        %v2219 = vsel %vm823, %v2214, %v2218
        %v2220 = vshrl.u32 %v1907, 16
        %v2222 = vrot.slane %v2220, 4
        %v2223 = vor.u32 %v2222, %v2218
        %v2224 = vrot.slane %v2223, 4
        %v2226 = vshll.u32 %v1908, 16
        %v2228 = vrot.slane %v2226, 5
        %v2229 = vsel %vm823, %v2224, %v2228
        %v2231 = vshrl.u32 %v1909, 16
        %v2233 = vrot.slane %v2231, 4
        %v2234 = vshll.u32 %v1909, 16
        %v2236 = vrot.slane %v2234, 5
        %v2237 = vor.u32 %v2233, %v2236
        %v2238 = vrot.slane %v2237, 4
        %v2240 = vshll.u32 %v1910, 16
        %v2242 = vrot.slane %v2240, 5
        %v2243 = vsel %vm823, %v2238, %v2242
        %v2244 = vshrl.u32 %v1910, 16
        %v2246 = vrot.slane %v2244, 4
        %v2247 = vor.u32 %v2246, %v2242
        %v2248 = vrot.slane %v2247, 4
        %v2250 = vshll.u32 %v1911, 16
        %v2252 = vrot.slane %v2250, 5
        %v2253 = vsel %vm823, %v2248, %v2252
        %v2255 = vshrl.u32 %v1912, 16
        %v2257 = vrot.slane %v2255, 4
        %v2258 = vshll.u32 %v1912, 16
        %v2260 = vrot.slane %v2258, 5
        %v2261 = vor.u32 %v2257, %v2260
        %v2262 = vrot.slane %v2261, 4
        %v2264 = vshll.u32 %v1913, 16
        %v2266 = vrot.slane %v2264, 5
        %v2267 = vsel %vm823, %v2262, %v2266
        %v2268 = vshrl.u32 %v1913, 16
        %v2270 = vrot.slane %v2268, 4
        %v2271 = vor.u32 %v2270, %v2266
        %v2272 = vrot.slane %v2271, 4
        %v2274 = vshll.u32 %v1914, 16
        %v2276 = vrot.slane %v2274, 5
        %v2277 = vsel %vm823, %v2272, %v2276
        %v2279 = vshrl.u32 %v1915, 16
        %v2281 = vrot.slane %v2279, 4
        %v2282 = vshll.u32 %v1915, 16
        %v2284 = vrot.slane %v2282, 5
        %v2285 = vor.u32 %v2281, %v2284
        %v2286 = vrot.slane %v2285, 4
        %v2288 = vshll.u32 %v1916, 16
        %v2290 = vrot.slane %v2288, 5
        %v2291 = vsel %vm823, %v2286, %v2290
        %v2292 = vshrl.u32 %v1916, 16
        %v2294 = vrot.slane %v2292, 4
        %v2295 = vor.u32 %v2294, %v2290
        %v2296 = vrot.slane %v2295, 4
        %v2298 = vshll.u32 %v1917, 16
        %v2300 = vrot.slane %v2298, 5
        %v2301 = vsel %vm823, %v2296, %v2300
        %2302 = vrot.lane.b32.xlu0 %v1931, 32
        %v2303 = vpop.permute.xlu0 %2302
        %2304 = vrot.lane.b32.xlu0 %v1941, 32
        %v2305 = vpop.permute.xlu0 %2304
        %2306 = vrot.lane.b32.xlu0 %v1955, 32
        %v2307 = vpop.permute.xlu0 %2306
        %2308 = vrot.lane.b32.xlu0 %v1965, 32
        %v2309 = vpop.permute.xlu0 %2308
        %2310 = vrot.lane.b32.xlu0 %v1979, 32
        %v2311 = vpop.permute.xlu0 %2310
        %2312 = vrot.lane.b32.xlu0 %v1989, 32
        %v2313 = vpop.permute.xlu0 %2312
        %2314 = vrot.lane.b32.xlu0 %v2003, 32
        %v2315 = vpop.permute.xlu0 %2314
        %2316 = vrot.lane.b32.xlu0 %v2013, 32
        %v2317 = vpop.permute.xlu0 %2316
        %2318 = vrot.lane.b32.xlu0 %v2027, 32
        %v2319 = vpop.permute.xlu0 %2318
        %2320 = vrot.lane.b32.xlu0 %v2037, 32
        %v2321 = vpop.permute.xlu0 %2320
        %2322 = vrot.lane.b32.xlu0 %v2051, 32
        %v2323 = vpop.permute.xlu0 %2322
        %2324 = vrot.lane.b32.xlu0 %v2061, 32
        %v2325 = vpop.permute.xlu0 %2324
        %2326 = vrot.lane.b32.xlu0 %v2075, 32
        %v2327 = vpop.permute.xlu0 %2326
        %2328 = vrot.lane.b32.xlu0 %v2085, 32
        %v2329 = vpop.permute.xlu0 %2328
        %2330 = vrot.lane.b32.xlu0 %v2099, 32
        %v2331 = vpop.permute.xlu0 %2330
        %2332 = vrot.lane.b32.xlu0 %v2109, 32
        %v2333 = vpop.permute.xlu0 %2332
        %2334 = vrot.lane.b32.xlu0 %v2123, 32
        %v2335 = vpop.permute.xlu0 %2334
        %2336 = vrot.lane.b32.xlu0 %v2133, 32
        %v2337 = vpop.permute.xlu0 %2336
        %2338 = vrot.lane.b32.xlu0 %v2147, 32
        %v2339 = vpop.permute.xlu0 %2338
        %2340 = vrot.lane.b32.xlu0 %v2157, 32
        %v2341 = vpop.permute.xlu0 %2340
        %2342 = vrot.lane.b32.xlu0 %v2171, 32
        %v2343 = vpop.permute.xlu0 %2342
        %2344 = vrot.lane.b32.xlu0 %v2181, 32
        %v2345 = vpop.permute.xlu0 %2344
        %2346 = vrot.lane.b32.xlu0 %v2195, 32
        %v2347 = vpop.permute.xlu0 %2346
        %2348 = vrot.lane.b32.xlu0 %v2205, 32
        %v2349 = vpop.permute.xlu0 %2348
        %2350 = vrot.lane.b32.xlu0 %v2219, 32
        %v2351 = vpop.permute.xlu0 %2350
        %2352 = vrot.lane.b32.xlu0 %v2229, 32
        %v2353 = vpop.permute.xlu0 %2352
        %2354 = vrot.lane.b32.xlu0 %v2243, 32
        %v2355 = vpop.permute.xlu0 %2354
        %2356 = vrot.lane.b32.xlu0 %v2253, 32
        %v2357 = vpop.permute.xlu0 %2356
        %2358 = vrot.lane.b32.xlu0 %v2267, 32
        %v2359 = vpop.permute.xlu0 %2358
        %2360 = vrot.lane.b32.xlu0 %v2277, 32
        %v2361 = vpop.permute.xlu0 %2360
        %2362 = vrot.lane.b32.xlu0 %v2291, 32
        %v2363 = vpop.permute.xlu0 %2362
        %2364 = vrot.lane.b32.xlu0 %v2301, 32
        %v2365 = vpop.permute.xlu0 %2364
        %vm2398 = vcmask 322816
        %2399 = vst.msk [vmem:[#allocation3] sm:$0xf] %vm2398, %v2303
        %2400 = vst.msk [vmem:[#allocation3 + $0x4] sm:$0xf] %vm2398, %v2305
        %2401 = vst.msk [vmem:[#allocation3 + $0x8] sm:$0xf] %vm2398, %v2307
        %2402 = vst.msk [vmem:[#allocation3 + $0xc] sm:$0xf] %vm2398, %v2309
        %2403 = vst.msk [vmem:[#allocation3 + $0x10] sm:$0xf] %vm2398, %v2311
        %2404 = vst.msk [vmem:[#allocation3 + $0x14] sm:$0xf] %vm2398, %v2313
        %2405 = vst.msk [vmem:[#allocation3 + $0x18] sm:$0xf] %vm2398, %v2315
        %2406 = vst.msk [vmem:[#allocation3 + $0x1c] sm:$0xf] %vm2398, %v2317
        %2407 = vst.msk [vmem:[#allocation3 + $0x20] sm:$0xf] %vm2398, %v2319
        %2408 = vst.msk [vmem:[#allocation3 + $0x24] sm:$0xf] %vm2398, %v2321
        %2409 = vst.msk [vmem:[#allocation3 + $0x28] sm:$0xf] %vm2398, %v2323
        %2410 = vst.msk [vmem:[#allocation3 + $0x2c] sm:$0xf] %vm2398, %v2325
        %2411 = vst.msk [vmem:[#allocation3 + $0x30] sm:$0xf] %vm2398, %v2327
        %2412 = vst.msk [vmem:[#allocation3 + $0x34] sm:$0xf] %vm2398, %v2329
        %2413 = vst.msk [vmem:[#allocation3 + $0x38] sm:$0xf] %vm2398, %v2331
        %2414 = vst.msk [vmem:[#allocation3 + $0x3c] sm:$0xf] %vm2398, %v2333
        %2415 = vst.msk [vmem:[#allocation3 + $0x40] sm:$0xf] %vm2398, %v2335
        %2416 = vst.msk [vmem:[#allocation3 + $0x44] sm:$0xf] %vm2398, %v2337
        %2417 = vst.msk [vmem:[#allocation3 + $0x48] sm:$0xf] %vm2398, %v2339
        %2418 = vst.msk [vmem:[#allocation3 + $0x4c] sm:$0xf] %vm2398, %v2341
        %2419 = vst.msk [vmem:[#allocation3 + $0x50] sm:$0xf] %vm2398, %v2343
        %2420 = vst.msk [vmem:[#allocation3 + $0x54] sm:$0xf] %vm2398, %v2345
        %2421 = vst.msk [vmem:[#allocation3 + $0x58] sm:$0xf] %vm2398, %v2347
        %2422 = vst.msk [vmem:[#allocation3 + $0x5c] sm:$0xf] %vm2398, %v2349
        %2423 = vst.msk [vmem:[#allocation3 + $0x60] sm:$0xf] %vm2398, %v2351
        %2424 = vst.msk [vmem:[#allocation3 + $0x64] sm:$0xf] %vm2398, %v2353
        %2425 = vst.msk [vmem:[#allocation3 + $0x68] sm:$0xf] %vm2398, %v2355
        %2426 = vst.msk [vmem:[#allocation3 + $0x6c] sm:$0xf] %vm2398, %v2357
        %2427 = vst.msk [vmem:[#allocation3 + $0x70] sm:$0xf] %vm2398, %v2359
        %2428 = vst.msk [vmem:[#allocation3 + $0x74] sm:$0xf] %vm2398, %v2361
        %2429 = vst.msk [vmem:[#allocation3 + $0x78] sm:$0xf] %vm2398, %v2363
        %2430 = vst.msk [vmem:[#allocation3 + $0x7c] sm:$0xf] %vm2398, %v2365
        %v2431 = vld [vmem:[%s580] sm:$0xe]
        %v2432 = vld [vmem:[%s580 + $0x4] sm:$0xf]
        %v2433 = vld [vmem:[%s580 + $0x8] sm:$0x1]
        %v2434 = vld [vmem:[%s580 + $0xc] sm:$0xe]
        %v2435 = vld [vmem:[%s580 + $0x10] sm:$0xf]
        %v2436 = vld [vmem:[%s580 + $0x14] sm:$0x1]
        %v2437 = vld [vmem:[%s580 + $0x18] sm:$0xe]
        %v2438 = vld [vmem:[%s580 + $0x1c] sm:$0xf]
        %v2439 = vld [vmem:[%s580 + $0x20] sm:$0x1]
        %v2440 = vld [vmem:[%s580 + $0x24] sm:$0xe]
        %v2441 = vld [vmem:[%s580 + $0x28] sm:$0xf]
        %v2442 = vld [vmem:[%s580 + $0x2c] sm:$0x1]
        %v2443 = vld [vmem:[%s580 + $0x30] sm:$0xe]
        %v2444 = vld [vmem:[%s580 + $0x34] sm:$0xf]
        %v2445 = vld [vmem:[%s580 + $0x38] sm:$0x1]
        %v2446 = vld [vmem:[%s580 + $0x3c] sm:$0xe]
        %v2447 = vld [vmem:[%s580 + $0x40] sm:$0xf]
        %v2448 = vld [vmem:[%s580 + $0x44] sm:$0x1]
        %v2449 = vld [vmem:[%s580 + $0x48] sm:$0xe]
        %v2450 = vld [vmem:[%s580 + $0x4c] sm:$0xf]
        %v2451 = vld [vmem:[%s580 + $0x50] sm:$0x1]
        %v2452 = vld [vmem:[%s580 + $0x54] sm:$0xe]
        %v2453 = vld [vmem:[%s580 + $0x58] sm:$0xf]
        %v2454 = vld [vmem:[%s580 + $0x5c] sm:$0x1]
        %v2455 = vld [vmem:[%s580 + $0x60] sm:$0xe]
        %v2456 = vld [vmem:[%s580 + $0x64] sm:$0xf]
        %v2457 = vld [vmem:[%s580 + $0x68] sm:$0x1]
        %v2458 = vld [vmem:[%s580 + $0x6c] sm:$0xe]
        %v2459 = vld [vmem:[%s580 + $0x70] sm:$0xf]
        %v2460 = vld [vmem:[%s580 + $0x74] sm:$0x1]
        %v2461 = vld [vmem:[%s580 + $0x78] sm:$0xe]
        %v2462 = vld [vmem:[%s580 + $0x7c] sm:$0xf]
        %v2463 = vld [vmem:[%s580 + $0x80] sm:$0x1]
        %v2464 = vld [vmem:[%s580 + $0x84] sm:$0xe]
        %v2465 = vld [vmem:[%s580 + $0x88] sm:$0xf]
        %v2466 = vld [vmem:[%s580 + $0x8c] sm:$0x1]
        %v2467 = vld [vmem:[%s580 + $0x90] sm:$0xe]
        %v2468 = vld [vmem:[%s580 + $0x94] sm:$0xf]
        %v2469 = vld [vmem:[%s580 + $0x98] sm:$0x1]
        %v2470 = vld [vmem:[%s580 + $0x9c] sm:$0xe]
        %v2471 = vld [vmem:[%s580 + $0xa0] sm:$0xf]
        %v2472 = vld [vmem:[%s580 + $0xa4] sm:$0x1]
        %v2473 = vld [vmem:[%s580 + $0xa8] sm:$0xe]
        %v2474 = vld [vmem:[%s580 + $0xac] sm:$0xf]
        %v2475 = vld [vmem:[%s580 + $0xb0] sm:$0x1]
        %v2476 = vld [vmem:[%s580 + $0xb4] sm:$0xe]
        %v2477 = vld [vmem:[%s580 + $0xb8] sm:$0xf]
        %v2478 = vld [vmem:[%s580 + $0xbc] sm:$0x1]
        %v2527 = vrot.slane %v2431, 5
        %v2528 = vrot.slane %v2527, 4
        %v2529 = vrot.slane %v2432, 5
        %v2530 = vsel %vm1435, %v2528, %v2529
        %v2531 = vrot.slane %v2529, 4
        %v2532 = vrot.slane %v2433, 5
        %v2533 = vsel %vm1435, %v2531, %v2532
        %v2534 = vrot.slane %v2434, 5
        %v2535 = vrot.slane %v2534, 4
        %v2536 = vrot.slane %v2435, 5
        %v2537 = vsel %vm1435, %v2535, %v2536
        %v2538 = vrot.slane %v2536, 4
        %v2539 = vrot.slane %v2436, 5
        %v2540 = vsel %vm1435, %v2538, %v2539
        %v2541 = vrot.slane %v2437, 5
        %v2542 = vrot.slane %v2541, 4
        %v2543 = vrot.slane %v2438, 5
        %v2544 = vsel %vm1435, %v2542, %v2543
        %v2545 = vrot.slane %v2543, 4
        %v2546 = vrot.slane %v2439, 5
        %v2547 = vsel %vm1435, %v2545, %v2546
        %v2548 = vrot.slane %v2440, 5
        %v2549 = vrot.slane %v2548, 4
        %v2550 = vrot.slane %v2441, 5
        %v2551 = vsel %vm1435, %v2549, %v2550
        %v2552 = vrot.slane %v2550, 4
        %v2553 = vrot.slane %v2442, 5
        %v2554 = vsel %vm1435, %v2552, %v2553
        %v2555 = vrot.slane %v2443, 5
        %v2556 = vrot.slane %v2555, 4
        %v2557 = vrot.slane %v2444, 5
        %v2558 = vsel %vm1435, %v2556, %v2557
        %v2559 = vrot.slane %v2557, 4
        %v2560 = vrot.slane %v2445, 5
        %v2561 = vsel %vm1435, %v2559, %v2560
        %v2562 = vrot.slane %v2446, 5
        %v2563 = vrot.slane %v2562, 4
        %v2564 = vrot.slane %v2447, 5
        %v2565 = vsel %vm1435, %v2563, %v2564
        %v2566 = vrot.slane %v2564, 4
        %v2567 = vrot.slane %v2448, 5
        %v2568 = vsel %vm1435, %v2566, %v2567
        %v2569 = vrot.slane %v2449, 5
        %v2570 = vrot.slane %v2569, 4
        %v2571 = vrot.slane %v2450, 5
        %v2572 = vsel %vm1435, %v2570, %v2571
        %v2573 = vrot.slane %v2571, 4
        %v2574 = vrot.slane %v2451, 5
        %v2575 = vsel %vm1435, %v2573, %v2574
        %v2576 = vrot.slane %v2452, 5
        %v2577 = vrot.slane %v2576, 4
        %v2578 = vrot.slane %v2453, 5
        %v2579 = vsel %vm1435, %v2577, %v2578
        %v2580 = vrot.slane %v2578, 4
        %v2581 = vrot.slane %v2454, 5
        %v2582 = vsel %vm1435, %v2580, %v2581
        %v2583 = vrot.slane %v2455, 5
        %v2584 = vrot.slane %v2583, 4
        %v2585 = vrot.slane %v2456, 5
        %v2586 = vsel %vm1435, %v2584, %v2585
        %v2587 = vrot.slane %v2585, 4
        %v2588 = vrot.slane %v2457, 5
        %v2589 = vsel %vm1435, %v2587, %v2588
        %v2590 = vrot.slane %v2458, 5
        %v2591 = vrot.slane %v2590, 4
        %v2592 = vrot.slane %v2459, 5
        %v2593 = vsel %vm1435, %v2591, %v2592
        %v2594 = vrot.slane %v2592, 4
        %v2595 = vrot.slane %v2460, 5
        %v2596 = vsel %vm1435, %v2594, %v2595
        %v2597 = vrot.slane %v2461, 5
        %v2598 = vrot.slane %v2597, 4
        %v2599 = vrot.slane %v2462, 5
        %v2600 = vsel %vm1435, %v2598, %v2599
        %v2601 = vrot.slane %v2599, 4
        %v2602 = vrot.slane %v2463, 5
        %v2603 = vsel %vm1435, %v2601, %v2602
        %v2604 = vrot.slane %v2464, 5
        %v2605 = vrot.slane %v2604, 4
        %v2606 = vrot.slane %v2465, 5
        %v2607 = vsel %vm1435, %v2605, %v2606
        %v2608 = vrot.slane %v2606, 4
        %v2609 = vrot.slane %v2466, 5
        %v2610 = vsel %vm1435, %v2608, %v2609
        %v2611 = vrot.slane %v2467, 5
        %v2612 = vrot.slane %v2611, 4
        %v2613 = vrot.slane %v2468, 5
        %v2614 = vsel %vm1435, %v2612, %v2613
        %v2615 = vrot.slane %v2613, 4
        %v2616 = vrot.slane %v2469, 5
        %v2617 = vsel %vm1435, %v2615, %v2616
        %v2618 = vrot.slane %v2470, 5
        %v2619 = vrot.slane %v2618, 4
        %v2620 = vrot.slane %v2471, 5
        %v2621 = vsel %vm1435, %v2619, %v2620
        %v2622 = vrot.slane %v2620, 4
        %v2623 = vrot.slane %v2472, 5
        %v2624 = vsel %vm1435, %v2622, %v2623
        %v2625 = vrot.slane %v2473, 5
        %v2626 = vrot.slane %v2625, 4
        %v2627 = vrot.slane %v2474, 5
        %v2628 = vsel %vm1435, %v2626, %v2627
        %v2629 = vrot.slane %v2627, 4
        %v2630 = vrot.slane %v2475, 5
        %v2631 = vsel %vm1435, %v2629, %v2630
        %v2632 = vrot.slane %v2476, 5
        %v2633 = vrot.slane %v2632, 4
        %v2634 = vrot.slane %v2477, 5
        %v2635 = vsel %vm1435, %v2633, %v2634
        %v2636 = vrot.slane %v2634, 4
        %v2637 = vrot.slane %v2478, 5
        %v2638 = vsel %vm1435, %v2636, %v2637
        %2639 = vrot.lane.b32.xlu0 %v2530, 40
        %v2640 = vpop.permute.xlu0 %2639
        %2641 = vrot.lane.b32.xlu0 %v2533, 40
        %v2642 = vpop.permute.xlu0 %2641
        %2643 = vrot.lane.b32.xlu0 %v2537, 40
        %v2644 = vpop.permute.xlu0 %2643
        %2645 = vrot.lane.b32.xlu0 %v2540, 40
        %v2646 = vpop.permute.xlu0 %2645
        %2647 = vrot.lane.b32.xlu0 %v2544, 40
        %v2648 = vpop.permute.xlu0 %2647
        %2649 = vrot.lane.b32.xlu0 %v2547, 40
        %v2650 = vpop.permute.xlu0 %2649
        %2651 = vrot.lane.b32.xlu0 %v2551, 40
        %v2652 = vpop.permute.xlu0 %2651
        %2653 = vrot.lane.b32.xlu0 %v2554, 40
        %v2654 = vpop.permute.xlu0 %2653
        %2655 = vrot.lane.b32.xlu0 %v2558, 40
        %v2656 = vpop.permute.xlu0 %2655
        %2657 = vrot.lane.b32.xlu0 %v2561, 40
        %v2658 = vpop.permute.xlu0 %2657
        %2659 = vrot.lane.b32.xlu0 %v2565, 40
        %v2660 = vpop.permute.xlu0 %2659
        %2661 = vrot.lane.b32.xlu0 %v2568, 40
        %v2662 = vpop.permute.xlu0 %2661
        %2663 = vrot.lane.b32.xlu0 %v2572, 40
        %v2664 = vpop.permute.xlu0 %2663
        %2665 = vrot.lane.b32.xlu0 %v2575, 40
        %v2666 = vpop.permute.xlu0 %2665
        %2667 = vrot.lane.b32.xlu0 %v2579, 40
        %v2668 = vpop.permute.xlu0 %2667
        %2669 = vrot.lane.b32.xlu0 %v2582, 40
        %v2670 = vpop.permute.xlu0 %2669
        %2671 = vrot.lane.b32.xlu0 %v2586, 40
        %v2672 = vpop.permute.xlu0 %2671
        %2673 = vrot.lane.b32.xlu0 %v2589, 40
        %v2674 = vpop.permute.xlu0 %2673
        %2675 = vrot.lane.b32.xlu0 %v2593, 40
        %v2676 = vpop.permute.xlu0 %2675
        %2677 = vrot.lane.b32.xlu0 %v2596, 40
        %v2678 = vpop.permute.xlu0 %2677
        %2679 = vrot.lane.b32.xlu0 %v2600, 40
        %v2680 = vpop.permute.xlu0 %2679
        %2681 = vrot.lane.b32.xlu0 %v2603, 40
        %v2682 = vpop.permute.xlu0 %2681
        %2683 = vrot.lane.b32.xlu0 %v2607, 40
        %v2684 = vpop.permute.xlu0 %2683
        %2685 = vrot.lane.b32.xlu0 %v2610, 40
        %v2686 = vpop.permute.xlu0 %2685
        %2687 = vrot.lane.b32.xlu0 %v2614, 40
        %v2688 = vpop.permute.xlu0 %2687
        %2689 = vrot.lane.b32.xlu0 %v2617, 40
        %v2690 = vpop.permute.xlu0 %2689
        %2691 = vrot.lane.b32.xlu0 %v2621, 40
        %v2692 = vpop.permute.xlu0 %2691
        %2693 = vrot.lane.b32.xlu0 %v2624, 40
        %v2694 = vpop.permute.xlu0 %2693
        %2695 = vrot.lane.b32.xlu0 %v2628, 40
        %v2696 = vpop.permute.xlu0 %2695
        %2697 = vrot.lane.b32.xlu0 %v2631, 40
        %v2698 = vpop.permute.xlu0 %2697
        %2699 = vrot.lane.b32.xlu0 %v2635, 40
        %v2700 = vpop.permute.xlu0 %2699
        %2701 = vrot.lane.b32.xlu0 %v2638, 40
        %v2702 = vpop.permute.xlu0 %2701
        %vm2735 = vcmask 388416
        %2736 = vst.msk [vmem:[#allocation3] sm:$0xf] %vm2735, %v2640
        %2737 = vst.msk [vmem:[#allocation3 + $0x4] sm:$0xf] %vm2735, %v2642
        %2738 = vst.msk [vmem:[#allocation3 + $0x8] sm:$0xf] %vm2735, %v2644
        %2739 = vst.msk [vmem:[#allocation3 + $0xc] sm:$0xf] %vm2735, %v2646
        %2740 = vst.msk [vmem:[#allocation3 + $0x10] sm:$0xf] %vm2735, %v2648
        %2741 = vst.msk [vmem:[#allocation3 + $0x14] sm:$0xf] %vm2735, %v2650
        %2742 = vst.msk [vmem:[#allocation3 + $0x18] sm:$0xf] %vm2735, %v2652
        %2743 = vst.msk [vmem:[#allocation3 + $0x1c] sm:$0xf] %vm2735, %v2654
        %2744 = vst.msk [vmem:[#allocation3 + $0x20] sm:$0xf] %vm2735, %v2656
        %2745 = vst.msk [vmem:[#allocation3 + $0x24] sm:$0xf] %vm2735, %v2658
        %2746 = vst.msk [vmem:[#allocation3 + $0x28] sm:$0xf] %vm2735, %v2660
        %2747 = vst.msk [vmem:[#allocation3 + $0x2c] sm:$0xf] %vm2735, %v2662
        %2748 = vst.msk [vmem:[#allocation3 + $0x30] sm:$0xf] %vm2735, %v2664
        %2749 = vst.msk [vmem:[#allocation3 + $0x34] sm:$0xf] %vm2735, %v2666
        %2750 = vst.msk [vmem:[#allocation3 + $0x38] sm:$0xf] %vm2735, %v2668
        %2751 = vst.msk [vmem:[#allocation3 + $0x3c] sm:$0xf] %vm2735, %v2670
        %2752 = vst.msk [vmem:[#allocation3 + $0x40] sm:$0xf] %vm2735, %v2672
        %2753 = vst.msk [vmem:[#allocation3 + $0x44] sm:$0xf] %vm2735, %v2674
        %2754 = vst.msk [vmem:[#allocation3 + $0x48] sm:$0xf] %vm2735, %v2676
        %2755 = vst.msk [vmem:[#allocation3 + $0x4c] sm:$0xf] %vm2735, %v2678
        %2756 = vst.msk [vmem:[#allocation3 + $0x50] sm:$0xf] %vm2735, %v2680
        %2757 = vst.msk [vmem:[#allocation3 + $0x54] sm:$0xf] %vm2735, %v2682
        %2758 = vst.msk [vmem:[#allocation3 + $0x58] sm:$0xf] %vm2735, %v2684
        %2759 = vst.msk [vmem:[#allocation3 + $0x5c] sm:$0xf] %vm2735, %v2686
        %2760 = vst.msk [vmem:[#allocation3 + $0x60] sm:$0xf] %vm2735, %v2688
        %2761 = vst.msk [vmem:[#allocation3 + $0x64] sm:$0xf] %vm2735, %v2690
        %2762 = vst.msk [vmem:[#allocation3 + $0x68] sm:$0xf] %vm2735, %v2692
        %2763 = vst.msk [vmem:[#allocation3 + $0x6c] sm:$0xf] %vm2735, %v2694
        %2764 = vst.msk [vmem:[#allocation3 + $0x70] sm:$0xf] %vm2735, %v2696
        %2765 = vst.msk [vmem:[#allocation3 + $0x74] sm:$0xf] %vm2735, %v2698
        %2766 = vst.msk [vmem:[#allocation3 + $0x78] sm:$0xf] %vm2735, %v2700
        %2767 = vst.msk [vmem:[#allocation3 + $0x7c] sm:$0xf] %vm2735, %v2702
        %s2768 = scalar_lea.vmem [#allocation2], 24
        %v2769 = vld [vmem:[%s2768] sm:$0xf]
        %v2770 = vld [vmem:[%s2768 + $0x4] sm:$0xf]
        %v2771 = vld [vmem:[%s2768 + $0xc] sm:$0xf]
        %v2772 = vld [vmem:[%s2768 + $0x10] sm:$0xf]
        %v2773 = vld [vmem:[%s2768 + $0x18] sm:$0xf]
        %v2774 = vld [vmem:[%s2768 + $0x1c] sm:$0xf]
        %v2775 = vld [vmem:[%s2768 + $0x24] sm:$0xf]
        %v2776 = vld [vmem:[%s2768 + $0x28] sm:$0xf]
        %v2777 = vld [vmem:[%s2768 + $0x30] sm:$0xf]
        %v2778 = vld [vmem:[%s2768 + $0x34] sm:$0xf]
        %v2779 = vld [vmem:[%s2768 + $0x3c] sm:$0xf]
        %v2780 = vld [vmem:[%s2768 + $0x40] sm:$0xf]
        %v2781 = vld [vmem:[%s2768 + $0x48] sm:$0xf]
        %v2782 = vld [vmem:[%s2768 + $0x4c] sm:$0xf]
        %v2783 = vld [vmem:[%s2768 + $0x54] sm:$0xf]
        %v2784 = vld [vmem:[%s2768 + $0x58] sm:$0xf]
        %v2785 = vld [vmem:[%s2768 + $0x60] sm:$0xf]
        %v2786 = vld [vmem:[%s2768 + $0x64] sm:$0xf]
        %v2787 = vld [vmem:[%s2768 + $0x6c] sm:$0xf]
        %v2788 = vld [vmem:[%s2768 + $0x70] sm:$0xf]
        %v2789 = vld [vmem:[%s2768 + $0x78] sm:$0xf]
        %v2790 = vld [vmem:[%s2768 + $0x7c] sm:$0xf]
        %v2791 = vld [vmem:[%s2768 + $0x84] sm:$0xf]
        %v2792 = vld [vmem:[%s2768 + $0x88] sm:$0xf]
        %v2793 = vld [vmem:[%s2768 + $0x90] sm:$0xf]
        %v2794 = vld [vmem:[%s2768 + $0x94] sm:$0xf]
        %v2795 = vld [vmem:[%s2768 + $0x9c] sm:$0xf]
        %v2796 = vld [vmem:[%s2768 + $0xa0] sm:$0xf]
        %v2797 = vld [vmem:[%s2768 + $0xa8] sm:$0xf]
        %v2798 = vld [vmem:[%s2768 + $0xac] sm:$0xf]
        %v2799 = vld [vmem:[%s2768 + $0xb4] sm:$0xf]
        %v2800 = vld [vmem:[%s2768 + $0xb8] sm:$0xf]
        %2833 = vrot.lane.b32.xlu0 %v2769, 48
        %v2834 = vpop.permute.xlu0 %2833
        %2835 = vrot.lane.b32.xlu0 %v2770, 48
        %v2836 = vpop.permute.xlu0 %2835
        %2837 = vrot.lane.b32.xlu0 %v2771, 48
        %v2838 = vpop.permute.xlu0 %2837
        %2839 = vrot.lane.b32.xlu0 %v2772, 48
        %v2840 = vpop.permute.xlu0 %2839
        %2841 = vrot.lane.b32.xlu0 %v2773, 48
        %v2842 = vpop.permute.xlu0 %2841
        %2843 = vrot.lane.b32.xlu0 %v2774, 48
        %v2844 = vpop.permute.xlu0 %2843
        %2845 = vrot.lane.b32.xlu0 %v2775, 48
        %v2846 = vpop.permute.xlu0 %2845
        %2847 = vrot.lane.b32.xlu0 %v2776, 48
        %v2848 = vpop.permute.xlu0 %2847
        %2849 = vrot.lane.b32.xlu0 %v2777, 48
        %v2850 = vpop.permute.xlu0 %2849
        %2851 = vrot.lane.b32.xlu0 %v2778, 48
        %v2852 = vpop.permute.xlu0 %2851
        %2853 = vrot.lane.b32.xlu0 %v2779, 48
        %v2854 = vpop.permute.xlu0 %2853
        %2855 = vrot.lane.b32.xlu0 %v2780, 48
        %v2856 = vpop.permute.xlu0 %2855
        %2857 = vrot.lane.b32.xlu0 %v2781, 48
        %v2858 = vpop.permute.xlu0 %2857
        %2859 = vrot.lane.b32.xlu0 %v2782, 48
        %v2860 = vpop.permute.xlu0 %2859
        %2861 = vrot.lane.b32.xlu0 %v2783, 48
        %v2862 = vpop.permute.xlu0 %2861
        %2863 = vrot.lane.b32.xlu0 %v2784, 48
        %v2864 = vpop.permute.xlu0 %2863
        %2865 = vrot.lane.b32.xlu0 %v2785, 48
        %v2866 = vpop.permute.xlu0 %2865
        %2867 = vrot.lane.b32.xlu0 %v2786, 48
        %v2868 = vpop.permute.xlu0 %2867
        %2869 = vrot.lane.b32.xlu0 %v2787, 48
        %v2870 = vpop.permute.xlu0 %2869
        %2871 = vrot.lane.b32.xlu0 %v2788, 48
        %v2872 = vpop.permute.xlu0 %2871
        %2873 = vrot.lane.b32.xlu0 %v2789, 48
        %v2874 = vpop.permute.xlu0 %2873
        %2875 = vrot.lane.b32.xlu0 %v2790, 48
        %v2876 = vpop.permute.xlu0 %2875
        %2877 = vrot.lane.b32.xlu0 %v2791, 48
        %v2878 = vpop.permute.xlu0 %2877
        %2879 = vrot.lane.b32.xlu0 %v2792, 48
        %v2880 = vpop.permute.xlu0 %2879
        %2881 = vrot.lane.b32.xlu0 %v2793, 48
        %v2882 = vpop.permute.xlu0 %2881
        %2883 = vrot.lane.b32.xlu0 %v2794, 48
        %v2884 = vpop.permute.xlu0 %2883
        %2885 = vrot.lane.b32.xlu0 %v2795, 48
        %v2886 = vpop.permute.xlu0 %2885
        %2887 = vrot.lane.b32.xlu0 %v2796, 48
        %v2888 = vpop.permute.xlu0 %2887
        %2889 = vrot.lane.b32.xlu0 %v2797, 48
        %v2890 = vpop.permute.xlu0 %2889
        %2891 = vrot.lane.b32.xlu0 %v2798, 48
        %v2892 = vpop.permute.xlu0 %2891
        %2893 = vrot.lane.b32.xlu0 %v2799, 48
        %v2894 = vpop.permute.xlu0 %2893
        %2895 = vrot.lane.b32.xlu0 %v2800, 48
        %v2896 = vpop.permute.xlu0 %2895
        %vm2929 = vcmask 454016
        %2930 = vst.msk [vmem:[#allocation3] sm:$0xf] %vm2929, %v2834
        %2931 = vst.msk [vmem:[#allocation3 + $0x4] sm:$0xf] %vm2929, %v2836
        %2932 = vst.msk [vmem:[#allocation3 + $0x8] sm:$0xf] %vm2929, %v2838
        %2933 = vst.msk [vmem:[#allocation3 + $0xc] sm:$0xf] %vm2929, %v2840
        %2934 = vst.msk [vmem:[#allocation3 + $0x10] sm:$0xf] %vm2929, %v2842
        %2935 = vst.msk [vmem:[#allocation3 + $0x14] sm:$0xf] %vm2929, %v2844
        %2936 = vst.msk [vmem:[#allocation3 + $0x18] sm:$0xf] %vm2929, %v2846
        %2937 = vst.msk [vmem:[#allocation3 + $0x1c] sm:$0xf] %vm2929, %v2848
        %2938 = vst.msk [vmem:[#allocation3 + $0x20] sm:$0xf] %vm2929, %v2850
        %2939 = vst.msk [vmem:[#allocation3 + $0x24] sm:$0xf] %vm2929, %v2852
        %2940 = vst.msk [vmem:[#allocation3 + $0x28] sm:$0xf] %vm2929, %v2854
        %2941 = vst.msk [vmem:[#allocation3 + $0x2c] sm:$0xf] %vm2929, %v2856
        %2942 = vst.msk [vmem:[#allocation3 + $0x30] sm:$0xf] %vm2929, %v2858
        %2943 = vst.msk [vmem:[#allocation3 + $0x34] sm:$0xf] %vm2929, %v2860
        %2944 = vst.msk [vmem:[#allocation3 + $0x38] sm:$0xf] %vm2929, %v2862
        %2945 = vst.msk [vmem:[#allocation3 + $0x3c] sm:$0xf] %vm2929, %v2864
        %2946 = vst.msk [vmem:[#allocation3 + $0x40] sm:$0xf] %vm2929, %v2866
        %2947 = vst.msk [vmem:[#allocation3 + $0x44] sm:$0xf] %vm2929, %v2868
        %2948 = vst.msk [vmem:[#allocation3 + $0x48] sm:$0xf] %vm2929, %v2870
        %2949 = vst.msk [vmem:[#allocation3 + $0x4c] sm:$0xf] %vm2929, %v2872
        %2950 = vst.msk [vmem:[#allocation3 + $0x50] sm:$0xf] %vm2929, %v2874
        %2951 = vst.msk [vmem:[#allocation3 + $0x54] sm:$0xf] %vm2929, %v2876
        %2952 = vst.msk [vmem:[#allocation3 + $0x58] sm:$0xf] %vm2929, %v2878
        %2953 = vst.msk [vmem:[#allocation3 + $0x5c] sm:$0xf] %vm2929, %v2880
        %2954 = vst.msk [vmem:[#allocation3 + $0x60] sm:$0xf] %vm2929, %v2882
        %2955 = vst.msk [vmem:[#allocation3 + $0x64] sm:$0xf] %vm2929, %v2884
        %2956 = vst.msk [vmem:[#allocation3 + $0x68] sm:$0xf] %vm2929, %v2886
        %2957 = vst.msk [vmem:[#allocation3 + $0x6c] sm:$0xf] %vm2929, %v2888
        %2958 = vst.msk [vmem:[#allocation3 + $0x70] sm:$0xf] %vm2929, %v2890
        %2959 = vst.msk [vmem:[#allocation3 + $0x74] sm:$0xf] %vm2929, %v2892
        %2960 = vst.msk [vmem:[#allocation3 + $0x78] sm:$0xf] %vm2929, %v2894
        %2961 = vst.msk [vmem:[#allocation3 + $0x7c] sm:$0xf] %vm2929, %v2896
        %v2962 = vld [vmem:[%s2768] sm:$0xf]
        %v2963 = vld [vmem:[%s2768 + $0x4] sm:$0xf]
        %v2964 = vld [vmem:[%s2768 + $0x8] sm:$0x1]
        %v2965 = vld [vmem:[%s2768 + $0xc] sm:$0xf]
        %v2966 = vld [vmem:[%s2768 + $0x10] sm:$0xf]
        %v2967 = vld [vmem:[%s2768 + $0x14] sm:$0x1]
        %v2968 = vld [vmem:[%s2768 + $0x18] sm:$0xf]
        %v2969 = vld [vmem:[%s2768 + $0x1c] sm:$0xf]
        %v2970 = vld [vmem:[%s2768 + $0x20] sm:$0x1]
        %v2971 = vld [vmem:[%s2768 + $0x24] sm:$0xf]
        %v2972 = vld [vmem:[%s2768 + $0x28] sm:$0xf]
        %v2973 = vld [vmem:[%s2768 + $0x2c] sm:$0x1]
        %v2974 = vld [vmem:[%s2768 + $0x30] sm:$0xf]
        %v2975 = vld [vmem:[%s2768 + $0x34] sm:$0xf]
        %v2976 = vld [vmem:[%s2768 + $0x38] sm:$0x1]
        %v2977 = vld [vmem:[%s2768 + $0x3c] sm:$0xf]
        %v2978 = vld [vmem:[%s2768 + $0x40] sm:$0xf]
        %v2979 = vld [vmem:[%s2768 + $0x44] sm:$0x1]
        %v2980 = vld [vmem:[%s2768 + $0x48] sm:$0xf]
        %v2981 = vld [vmem:[%s2768 + $0x4c] sm:$0xf]
        %v2982 = vld [vmem:[%s2768 + $0x50] sm:$0x1]
        %v2983 = vld [vmem:[%s2768 + $0x54] sm:$0xf]
        %v2984 = vld [vmem:[%s2768 + $0x58] sm:$0xf]
        %v2985 = vld [vmem:[%s2768 + $0x5c] sm:$0x1]
        %v2986 = vld [vmem:[%s2768 + $0x60] sm:$0xf]
        %v2987 = vld [vmem:[%s2768 + $0x64] sm:$0xf]
        %v2988 = vld [vmem:[%s2768 + $0x68] sm:$0x1]
        %v2989 = vld [vmem:[%s2768 + $0x6c] sm:$0xf]
        %v2990 = vld [vmem:[%s2768 + $0x70] sm:$0xf]
        %v2991 = vld [vmem:[%s2768 + $0x74] sm:$0x1]
        %v2992 = vld [vmem:[%s2768 + $0x78] sm:$0xf]
        %v2993 = vld [vmem:[%s2768 + $0x7c] sm:$0xf]
        %v2994 = vld [vmem:[%s2768 + $0x80] sm:$0x1]
        %v2995 = vld [vmem:[%s2768 + $0x84] sm:$0xf]
        %v2996 = vld [vmem:[%s2768 + $0x88] sm:$0xf]
        %v2997 = vld [vmem:[%s2768 + $0x8c] sm:$0x1]
        %v2998 = vld [vmem:[%s2768 + $0x90] sm:$0xf]
        %v2999 = vld [vmem:[%s2768 + $0x94] sm:$0xf]
        %v3000 = vld [vmem:[%s2768 + $0x98] sm:$0x1]
        %v3001 = vld [vmem:[%s2768 + $0x9c] sm:$0xf]
        %v3002 = vld [vmem:[%s2768 + $0xa0] sm:$0xf]
        %v3003 = vld [vmem:[%s2768 + $0xa4] sm:$0x1]
        %v3004 = vld [vmem:[%s2768 + $0xa8] sm:$0xf]
        %v3005 = vld [vmem:[%s2768 + $0xac] sm:$0xf]
        %v3006 = vld [vmem:[%s2768 + $0xb0] sm:$0x1]
        %v3007 = vld [vmem:[%s2768 + $0xb4] sm:$0xf]
        %v3008 = vld [vmem:[%s2768 + $0xb8] sm:$0xf]
        %v3009 = vld [vmem:[%s2768 + $0xbc] sm:$0x1]
        %v3011 = vshrl.u32 %v2962, 16
        %v3013 = vrot.slane %v3011, 4
        %v3014 = vshll.u32 %v2962, 16
        %v3016 = vrot.slane %v3014, 5
        %v3017 = vor.u32 %v3013, %v3016
        %v3018 = vrot.slane %v3017, 4
        %v3020 = vshll.u32 %v2963, 16
        %v3022 = vrot.slane %v3020, 5
        %v3023 = vsel %vm823, %v3018, %v3022
        %v3024 = vshrl.u32 %v2963, 16
        %v3026 = vrot.slane %v3024, 4
        %v3027 = vor.u32 %v3026, %v3022
        %v3028 = vrot.slane %v3027, 4
        %v3030 = vshll.u32 %v2964, 16
        %v3032 = vrot.slane %v3030, 5
        %v3033 = vsel %vm823, %v3028, %v3032
        %v3035 = vshrl.u32 %v2965, 16
        %v3037 = vrot.slane %v3035, 4
        %v3038 = vshll.u32 %v2965, 16
        %v3040 = vrot.slane %v3038, 5
        %v3041 = vor.u32 %v3037, %v3040
        %v3042 = vrot.slane %v3041, 4
        %v3044 = vshll.u32 %v2966, 16
        %v3046 = vrot.slane %v3044, 5
        %v3047 = vsel %vm823, %v3042, %v3046
        %v3048 = vshrl.u32 %v2966, 16
        %v3050 = vrot.slane %v3048, 4
        %v3051 = vor.u32 %v3050, %v3046
        %v3052 = vrot.slane %v3051, 4
        %v3054 = vshll.u32 %v2967, 16
        %v3056 = vrot.slane %v3054, 5
        %v3057 = vsel %vm823, %v3052, %v3056
        %v3059 = vshrl.u32 %v2968, 16
        %v3061 = vrot.slane %v3059, 4
        %v3062 = vshll.u32 %v2968, 16
        %v3064 = vrot.slane %v3062, 5
        %v3065 = vor.u32 %v3061, %v3064
        %v3066 = vrot.slane %v3065, 4
        %v3068 = vshll.u32 %v2969, 16
        %v3070 = vrot.slane %v3068, 5
        %v3071 = vsel %vm823, %v3066, %v3070
        %v3072 = vshrl.u32 %v2969, 16
        %v3074 = vrot.slane %v3072, 4
        %v3075 = vor.u32 %v3074, %v3070
        %v3076 = vrot.slane %v3075, 4
        %v3078 = vshll.u32 %v2970, 16
        %v3080 = vrot.slane %v3078, 5
        %v3081 = vsel %vm823, %v3076, %v3080
        %v3083 = vshrl.u32 %v2971, 16
        %v3085 = vrot.slane %v3083, 4
        %v3086 = vshll.u32 %v2971, 16
        %v3088 = vrot.slane %v3086, 5
        %v3089 = vor.u32 %v3085, %v3088
        %v3090 = vrot.slane %v3089, 4
        %v3092 = vshll.u32 %v2972, 16
        %v3094 = vrot.slane %v3092, 5
        %v3095 = vsel %vm823, %v3090, %v3094
        %v3096 = vshrl.u32 %v2972, 16
        %v3098 = vrot.slane %v3096, 4
        %v3099 = vor.u32 %v3098, %v3094
        %v3100 = vrot.slane %v3099, 4
        %v3102 = vshll.u32 %v2973, 16
        %v3104 = vrot.slane %v3102, 5
        %v3105 = vsel %vm823, %v3100, %v3104
        %v3107 = vshrl.u32 %v2974, 16
        %v3109 = vrot.slane %v3107, 4
        %v3110 = vshll.u32 %v2974, 16
        %v3112 = vrot.slane %v3110, 5
        %v3113 = vor.u32 %v3109, %v3112
        %v3114 = vrot.slane %v3113, 4
        %v3116 = vshll.u32 %v2975, 16
        %v3118 = vrot.slane %v3116, 5
        %v3119 = vsel %vm823, %v3114, %v3118
        %v3120 = vshrl.u32 %v2975, 16
        %v3122 = vrot.slane %v3120, 4
        %v3123 = vor.u32 %v3122, %v3118
        %v3124 = vrot.slane %v3123, 4
        %v3126 = vshll.u32 %v2976, 16
        %v3128 = vrot.slane %v3126, 5
        %v3129 = vsel %vm823, %v3124, %v3128
        %v3131 = vshrl.u32 %v2977, 16
        %v3133 = vrot.slane %v3131, 4
        %v3134 = vshll.u32 %v2977, 16
        %v3136 = vrot.slane %v3134, 5
        %v3137 = vor.u32 %v3133, %v3136
        %v3138 = vrot.slane %v3137, 4
        %v3140 = vshll.u32 %v2978, 16
        %v3142 = vrot.slane %v3140, 5
        %v3143 = vsel %vm823, %v3138, %v3142
        %v3144 = vshrl.u32 %v2978, 16
        %v3146 = vrot.slane %v3144, 4
        %v3147 = vor.u32 %v3146, %v3142
        %v3148 = vrot.slane %v3147, 4
        %v3150 = vshll.u32 %v2979, 16
        %v3152 = vrot.slane %v3150, 5
        %v3153 = vsel %vm823, %v3148, %v3152
        %v3155 = vshrl.u32 %v2980, 16
        %v3157 = vrot.slane %v3155, 4
        %v3158 = vshll.u32 %v2980, 16
        %v3160 = vrot.slane %v3158, 5
        %v3161 = vor.u32 %v3157, %v3160
        %v3162 = vrot.slane %v3161, 4
        %v3164 = vshll.u32 %v2981, 16
        %v3166 = vrot.slane %v3164, 5
        %v3167 = vsel %vm823, %v3162, %v3166
        %v3168 = vshrl.u32 %v2981, 16
        %v3170 = vrot.slane %v3168, 4
        %v3171 = vor.u32 %v3170, %v3166
        %v3172 = vrot.slane %v3171, 4
        %v3174 = vshll.u32 %v2982, 16
        %v3176 = vrot.slane %v3174, 5
        %v3177 = vsel %vm823, %v3172, %v3176
        %v3179 = vshrl.u32 %v2983, 16
        %v3181 = vrot.slane %v3179, 4
        %v3182 = vshll.u32 %v2983, 16
        %v3184 = vrot.slane %v3182, 5
        %v3185 = vor.u32 %v3181, %v3184
        %v3186 = vrot.slane %v3185, 4
        %v3188 = vshll.u32 %v2984, 16
        %v3190 = vrot.slane %v3188, 5
        %v3191 = vsel %vm823, %v3186, %v3190
        %v3192 = vshrl.u32 %v2984, 16
        %v3194 = vrot.slane %v3192, 4
        %v3195 = vor.u32 %v3194, %v3190
        %v3196 = vrot.slane %v3195, 4
        %v3198 = vshll.u32 %v2985, 16
        %v3200 = vrot.slane %v3198, 5
        %v3201 = vsel %vm823, %v3196, %v3200
        %v3203 = vshrl.u32 %v2986, 16
        %v3205 = vrot.slane %v3203, 4
        %v3206 = vshll.u32 %v2986, 16
        %v3208 = vrot.slane %v3206, 5
        %v3209 = vor.u32 %v3205, %v3208
        %v3210 = vrot.slane %v3209, 4
        %v3212 = vshll.u32 %v2987, 16
        %v3214 = vrot.slane %v3212, 5
        %v3215 = vsel %vm823, %v3210, %v3214
        %v3216 = vshrl.u32 %v2987, 16
        %v3218 = vrot.slane %v3216, 4
        %v3219 = vor.u32 %v3218, %v3214
        %v3220 = vrot.slane %v3219, 4
        %v3222 = vshll.u32 %v2988, 16
        %v3224 = vrot.slane %v3222, 5
        %v3225 = vsel %vm823, %v3220, %v3224
        %v3227 = vshrl.u32 %v2989, 16
        %v3229 = vrot.slane %v3227, 4
        %v3230 = vshll.u32 %v2989, 16
        %v3232 = vrot.slane %v3230, 5
        %v3233 = vor.u32 %v3229, %v3232
        %v3234 = vrot.slane %v3233, 4
        %v3236 = vshll.u32 %v2990, 16
        %v3238 = vrot.slane %v3236, 5
        %v3239 = vsel %vm823, %v3234, %v3238
        %v3240 = vshrl.u32 %v2990, 16
        %v3242 = vrot.slane %v3240, 4
        %v3243 = vor.u32 %v3242, %v3238
        %v3244 = vrot.slane %v3243, 4
        %v3246 = vshll.u32 %v2991, 16
        %v3248 = vrot.slane %v3246, 5
        %v3249 = vsel %vm823, %v3244, %v3248
        %v3251 = vshrl.u32 %v2992, 16
        %v3253 = vrot.slane %v3251, 4
        %v3254 = vshll.u32 %v2992, 16
        %v3256 = vrot.slane %v3254, 5
        %v3257 = vor.u32 %v3253, %v3256
        %v3258 = vrot.slane %v3257, 4
        %v3260 = vshll.u32 %v2993, 16
        %v3262 = vrot.slane %v3260, 5
        %v3263 = vsel %vm823, %v3258, %v3262
        %v3264 = vshrl.u32 %v2993, 16
        %v3266 = vrot.slane %v3264, 4
        %v3267 = vor.u32 %v3266, %v3262
        %v3268 = vrot.slane %v3267, 4
        %v3270 = vshll.u32 %v2994, 16
        %v3272 = vrot.slane %v3270, 5
        %v3273 = vsel %vm823, %v3268, %v3272
        %v3275 = vshrl.u32 %v2995, 16
        %v3277 = vrot.slane %v3275, 4
        %v3278 = vshll.u32 %v2995, 16
        %v3280 = vrot.slane %v3278, 5
        %v3281 = vor.u32 %v3277, %v3280
        %v3282 = vrot.slane %v3281, 4
        %v3284 = vshll.u32 %v2996, 16
        %v3286 = vrot.slane %v3284, 5
        %v3287 = vsel %vm823, %v3282, %v3286
        %v3288 = vshrl.u32 %v2996, 16
        %v3290 = vrot.slane %v3288, 4
        %v3291 = vor.u32 %v3290, %v3286
        %v3292 = vrot.slane %v3291, 4
        %v3294 = vshll.u32 %v2997, 16
        %v3296 = vrot.slane %v3294, 5
        %v3297 = vsel %vm823, %v3292, %v3296
        %v3299 = vshrl.u32 %v2998, 16
        %v3301 = vrot.slane %v3299, 4
        %v3302 = vshll.u32 %v2998, 16
        %v3304 = vrot.slane %v3302, 5
        %v3305 = vor.u32 %v3301, %v3304
        %v3306 = vrot.slane %v3305, 4
        %v3308 = vshll.u32 %v2999, 16
        %v3310 = vrot.slane %v3308, 5
        %v3311 = vsel %vm823, %v3306, %v3310
        %v3312 = vshrl.u32 %v2999, 16
        %v3314 = vrot.slane %v3312, 4
        %v3315 = vor.u32 %v3314, %v3310
        %v3316 = vrot.slane %v3315, 4
        %v3318 = vshll.u32 %v3000, 16
        %v3320 = vrot.slane %v3318, 5
        %v3321 = vsel %vm823, %v3316, %v3320
        %v3323 = vshrl.u32 %v3001, 16
        %v3325 = vrot.slane %v3323, 4
        %v3326 = vshll.u32 %v3001, 16
        %v3328 = vrot.slane %v3326, 5
        %v3329 = vor.u32 %v3325, %v3328
        %v3330 = vrot.slane %v3329, 4
        %v3332 = vshll.u32 %v3002, 16
        %v3334 = vrot.slane %v3332, 5
        %v3335 = vsel %vm823, %v3330, %v3334
        %v3336 = vshrl.u32 %v3002, 16
        %v3338 = vrot.slane %v3336, 4
        %v3339 = vor.u32 %v3338, %v3334
        %v3340 = vrot.slane %v3339, 4
        %v3342 = vshll.u32 %v3003, 16
        %v3344 = vrot.slane %v3342, 5
        %v3345 = vsel %vm823, %v3340, %v3344
        %v3347 = vshrl.u32 %v3004, 16
        %v3349 = vrot.slane %v3347, 4
        %v3350 = vshll.u32 %v3004, 16
        %v3352 = vrot.slane %v3350, 5
        %v3353 = vor.u32 %v3349, %v3352
        %v3354 = vrot.slane %v3353, 4
        %v3356 = vshll.u32 %v3005, 16
        %v3358 = vrot.slane %v3356, 5
        %v3359 = vsel %vm823, %v3354, %v3358
        %v3360 = vshrl.u32 %v3005, 16
        %v3362 = vrot.slane %v3360, 4
        %v3363 = vor.u32 %v3362, %v3358
        %v3364 = vrot.slane %v3363, 4
        %v3366 = vshll.u32 %v3006, 16
        %v3368 = vrot.slane %v3366, 5
        %v3369 = vsel %vm823, %v3364, %v3368
        %v3371 = vshrl.u32 %v3007, 16
        %v3373 = vrot.slane %v3371, 4
        %v3374 = vshll.u32 %v3007, 16
        %v3376 = vrot.slane %v3374, 5
        %v3377 = vor.u32 %v3373, %v3376
        %v3378 = vrot.slane %v3377, 4
        %v3380 = vshll.u32 %v3008, 16
        %v3382 = vrot.slane %v3380, 5
        %v3383 = vsel %vm823, %v3378, %v3382
        %v3384 = vshrl.u32 %v3008, 16
        %v3386 = vrot.slane %v3384, 4
        %v3387 = vor.u32 %v3386, %v3382
        %v3388 = vrot.slane %v3387, 4
        %v3390 = vshll.u32 %v3009, 16
        %v3392 = vrot.slane %v3390, 5
        %v3393 = vsel %vm823, %v3388, %v3392
        %3394 = vrot.lane.b32.xlu0 %v3023, 56
        %v3395 = vpop.permute.xlu0 %3394
        %3396 = vrot.lane.b32.xlu0 %v3033, 56
        %v3397 = vpop.permute.xlu0 %3396
        %3398 = vrot.lane.b32.xlu0 %v3047, 56
        %v3399 = vpop.permute.xlu0 %3398
        %3400 = vrot.lane.b32.xlu0 %v3057, 56
        %v3401 = vpop.permute.xlu0 %3400
        %3402 = vrot.lane.b32.xlu0 %v3071, 56
        %v3403 = vpop.permute.xlu0 %3402
        %3404 = vrot.lane.b32.xlu0 %v3081, 56
        %v3405 = vpop.permute.xlu0 %3404
        %3406 = vrot.lane.b32.xlu0 %v3095, 56
        %v3407 = vpop.permute.xlu0 %3406
        %3408 = vrot.lane.b32.xlu0 %v3105, 56
        %v3409 = vpop.permute.xlu0 %3408
        %3410 = vrot.lane.b32.xlu0 %v3119, 56
        %v3411 = vpop.permute.xlu0 %3410
        %3412 = vrot.lane.b32.xlu0 %v3129, 56
        %v3413 = vpop.permute.xlu0 %3412
        %3414 = vrot.lane.b32.xlu0 %v3143, 56
        %v3415 = vpop.permute.xlu0 %3414
        %3416 = vrot.lane.b32.xlu0 %v3153, 56
        %v3417 = vpop.permute.xlu0 %3416
        %3418 = vrot.lane.b32.xlu0 %v3167, 56
        %v3419 = vpop.permute.xlu0 %3418
        %3420 = vrot.lane.b32.xlu0 %v3177, 56
        %v3421 = vpop.permute.xlu0 %3420
        %3422 = vrot.lane.b32.xlu0 %v3191, 56
        %v3423 = vpop.permute.xlu0 %3422
        %3424 = vrot.lane.b32.xlu0 %v3201, 56
        %v3425 = vpop.permute.xlu0 %3424
        %3426 = vrot.lane.b32.xlu0 %v3215, 56
        %v3427 = vpop.permute.xlu0 %3426
        %3428 = vrot.lane.b32.xlu0 %v3225, 56
        %v3429 = vpop.permute.xlu0 %3428
        %3430 = vrot.lane.b32.xlu0 %v3239, 56
        %v3431 = vpop.permute.xlu0 %3430
        %3432 = vrot.lane.b32.xlu0 %v3249, 56
        %v3433 = vpop.permute.xlu0 %3432
        %3434 = vrot.lane.b32.xlu0 %v3263, 56
        %v3435 = vpop.permute.xlu0 %3434
        %3436 = vrot.lane.b32.xlu0 %v3273, 56
        %v3437 = vpop.permute.xlu0 %3436
        %3438 = vrot.lane.b32.xlu0 %v3287, 56
        %v3439 = vpop.permute.xlu0 %3438
        %3440 = vrot.lane.b32.xlu0 %v3297, 56
        %v3441 = vpop.permute.xlu0 %3440
        %3442 = vrot.lane.b32.xlu0 %v3311, 56
        %v3443 = vpop.permute.xlu0 %3442
        %3444 = vrot.lane.b32.xlu0 %v3321, 56
        %v3445 = vpop.permute.xlu0 %3444
        %3446 = vrot.lane.b32.xlu0 %v3335, 56
        %v3447 = vpop.permute.xlu0 %3446
        %3448 = vrot.lane.b32.xlu0 %v3345, 56
        %v3449 = vpop.permute.xlu0 %3448
        %3450 = vrot.lane.b32.xlu0 %v3359, 56
        %v3451 = vpop.permute.xlu0 %3450
        %3452 = vrot.lane.b32.xlu0 %v3369, 56
        %v3453 = vpop.permute.xlu0 %3452
        %3454 = vrot.lane.b32.xlu0 %v3383, 56
        %v3455 = vpop.permute.xlu0 %3454
        %3456 = vrot.lane.b32.xlu0 %v3393, 56
        %v3457 = vpop.permute.xlu0 %3456
        %vm3490 = vcmask 519616
        %3491 = vst.msk [vmem:[#allocation3] sm:$0xf] %vm3490, %v3395
        %3492 = vst.msk [vmem:[#allocation3 + $0x4] sm:$0xf] %vm3490, %v3397
        %3493 = vst.msk [vmem:[#allocation3 + $0x8] sm:$0xf] %vm3490, %v3399
        %3494 = vst.msk [vmem:[#allocation3 + $0xc] sm:$0xf] %vm3490, %v3401
        %3495 = vst.msk [vmem:[#allocation3 + $0x10] sm:$0xf] %vm3490, %v3403
        %3496 = vst.msk [vmem:[#allocation3 + $0x14] sm:$0xf] %vm3490, %v3405
        %3497 = vst.msk [vmem:[#allocation3 + $0x18] sm:$0xf] %vm3490, %v3407
        %3498 = vst.msk [vmem:[#allocation3 + $0x1c] sm:$0xf] %vm3490, %v3409
        %3499 = vst.msk [vmem:[#allocation3 + $0x20] sm:$0xf] %vm3490, %v3411
        %3500 = vst.msk [vmem:[#allocation3 + $0x24] sm:$0xf] %vm3490, %v3413
        %3501 = vst.msk [vmem:[#allocation3 + $0x28] sm:$0xf] %vm3490, %v3415
        %3502 = vst.msk [vmem:[#allocation3 + $0x2c] sm:$0xf] %vm3490, %v3417
        %3503 = vst.msk [vmem:[#allocation3 + $0x30] sm:$0xf] %vm3490, %v3419
        %3504 = vst.msk [vmem:[#allocation3 + $0x34] sm:$0xf] %vm3490, %v3421
        %3505 = vst.msk [vmem:[#allocation3 + $0x38] sm:$0xf] %vm3490, %v3423
        %3506 = vst.msk [vmem:[#allocation3 + $0x3c] sm:$0xf] %vm3490, %v3425
        %3507 = vst.msk [vmem:[#allocation3 + $0x40] sm:$0xf] %vm3490, %v3427
        %3508 = vst.msk [vmem:[#allocation3 + $0x44] sm:$0xf] %vm3490, %v3429
        %3509 = vst.msk [vmem:[#allocation3 + $0x48] sm:$0xf] %vm3490, %v3431
        %3510 = vst.msk [vmem:[#allocation3 + $0x4c] sm:$0xf] %vm3490, %v3433
        %3511 = vst.msk [vmem:[#allocation3 + $0x50] sm:$0xf] %vm3490, %v3435
        %3512 = vst.msk [vmem:[#allocation3 + $0x54] sm:$0xf] %vm3490, %v3437
        %3513 = vst.msk [vmem:[#allocation3 + $0x58] sm:$0xf] %vm3490, %v3439
        %3514 = vst.msk [vmem:[#allocation3 + $0x5c] sm:$0xf] %vm3490, %v3441
        %3515 = vst.msk [vmem:[#allocation3 + $0x60] sm:$0xf] %vm3490, %v3443
        %3516 = vst.msk [vmem:[#allocation3 + $0x64] sm:$0xf] %vm3490, %v3445
        %3517 = vst.msk [vmem:[#allocation3 + $0x68] sm:$0xf] %vm3490, %v3447
        %3518 = vst.msk [vmem:[#allocation3 + $0x6c] sm:$0xf] %vm3490, %v3449
        %3519 = vst.msk [vmem:[#allocation3 + $0x70] sm:$0xf] %vm3490, %v3451
        %3520 = vst.msk [vmem:[#allocation3 + $0x74] sm:$0xf] %vm3490, %v3453
        %3521 = vst.msk [vmem:[#allocation3 + $0x78] sm:$0xf] %vm3490, %v3455
        %3522 = vst.msk [vmem:[#allocation3 + $0x7c] sm:$0xf] %vm3490, %v3457
        %v3523 = vld [vmem:[%s2768] sm:$0xe]
        %v3524 = vld [vmem:[%s2768 + $0x4] sm:$0xf]
        %v3525 = vld [vmem:[%s2768 + $0x8] sm:$0x1]
        %v3526 = vld [vmem:[%s2768 + $0xc] sm:$0xe]
        %v3527 = vld [vmem:[%s2768 + $0x10] sm:$0xf]
        %v3528 = vld [vmem:[%s2768 + $0x14] sm:$0x1]
        %v3529 = vld [vmem:[%s2768 + $0x18] sm:$0xe]
        %v3530 = vld [vmem:[%s2768 + $0x1c] sm:$0xf]
        %v3531 = vld [vmem:[%s2768 + $0x20] sm:$0x1]
        %v3532 = vld [vmem:[%s2768 + $0x24] sm:$0xe]
        %v3533 = vld [vmem:[%s2768 + $0x28] sm:$0xf]
        %v3534 = vld [vmem:[%s2768 + $0x2c] sm:$0x1]
        %v3535 = vld [vmem:[%s2768 + $0x30] sm:$0xe]
        %v3536 = vld [vmem:[%s2768 + $0x34] sm:$0xf]
        %v3537 = vld [vmem:[%s2768 + $0x38] sm:$0x1]
        %v3538 = vld [vmem:[%s2768 + $0x3c] sm:$0xe]
        %v3539 = vld [vmem:[%s2768 + $0x40] sm:$0xf]
        %v3540 = vld [vmem:[%s2768 + $0x44] sm:$0x1]
        %v3541 = vld [vmem:[%s2768 + $0x48] sm:$0xe]
        %v3542 = vld [vmem:[%s2768 + $0x4c] sm:$0xf]
        %v3543 = vld [vmem:[%s2768 + $0x50] sm:$0x1]
        %v3544 = vld [vmem:[%s2768 + $0x54] sm:$0xe]
        %v3545 = vld [vmem:[%s2768 + $0x58] sm:$0xf]
        %v3546 = vld [vmem:[%s2768 + $0x5c] sm:$0x1]
        %v3547 = vld [vmem:[%s2768 + $0x60] sm:$0xe]
        %v3548 = vld [vmem:[%s2768 + $0x64] sm:$0xf]
        %v3549 = vld [vmem:[%s2768 + $0x68] sm:$0x1]
        %v3550 = vld [vmem:[%s2768 + $0x6c] sm:$0xe]
        %v3551 = vld [vmem:[%s2768 + $0x70] sm:$0xf]
        %v3552 = vld [vmem:[%s2768 + $0x74] sm:$0x1]
        %v3553 = vld [vmem:[%s2768 + $0x78] sm:$0xe]
        %v3554 = vld [vmem:[%s2768 + $0x7c] sm:$0xf]
        %v3555 = vld [vmem:[%s2768 + $0x80] sm:$0x1]
        %v3556 = vld [vmem:[%s2768 + $0x84] sm:$0xe]
        %v3557 = vld [vmem:[%s2768 + $0x88] sm:$0xf]
        %v3558 = vld [vmem:[%s2768 + $0x8c] sm:$0x1]
        %v3559 = vld [vmem:[%s2768 + $0x90] sm:$0xe]
        %v3560 = vld [vmem:[%s2768 + $0x94] sm:$0xf]
        %v3561 = vld [vmem:[%s2768 + $0x98] sm:$0x1]
        %v3562 = vld [vmem:[%s2768 + $0x9c] sm:$0xe]
        %v3563 = vld [vmem:[%s2768 + $0xa0] sm:$0xf]
        %v3564 = vld [vmem:[%s2768 + $0xa4] sm:$0x1]
        %v3565 = vld [vmem:[%s2768 + $0xa8] sm:$0xe]
        %v3566 = vld [vmem:[%s2768 + $0xac] sm:$0xf]
        %v3567 = vld [vmem:[%s2768 + $0xb0] sm:$0x1]
        %v3568 = vld [vmem:[%s2768 + $0xb4] sm:$0xe]
        %v3569 = vld [vmem:[%s2768 + $0xb8] sm:$0xf]
        %v3570 = vld [vmem:[%s2768 + $0xbc] sm:$0x1]
        %v3619 = vrot.slane %v3523, 5
        %v3620 = vrot.slane %v3619, 4
        %v3621 = vrot.slane %v3524, 5
        %v3622 = vsel %vm1435, %v3620, %v3621
        %v3623 = vrot.slane %v3621, 4
        %v3624 = vrot.slane %v3525, 5
        %v3625 = vsel %vm1435, %v3623, %v3624
        %v3626 = vrot.slane %v3526, 5
        %v3627 = vrot.slane %v3626, 4
        %v3628 = vrot.slane %v3527, 5
        %v3629 = vsel %vm1435, %v3627, %v3628
        %v3630 = vrot.slane %v3628, 4
        %v3631 = vrot.slane %v3528, 5
        %v3632 = vsel %vm1435, %v3630, %v3631
        %v3633 = vrot.slane %v3529, 5
        %v3634 = vrot.slane %v3633, 4
        %v3635 = vrot.slane %v3530, 5
        %v3636 = vsel %vm1435, %v3634, %v3635
        %v3637 = vrot.slane %v3635, 4
        %v3638 = vrot.slane %v3531, 5
        %v3639 = vsel %vm1435, %v3637, %v3638
        %v3640 = vrot.slane %v3532, 5
        %v3641 = vrot.slane %v3640, 4
        %v3642 = vrot.slane %v3533, 5
        %v3643 = vsel %vm1435, %v3641, %v3642
        %v3644 = vrot.slane %v3642, 4
        %v3645 = vrot.slane %v3534, 5
        %v3646 = vsel %vm1435, %v3644, %v3645
        %v3647 = vrot.slane %v3535, 5
        %v3648 = vrot.slane %v3647, 4
        %v3649 = vrot.slane %v3536, 5
        %v3650 = vsel %vm1435, %v3648, %v3649
        %v3651 = vrot.slane %v3649, 4
        %v3652 = vrot.slane %v3537, 5
        %v3653 = vsel %vm1435, %v3651, %v3652
        %v3654 = vrot.slane %v3538, 5
        %v3655 = vrot.slane %v3654, 4
        %v3656 = vrot.slane %v3539, 5
        %v3657 = vsel %vm1435, %v3655, %v3656
        %v3658 = vrot.slane %v3656, 4
        %v3659 = vrot.slane %v3540, 5
        %v3660 = vsel %vm1435, %v3658, %v3659
        %v3661 = vrot.slane %v3541, 5
        %v3662 = vrot.slane %v3661, 4
        %v3663 = vrot.slane %v3542, 5
        %v3664 = vsel %vm1435, %v3662, %v3663
        %v3665 = vrot.slane %v3663, 4
        %v3666 = vrot.slane %v3543, 5
        %v3667 = vsel %vm1435, %v3665, %v3666
        %v3668 = vrot.slane %v3544, 5
        %v3669 = vrot.slane %v3668, 4
        %v3670 = vrot.slane %v3545, 5
        %v3671 = vsel %vm1435, %v3669, %v3670
        %v3672 = vrot.slane %v3670, 4
        %v3673 = vrot.slane %v3546, 5
        %v3674 = vsel %vm1435, %v3672, %v3673
        %v3675 = vrot.slane %v3547, 5
        %v3676 = vrot.slane %v3675, 4
        %v3677 = vrot.slane %v3548, 5
        %v3678 = vsel %vm1435, %v3676, %v3677
        %v3679 = vrot.slane %v3677, 4
        %v3680 = vrot.slane %v3549, 5
        %v3681 = vsel %vm1435, %v3679, %v3680
        %v3682 = vrot.slane %v3550, 5
        %v3683 = vrot.slane %v3682, 4
        %v3684 = vrot.slane %v3551, 5
        %v3685 = vsel %vm1435, %v3683, %v3684
        %v3686 = vrot.slane %v3684, 4
        %v3687 = vrot.slane %v3552, 5
        %v3688 = vsel %vm1435, %v3686, %v3687
        %v3689 = vrot.slane %v3553, 5
        %v3690 = vrot.slane %v3689, 4
        %v3691 = vrot.slane %v3554, 5
        %v3692 = vsel %vm1435, %v3690, %v3691
        %v3693 = vrot.slane %v3691, 4
        %v3694 = vrot.slane %v3555, 5
        %v3695 = vsel %vm1435, %v3693, %v3694
        %v3696 = vrot.slane %v3556, 5
        %v3697 = vrot.slane %v3696, 4
        %v3698 = vrot.slane %v3557, 5
        %v3699 = vsel %vm1435, %v3697, %v3698
        %v3700 = vrot.slane %v3698, 4
        %v3701 = vrot.slane %v3558, 5
        %v3702 = vsel %vm1435, %v3700, %v3701
        %v3703 = vrot.slane %v3559, 5
        %v3704 = vrot.slane %v3703, 4
        %v3705 = vrot.slane %v3560, 5
        %v3706 = vsel %vm1435, %v3704, %v3705
        %v3707 = vrot.slane %v3705, 4
        %v3708 = vrot.slane %v3561, 5
        %v3709 = vsel %vm1435, %v3707, %v3708
        %v3710 = vrot.slane %v3562, 5
        %v3711 = vrot.slane %v3710, 4
        %v3712 = vrot.slane %v3563, 5
        %v3713 = vsel %vm1435, %v3711, %v3712
        %v3714 = vrot.slane %v3712, 4
        %v3715 = vrot.slane %v3564, 5
        %v3716 = vsel %vm1435, %v3714, %v3715
        %v3717 = vrot.slane %v3565, 5
        %v3718 = vrot.slane %v3717, 4
        %v3719 = vrot.slane %v3566, 5
        %v3720 = vsel %vm1435, %v3718, %v3719
        %v3721 = vrot.slane %v3719, 4
        %v3722 = vrot.slane %v3567, 5
        %v3723 = vsel %vm1435, %v3721, %v3722
        %v3724 = vrot.slane %v3568, 5
        %v3725 = vrot.slane %v3724, 4
        %v3726 = vrot.slane %v3569, 5
        %v3727 = vsel %vm1435, %v3725, %v3726
        %v3728 = vrot.slane %v3726, 4
        %v3729 = vrot.slane %v3570, 5
        %v3730 = vsel %vm1435, %v3728, %v3729
        %3731 = vrot.lane.b32.xlu0 %v3622, 64
        %v3732 = vpop.permute.xlu0 %3731
        %3733 = vrot.lane.b32.xlu0 %v3625, 64
        %v3734 = vpop.permute.xlu0 %3733
        %3735 = vrot.lane.b32.xlu0 %v3629, 64
        %v3736 = vpop.permute.xlu0 %3735
        %3737 = vrot.lane.b32.xlu0 %v3632, 64
        %v3738 = vpop.permute.xlu0 %3737
        %3739 = vrot.lane.b32.xlu0 %v3636, 64
        %v3740 = vpop.permute.xlu0 %3739
        %3741 = vrot.lane.b32.xlu0 %v3639, 64
        %v3742 = vpop.permute.xlu0 %3741
        %3743 = vrot.lane.b32.xlu0 %v3643, 64
        %v3744 = vpop.permute.xlu0 %3743
        %3745 = vrot.lane.b32.xlu0 %v3646, 64
        %v3746 = vpop.permute.xlu0 %3745
        %3747 = vrot.lane.b32.xlu0 %v3650, 64
        %v3748 = vpop.permute.xlu0 %3747
        %3749 = vrot.lane.b32.xlu0 %v3653, 64
        %v3750 = vpop.permute.xlu0 %3749
        %3751 = vrot.lane.b32.xlu0 %v3657, 64
        %v3752 = vpop.permute.xlu0 %3751
        %3753 = vrot.lane.b32.xlu0 %v3660, 64
        %v3754 = vpop.permute.xlu0 %3753
        %3755 = vrot.lane.b32.xlu0 %v3664, 64
        %v3756 = vpop.permute.xlu0 %3755
        %3757 = vrot.lane.b32.xlu0 %v3667, 64
        %v3758 = vpop.permute.xlu0 %3757
        %3759 = vrot.lane.b32.xlu0 %v3671, 64
        %v3760 = vpop.permute.xlu0 %3759
        %3761 = vrot.lane.b32.xlu0 %v3674, 64
        %v3762 = vpop.permute.xlu0 %3761
        %3763 = vrot.lane.b32.xlu0 %v3678, 64
        %v3764 = vpop.permute.xlu0 %3763
        %3765 = vrot.lane.b32.xlu0 %v3681, 64
        %v3766 = vpop.permute.xlu0 %3765
        %3767 = vrot.lane.b32.xlu0 %v3685, 64
        %v3768 = vpop.permute.xlu0 %3767
        %3769 = vrot.lane.b32.xlu0 %v3688, 64
        %v3770 = vpop.permute.xlu0 %3769
        %3771 = vrot.lane.b32.xlu0 %v3692, 64
        %v3772 = vpop.permute.xlu0 %3771
        %3773 = vrot.lane.b32.xlu0 %v3695, 64
        %v3774 = vpop.permute.xlu0 %3773
        %3775 = vrot.lane.b32.xlu0 %v3699, 64
        %v3776 = vpop.permute.xlu0 %3775
        %3777 = vrot.lane.b32.xlu0 %v3702, 64
        %v3778 = vpop.permute.xlu0 %3777
        %3779 = vrot.lane.b32.xlu0 %v3706, 64
        %v3780 = vpop.permute.xlu0 %3779
        %3781 = vrot.lane.b32.xlu0 %v3709, 64
        %v3782 = vpop.permute.xlu0 %3781
        %3783 = vrot.lane.b32.xlu0 %v3713, 64
        %v3784 = vpop.permute.xlu0 %3783
        %3785 = vrot.lane.b32.xlu0 %v3716, 64
        %v3786 = vpop.permute.xlu0 %3785
        %3787 = vrot.lane.b32.xlu0 %v3720, 64
        %v3788 = vpop.permute.xlu0 %3787
        %3789 = vrot.lane.b32.xlu0 %v3723, 64
        %v3790 = vpop.permute.xlu0 %3789
        %3791 = vrot.lane.b32.xlu0 %v3727, 64
        %v3792 = vpop.permute.xlu0 %3791
        %3793 = vrot.lane.b32.xlu0 %v3730, 64
        %v3794 = vpop.permute.xlu0 %3793
        %vm3827 = vcmask 585216
        %3828 = vst.msk [vmem:[#allocation3] sm:$0xf] %vm3827, %v3732
        %3829 = vst.msk [vmem:[#allocation3 + $0x4] sm:$0xf] %vm3827, %v3734
        %3830 = vst.msk [vmem:[#allocation3 + $0x8] sm:$0xf] %vm3827, %v3736
        %3831 = vst.msk [vmem:[#allocation3 + $0xc] sm:$0xf] %vm3827, %v3738
        %3832 = vst.msk [vmem:[#allocation3 + $0x10] sm:$0xf] %vm3827, %v3740
        %3833 = vst.msk [vmem:[#allocation3 + $0x14] sm:$0xf] %vm3827, %v3742
        %3834 = vst.msk [vmem:[#allocation3 + $0x18] sm:$0xf] %vm3827, %v3744
        %3835 = vst.msk [vmem:[#allocation3 + $0x1c] sm:$0xf] %vm3827, %v3746
        %3836 = vst.msk [vmem:[#allocation3 + $0x20] sm:$0xf] %vm3827, %v3748
        %3837 = vst.msk [vmem:[#allocation3 + $0x24] sm:$0xf] %vm3827, %v3750
        %3838 = vst.msk [vmem:[#allocation3 + $0x28] sm:$0xf] %vm3827, %v3752
        %3839 = vst.msk [vmem:[#allocation3 + $0x2c] sm:$0xf] %vm3827, %v3754
        %3840 = vst.msk [vmem:[#allocation3 + $0x30] sm:$0xf] %vm3827, %v3756
        %3841 = vst.msk [vmem:[#allocation3 + $0x34] sm:$0xf] %vm3827, %v3758
        %3842 = vst.msk [vmem:[#allocation3 + $0x38] sm:$0xf] %vm3827, %v3760
        %3843 = vst.msk [vmem:[#allocation3 + $0x3c] sm:$0xf] %vm3827, %v3762
        %3844 = vst.msk [vmem:[#allocation3 + $0x40] sm:$0xf] %vm3827, %v3764
        %3845 = vst.msk [vmem:[#allocation3 + $0x44] sm:$0xf] %vm3827, %v3766
        %3846 = vst.msk [vmem:[#allocation3 + $0x48] sm:$0xf] %vm3827, %v3768
        %3847 = vst.msk [vmem:[#allocation3 + $0x4c] sm:$0xf] %vm3827, %v3770
        %3848 = vst.msk [vmem:[#allocation3 + $0x50] sm:$0xf] %vm3827, %v3772
        %3849 = vst.msk [vmem:[#allocation3 + $0x54] sm:$0xf] %vm3827, %v3774
        %3850 = vst.msk [vmem:[#allocation3 + $0x58] sm:$0xf] %vm3827, %v3776
        %3851 = vst.msk [vmem:[#allocation3 + $0x5c] sm:$0xf] %vm3827, %v3778
        %3852 = vst.msk [vmem:[#allocation3 + $0x60] sm:$0xf] %vm3827, %v3780
        %3853 = vst.msk [vmem:[#allocation3 + $0x64] sm:$0xf] %vm3827, %v3782
        %3854 = vst.msk [vmem:[#allocation3 + $0x68] sm:$0xf] %vm3827, %v3784
        %3855 = vst.msk [vmem:[#allocation3 + $0x6c] sm:$0xf] %vm3827, %v3786
        %3856 = vst.msk [vmem:[#allocation3 + $0x70] sm:$0xf] %vm3827, %v3788
        %3857 = vst.msk [vmem:[#allocation3 + $0x74] sm:$0xf] %vm3827, %v3790
        %3858 = vst.msk [vmem:[#allocation3 + $0x78] sm:$0xf] %vm3827, %v3792
        %3859 = vst.msk [vmem:[#allocation3 + $0x7c] sm:$0xf] %vm3827, %v3794
        %v3860 = vld [vmem:[#allocation3] sm:$0xf]
        %v3861 = vld [vmem:[#allocation3 + $0x4] sm:$0xf]
        %v3862 = vld [vmem:[#allocation3 + $0x8] sm:$0xf]
        %v3863 = vld [vmem:[#allocation3 + $0xc] sm:$0xf]
        %v3864 = vld [vmem:[#allocation3 + $0x10] sm:$0xf]
        %v3865 = vld [vmem:[#allocation3 + $0x14] sm:$0xf]
        %v3866 = vld [vmem:[#allocation3 + $0x18] sm:$0xf]
        %v3867 = vld [vmem:[#allocation3 + $0x1c] sm:$0xf]
        %v3868 = vld [vmem:[#allocation3 + $0x20] sm:$0xf]
        %v3869 = vld [vmem:[#allocation3 + $0x24] sm:$0xf]
        %v3870 = vld [vmem:[#allocation3 + $0x28] sm:$0xf]
        %v3871 = vld [vmem:[#allocation3 + $0x2c] sm:$0xf]
        %v3872 = vld [vmem:[#allocation3 + $0x30] sm:$0xf]
        %v3873 = vld [vmem:[#allocation3 + $0x34] sm:$0xf]
        %v3874 = vld [vmem:[#allocation3 + $0x38] sm:$0xf]
        %v3875 = vld [vmem:[#allocation3 + $0x3c] sm:$0xf]
        %v3877 = vperm.slane %v708, 0
        %v3895 = vunpack.c.l.b16 %v3860
        %v3896 = vunpack.c.l.b16 %v3861
        %v3897 = vunpack.c.l.b16 %v3862
        %v3898 = vunpack.c.l.b16 %v3863
        %v3899 = vunpack.c.l.b16 %v3864
        %v3900 = vunpack.c.l.b16 %v3865
        %v3901 = vunpack.c.l.b16 %v3866
        %v3902 = vunpack.c.l.b16 %v3867
        %v3903 = vunpack.c.l.b16 %v3868
        %v3904 = vunpack.c.l.b16 %v3869
        %v3905 = vunpack.c.l.b16 %v3870
        %v3906 = vunpack.c.l.b16 %v3871
        %v3907 = vunpack.c.l.b16 %v3872
        %v3908 = vunpack.c.l.b16 %v3873
        %v3909 = vunpack.c.l.b16 %v3874
        %v3910 = vunpack.c.l.b16 %v3875
        %v3911 = vpack.c.b16 %v3896, %v3895
        %v3912 = vpack.c.b16 %v3898, %v3897
        %v3913 = vpack.c.b16 %v3900, %v3899
        %v3914 = vpack.c.b16 %v3902, %v3901
        %v3915 = vpack.c.b16 %v3904, %v3903
        %v3916 = vpack.c.b16 %v3906, %v3905
        %v3917 = vpack.c.b16 %v3908, %v3907
        %v3918 = vpack.c.b16 %v3910, %v3909
        %v3928 = vunpack.c.l.b16 %v699
        %v3929 = vunpack.c.l.b16 %v700
        %v3930 = vunpack.c.l.b16 %v701
        %v3931 = vunpack.c.l.b16 %v702
        %v3932 = vunpack.c.l.b16 %v703
        %v3933 = vunpack.c.l.b16 %v704
        %v3934 = vunpack.c.l.b16 %v705
        %v3935 = vunpack.c.l.b16 %v706
        %v3936 = vunpack.c.l.b16 %v707
        %v3937 = vpack.c.b16 %v3929, %v3928
        %v3938 = vpack.c.b16 %v3931, %v3930
        %v3939 = vpack.c.b16 %v3933, %v3932
        %v3940 = vpack.c.b16 %v3935, %v3934
        %v3941 = vpack.c.b16 %v3936, %v3936
        %vm3946 = vcmask 588800
        %v3948 = vsel %vm3946, %v3911, 0
        %v3951 = vsel %vm3946, %v3912, 0
        %v3954 = vsel %vm3946, %v3913, 0
        %v3957 = vsel %vm3946, %v3914, 0
        %v3960 = vsel %vm3946, %v3915, 0
        %v3963 = vsel %vm3946, %v3916, 0
        %v3966 = vsel %vm3946, %v3917, 0
        %v3969 = vsel %vm3946, %v3918, 0
        %vm3971 = vcmask 1043456
        %v3973 = vsel %vm3971, %v3941, 0
        %3975 = vmatpush.bf16.msra.mxu0 0
        %3976 = vmatpush.bf16.msra.mxu0 0
        %3977 = vmatpush.bf16.msra.mxu0 0
        %3978 = vmatpush.bf16.msra.mxu0 %v3973
        %3979 = vmatpush.bf16.msra.mxu0 %v3940
        %3980 = vmatpush.bf16.msra.mxu0 %v3939
        %3981 = vmatpush.bf16.msra.mxu0 %v3938
        %3982 = vmatpush.bf16.msra.mxu0 %v3937
        %3983 = vmatmul.bf16.gmra.mxu0 %v3948
        %v3984 = vpop.f32.mrf.mxu0
        %v3985 = vadd.f32 %v3877, %v3984
        %v3986 = vpop.f32.mrf.mxu0
        %v3987 = vadd.f32 %v3877, %v3986
        %3988 = vmatmul.bf16.gmra.mxu0 %v3951
        %v3989 = vpop.f32.mrf.mxu0
        %v3990 = vadd.f32 %v3877, %v3989
        %v3991 = vpop.f32.mrf.mxu0
        %v3992 = vadd.f32 %v3877, %v3991
        %3993 = vmatmul.bf16.gmra.mxu0 %v3954
        %v3994 = vpop.f32.mrf.mxu0
        %v3995 = vadd.f32 %v3877, %v3994
        %v3996 = vpop.f32.mrf.mxu0
        %v3997 = vadd.f32 %v3877, %v3996
        %3998 = vmatmul.bf16.gmra.mxu0 %v3957
        %v3999 = vpop.f32.mrf.mxu0
        %v4000 = vadd.f32 %v3877, %v3999
        %v4001 = vpop.f32.mrf.mxu0
        %v4002 = vadd.f32 %v3877, %v4001
        %4003 = vmatmul.bf16.gmra.mxu0 %v3960
        %v4004 = vpop.f32.mrf.mxu0
        %v4005 = vadd.f32 %v3877, %v4004
        %v4006 = vpop.f32.mrf.mxu0
        %v4007 = vadd.f32 %v3877, %v4006
        %4008 = vmatmul.bf16.gmra.mxu0 %v3963
        %v4009 = vpop.f32.mrf.mxu0
        %v4010 = vadd.f32 %v3877, %v4009
        %v4011 = vpop.f32.mrf.mxu0
        %v4012 = vadd.f32 %v3877, %v4011
        %4013 = vmatmul.bf16.gmra.mxu0 %v3966
        %v4014 = vpop.f32.mrf.mxu0
        %v4015 = vadd.f32 %v3877, %v4014
        %v4016 = vpop.f32.mrf.mxu0
        %v4017 = vadd.f32 %v3877, %v4016
        %4018 = vmatmul.bf16.gmra.mxu0 %v3969
        %v4019 = vpop.f32.mrf.mxu0
        %v4020 = vadd.f32 %v3877, %v4019
        %v4021 = vpop.f32.mrf.mxu0
        %v4022 = vadd.f32 %v3877, %v4021
        %4023 = vdwg.mxu0
        %v4024 = vmax.f32 %v3985, 0.0
        %v4025 = vmax.f32 %v3987, 0.0
        %v4026 = vmax.f32 %v3990, 0.0
        %v4027 = vmax.f32 %v3992, 0.0
        %v4028 = vmax.f32 %v3995, 0.0
        %v4029 = vmax.f32 %v3997, 0.0
        %v4030 = vmax.f32 %v4000, 0.0
        %v4031 = vmax.f32 %v4002, 0.0
        %v4032 = vmax.f32 %v4005, 0.0
        %v4033 = vmax.f32 %v4007, 0.0
        %v4034 = vmax.f32 %v4010, 0.0
        %v4035 = vmax.f32 %v4012, 0.0
        %v4036 = vmax.f32 %v4015, 0.0
        %v4037 = vmax.f32 %v4017, 0.0
        %v4038 = vmax.f32 %v4020, 0.0
        %v4039 = vmax.f32 %v4022, 0.0
        %v4040 = vadd.f32 %v4024, %v4025
        %v4041 = vadd.f32 %v4040, %v4026
        %v4042 = vadd.f32 %v4041, %v4027
        %v4043 = vadd.f32 %v4042, %v4028
        %v4044 = vadd.f32 %v4043, %v4029
        %v4045 = vadd.f32 %v4044, %v4030
        %v4046 = vadd.f32 %v4045, %v4031
        %v4047 = vadd.f32 %v4046, %v4032
        %v4048 = vadd.f32 %v4047, %v4033
        %v4049 = vadd.f32 %v4048, %v4034
        %v4050 = vadd.f32 %v4049, %v4035
        %v4051 = vadd.f32 %v4050, %v4036
        %v4052 = vadd.f32 %v4051, %v4037
        %v4053 = vadd.f32 %v4052, %v4038
        %v4054 = vadd.f32 %v4053, %v4039
        %v4055 = vrot.slane %v4054, 4
        %v4056 = vadd.f32 %v4054, %v4055
        %v4057 = vrot.slane %v4056, 2
        %v4058 = vadd.f32 %v4056, %v4057
        %v4059 = vrot.slane %v4058, 1
        %v4060 = vadd.f32 %v4058, %v4059
        %v4061 = vadd.f32 %v4060, 0.0
        %s4062 = scalar_lea.vmem [#allocation3], 64
        %v4063 = vld [vmem:[%s4062] sm:$0xf]
        %v4064 = vld [vmem:[%s4062 + $0x4] sm:$0xf]
        %v4065 = vld [vmem:[%s4062 + $0x8] sm:$0xf]
        %v4066 = vld [vmem:[%s4062 + $0xc] sm:$0xf]
        %v4067 = vld [vmem:[%s4062 + $0x10] sm:$0xf]
        %v4068 = vld [vmem:[%s4062 + $0x14] sm:$0xf]
        %v4069 = vld [vmem:[%s4062 + $0x18] sm:$0xf]
        %v4070 = vld [vmem:[%s4062 + $0x1c] sm:$0xf]
        %v4071 = vld [vmem:[%s4062 + $0x20] sm:$0xf]
        %v4072 = vld [vmem:[%s4062 + $0x24] sm:$0xf]
        %v4073 = vld [vmem:[%s4062 + $0x28] sm:$0xf]
        %v4074 = vld [vmem:[%s4062 + $0x2c] sm:$0xf]
        %v4075 = vld [vmem:[%s4062 + $0x30] sm:$0xf]
        %v4076 = vld [vmem:[%s4062 + $0x34] sm:$0xf]
        %v4077 = vld [vmem:[%s4062 + $0x38] sm:$0xf]
        %v4078 = vld [vmem:[%s4062 + $0x3c] sm:$0xf]
        %v4095 = vunpack.c.l.b16 %v4063
        %v4096 = vunpack.c.l.b16 %v4064
        %v4097 = vunpack.c.l.b16 %v4065
        %v4098 = vunpack.c.l.b16 %v4066
        %v4099 = vunpack.c.l.b16 %v4067
        %v4100 = vunpack.c.l.b16 %v4068
        %v4101 = vunpack.c.l.b16 %v4069
        %v4102 = vunpack.c.l.b16 %v4070
        %v4103 = vunpack.c.l.b16 %v4071
        %v4104 = vunpack.c.l.b16 %v4072
        %v4105 = vunpack.c.l.b16 %v4073
        %v4106 = vunpack.c.l.b16 %v4074
        %v4107 = vunpack.c.l.b16 %v4075
        %v4108 = vunpack.c.l.b16 %v4076
        %v4109 = vunpack.c.l.b16 %v4077
        %v4110 = vunpack.c.l.b16 %v4078
        %v4111 = vpack.c.b16 %v4096, %v4095
        %v4112 = vpack.c.b16 %v4098, %v4097
        %v4113 = vpack.c.b16 %v4100, %v4099
        %v4114 = vpack.c.b16 %v4102, %v4101
        %v4115 = vpack.c.b16 %v4104, %v4103
        %v4116 = vpack.c.b16 %v4106, %v4105
        %v4117 = vpack.c.b16 %v4108, %v4107
        %v4118 = vpack.c.b16 %v4110, %v4109
        %v4120 = vsel %vm3946, %v4111, 0
        %v4123 = vsel %vm3946, %v4112, 0
        %v4126 = vsel %vm3946, %v4113, 0
        %v4129 = vsel %vm3946, %v4114, 0
        %v4132 = vsel %vm3946, %v4115, 0
        %v4135 = vsel %vm3946, %v4116, 0
        %v4138 = vsel %vm3946, %v4117, 0
        %v4141 = vsel %vm3946, %v4118, 0
        %4143 = vmatpush.bf16.msra.mxu0 0
        %4144 = vmatpush.bf16.msra.mxu0 0
        %4145 = vmatpush.bf16.msra.mxu0 0
        %4146 = vmatpush.bf16.msra.mxu0 %v3973
        %4147 = vmatpush.bf16.msra.mxu0 %v3940
        %4148 = vmatpush.bf16.msra.mxu0 %v3939
        %4149 = vmatpush.bf16.msra.mxu0 %v3938
        %4150 = vmatpush.bf16.msra.mxu0 %v3937
        %4151 = vmatmul.bf16.gmra.mxu0 %v4120
        %v4152 = vpop.f32.mrf.mxu0
        %v4153 = vadd.f32 %v3877, %v4152
        %v4154 = vpop.f32.mrf.mxu0
        %v4155 = vadd.f32 %v3877, %v4154
        %4156 = vmatmul.bf16.gmra.mxu0 %v4123
        %v4157 = vpop.f32.mrf.mxu0
        %v4158 = vadd.f32 %v3877, %v4157
        %v4159 = vpop.f32.mrf.mxu0
        %v4160 = vadd.f32 %v3877, %v4159
        %4161 = vmatmul.bf16.gmra.mxu0 %v4126
        %v4162 = vpop.f32.mrf.mxu0
        %v4163 = vadd.f32 %v3877, %v4162
        %v4164 = vpop.f32.mrf.mxu0
        %v4165 = vadd.f32 %v3877, %v4164
        %4166 = vmatmul.bf16.gmra.mxu0 %v4129
        %v4167 = vpop.f32.mrf.mxu0
        %v4168 = vadd.f32 %v3877, %v4167
        %v4169 = vpop.f32.mrf.mxu0
        %v4170 = vadd.f32 %v3877, %v4169
        %4171 = vmatmul.bf16.gmra.mxu0 %v4132
        %v4172 = vpop.f32.mrf.mxu0
        %v4173 = vadd.f32 %v3877, %v4172
        %v4174 = vpop.f32.mrf.mxu0
        %v4175 = vadd.f32 %v3877, %v4174
        %4176 = vmatmul.bf16.gmra.mxu0 %v4135
        %v4177 = vpop.f32.mrf.mxu0
        %v4178 = vadd.f32 %v3877, %v4177
        %v4179 = vpop.f32.mrf.mxu0
        %v4180 = vadd.f32 %v3877, %v4179
        %4181 = vmatmul.bf16.gmra.mxu0 %v4138
        %v4182 = vpop.f32.mrf.mxu0
        %v4183 = vadd.f32 %v3877, %v4182
        %v4184 = vpop.f32.mrf.mxu0
        %v4185 = vadd.f32 %v3877, %v4184
        %4186 = vmatmul.bf16.gmra.mxu0 %v4141
        %v4187 = vpop.f32.mrf.mxu0
        %v4188 = vadd.f32 %v3877, %v4187
        %v4189 = vpop.f32.mrf.mxu0
        %v4190 = vadd.f32 %v3877, %v4189
        %4191 = vdwg.mxu0
        %v4192 = vmax.f32 %v4153, 0.0
        %v4193 = vmax.f32 %v4155, 0.0
        %v4194 = vmax.f32 %v4158, 0.0
        %v4195 = vmax.f32 %v4160, 0.0
        %v4196 = vmax.f32 %v4163, 0.0
        %v4197 = vmax.f32 %v4165, 0.0
        %v4198 = vmax.f32 %v4168, 0.0
        %v4199 = vmax.f32 %v4170, 0.0
        %v4200 = vmax.f32 %v4173, 0.0
        %v4201 = vmax.f32 %v4175, 0.0
        %v4202 = vmax.f32 %v4178, 0.0
        %v4203 = vmax.f32 %v4180, 0.0
        %v4204 = vmax.f32 %v4183, 0.0
        %v4205 = vmax.f32 %v4185, 0.0
        %v4206 = vmax.f32 %v4188, 0.0
        %v4207 = vmax.f32 %v4190, 0.0
        %v4208 = vadd.f32 %v4192, %v4193
        %v4209 = vadd.f32 %v4208, %v4194
        %v4210 = vadd.f32 %v4209, %v4195
        %v4211 = vadd.f32 %v4210, %v4196
        %v4212 = vadd.f32 %v4211, %v4197
        %v4213 = vadd.f32 %v4212, %v4198
        %v4214 = vadd.f32 %v4213, %v4199
        %v4215 = vadd.f32 %v4214, %v4200
        %v4216 = vadd.f32 %v4215, %v4201
        %v4217 = vadd.f32 %v4216, %v4202
        %v4218 = vadd.f32 %v4217, %v4203
        %v4219 = vadd.f32 %v4218, %v4204
        %v4220 = vadd.f32 %v4219, %v4205
        %v4221 = vadd.f32 %v4220, %v4206
        %v4222 = vadd.f32 %v4221, %v4207
        %v4223 = vrot.slane %v4222, 4
        %v4224 = vadd.f32 %v4222, %v4223
        %v4225 = vrot.slane %v4224, 2
        %v4226 = vadd.f32 %v4224, %v4225
        %v4227 = vrot.slane %v4226, 1
        %v4228 = vadd.f32 %v4226, %v4227
        %v4229 = vadd.f32 %v4061, %v4228
        %4230 = vst [vmem:[#allocation4] sm:$0x1] %v4229
        %v4231 = vld [vmem:[#allocation4] sm:$0x1]
        %v4232 = vmul.f32 %v4231, %v4231
        %vm4233 = vcmask 1040384
        %v4234 = vsel %vm4233, %v4232, 0.0
        %4235 = vadd.xlane.f32.xlu0 %v4234
        %v4236 = vpop.xlane.xlu0 %4235
        %v4237 = vmax.f32 %v4236, 6.5536e-20
        %v4238 = vrsqrt.pop %v4237
        %v4239 = vmul.f32 %v4238, %v4237
        %v4240 = vmul.f32 %v4239, %v4238
        %v4241 = vmul.f32 0.5, %v4240
        %v4242 = vsub.f32 1.5, %v4241
        %v4243 = vmul.f32 %v4238, %v4242
        %vm4244 = vweird.f32 %v4237
        %vm4245 = vweird.f32 %v4238
        %vm4246 = vmor %vm4244, %vm4245
        %v4247 = vsel %vm4246, %v4238, %v4243
        %v4248 = vmul.f32 %v4231, %v4247
        %4249 = vst [vmem:[%s162] sm:$0x1] %v4248
        %s4250 = sand.u32 %s93, 1
        %s4251 = scalar_lea.sflag [#allocation6], %s4250
        %s4252 = sand.u32 %s93, 1
        %s4253 = scalar_lea.vmem [#allocation5], %s4252
        // Predicated region
        $region33: #{embedding_net_l2.1} parent=31 // pred_check
          %p4254 = pneg %p103
        $region34: #{embedding_net_l2.1} parent=31 // pred_check_branch
          %4256 = sbr.rel (%p4254) target = $region36
        $region35: #{embedding_net_l2.1} parent=31 // pred_region
          %4258 = vsyncadd %s4251, 0
          %s4259 = scalar_lea.hbm %s3, %s17
          %s4261 = sshll.u32 %s4253, 4
          %s4262 = int_to_ptr.vmem [resolvable:$true] %s4261
          %s4263 = sshll.u32 %s4259, 4
          %s4264 = int_to_ptr.hbm [resolvable:$true] %s4263
          %4266 = dma.vmem_to_hbm [thread:$0]  %s4262, 16, %s4264, %s4251
        $region36: #{embedding_net_l2.1} parent=31 // pred_fallthru
          _
      $region32: #{embedding_net_l2.1} parent=5 // pred_fallthru
        _
      %p4267 = scmp.le.s32.totalorder 2, %s12
      // Predicated region
      $region37: #{embedding_net_l2.1} parent=5 // pred_check
        %p4268 = pneg %p4267
      $region38: #{embedding_net_l2.1} parent=5 // pred_check_branch
        %4270 = sbr.rel (%p4268) target = $region40
      $region39: #{embedding_net_l2.1} parent=5 // pred_region
        %s4271 = ssub.s32 %s12, 2
        // Predicated region
        $region41: #{embedding_net_l2.1} parent=39 // pred_check
          %p4272 = pneg %p109
        $region42: #{embedding_net_l2.1} parent=39 // pred_check_branch
          %4274 = sbr.rel (%p4272) target = $region44
        $region43: #{embedding_net_l2.1} parent=39 // pred_region
          %s4275 = sand.u32 %s94, 1
          %s4276 = scalar_lea.sflag [#allocation6], %s4275
          %s4277 = sand.u32 %s94, 1
          %s4278 = scalar_lea.vmem [#allocation5], %s4277
          %4280 = dma.done %s4276, 16
        $region44: #{embedding_net_l2.1} parent=39 // pred_fallthru
          _
      $region40: #{embedding_net_l2.1} parent=5 // pred_fallthru
        _
    $region6: #{embedding_net_l2.1} parent=1 // loop_footer
      %s16 = sadd.s32 1, %s12
    $region7: #{embedding_net_l2.1} parent=1 // loop_footer_branch
      %11 = sbr.rel target = $region3
    $region8: #{embedding_net_l2.1} parent=1 // loop_exit
      _
    %4281 = vsyncpa [#allocation6], 1
    %s4282 = scalar_lea.sflag [#allocation6], 1
    %4283 = vsyncpa %s4282, 1

</llo_original>
